<compile_context>
chip_gen: v6e
topology: v6e:2x2x1
jax: 0.10.0
libtpu: 0.0.40
codegen_flags: <defaults>
</compile_context>

<pallas_src>
import functools

import jax
import jax.numpy as jnp
import numpy as np
from jax.experimental import pallas as pl
from jax.experimental.pallas import tpu as pltpu


def _tcn_kernel(x_ref, wf_ref, bf_ref, wo_ref, sel_ref, bo_ref, out_ref,
                zpad_ref, *, shifts, lanes, pad_rows, compute_dtype):
    """One grid step: b_blk packed-batch rows, all layers, full sequence.

    x_ref   : (Bb, T, LC)      f32, LC = G*C lanes (G batch elements packed)
    wf_ref  : (L*K, LC, 3*LC)  compute_dtype, block-diag fused taps + residual
    bf_ref  : (L, 1, 3*LC)     f32
    wo_ref  : (L, 1, 1, LC)    f32, per-layer output-projection rows
    sel_ref : (LC, G)          f32, per-group channel-sum selector
    bo_ref  : (1, 1)           f32
    out_ref : (Bb, T, G)       f32
    zpad_ref: (Bb, MS+T, LC)   compute_dtype causal-pad staging scratch
    """
    LC = lanes
    MS = pad_rows
    Bb, T, _ = x_ref.shape
    K = len(shifts[0])

    # Zero the causal-pad head once per grid step (see header: intentionally
    # not program_id-gated, for megacore-split safety; cost is Bb*MS*LC elems).
    zpad_ref[:, :MS, :] = jnp.zeros((Bb, MS, LC), compute_dtype)

    z = x_ref[...]                                        # (Bb, T, LC) f32
    out_acc_c = jnp.zeros((Bb, T, LC), jnp.float32)       # channel-wise skip acc

    for i, layer_shifts in enumerate(shifts):             # static loop: layers
        # Stage the layer input once (one LC-wide cast); every causal tap —
        # including shift 0 — is then a static sublane slice of the padded
        # buffer (no iota / select / roll).  Shifts that are not multiples of
        # 8 cost a sublane relayout (XLU); inherent to dilated causal conv.
        zpad_ref[:, MS:, :] = z.astype(compute_dtype)

        # K accumulating per-tap matmuls (no lane concat: with LC < 128 the
        # concat is pure relayout and a deeper fused contraction buys nothing
        # on an otherwise idle MXU).  The 1x1 residual projection is packed
        # into the zero-shift tap's weight columns.
        y = jnp.zeros((Bb * T, 3 * LC), jnp.float32)
        for k, s in enumerate(layer_shifts):
            tap = zpad_ref[:, MS - s:MS - s + T, :].reshape(Bb * T, LC)
            y = y + jnp.dot(tap, wf_ref[i * K + k],
                            preferred_element_type=jnp.float32)
        y = y + bf_ref[i]                                  # (Bb*T, 3*LC) f32

        # Gated activation + residual path, full lane width, f32.
        z_skip = jnp.tanh(y[:, :LC]) * jax.nn.sigmoid(y[:, LC:2 * LC])
        z = (z_skip + y[:, 2 * LC:]).reshape(Bb, T, LC)

        # Final 1x1 output conv: accumulate channel-wise per layer (VPU only)…
        out_acc_c = out_acc_c + z_skip.reshape(Bb, T, LC) * wo_ref[i]

    # … and reduce across channels exactly once, per lane group, with one
    # small matmul (keeps cross-lane reductions out of the layer loop).
    G = sel_ref.shape[1]
    g_sum = jnp.dot(out_acc_c.reshape(Bb * T, LC), sel_ref[...],
                    preferred_element_type=jnp.float32)
    out_ref[...] = (g_sum.reshape(Bb, T, G) + bo_ref[...]).astype(out_ref.dtype)


def plan_tcn(batch, seq_len, *, num_channels, kernel_size, dilations,
             compute_dtype=jnp.float32, vmem_block_budget=24 << 20):
    """Pick (lane_groups G, b_blk) so that (a) elementwise work runs as close
    to 128 lanes as the batch allows, (b) the parallel grid axis keeps >= 2
    steps whenever the batch permits (v7x: 2 TensorCores / pipelining), and
    (c) each block fits a generation-safe VMEM budget (v5e scoped default is
    16 MiB; we raise the limit to 32 MiB explicitly and size against 24 MiB).
    """
    del kernel_size, dilations  # receptive field does not change block sizing
    C = num_channels

    # Lane packing: fold G batch elements into the lane dimension.
    max_g = max(1, 128 // C)
    divs = [g for g in range(1, min(batch, max_g) + 1) if batch % g == 0]
    pref = [g for g in divs if batch // g >= 2]     # keep >=2 grid steps
    G = max(pref) if pref else max(divs)
    lanes = G * C
    units = batch // G                               # packed-batch grid units

    # Block size from a VMEM budget (per time row: double-buffered x block,
    # compute_dtype staging scratch, live f32 intermediates, output block).
    cd = np.dtype(compute_dtype).itemsize
    bytes_per_row = lanes * (2 * 4 + cd + 6 * 4) + 2 * 4 * G
    row_cap = max(seq_len, vmem_block_budget // bytes_per_row)
    blk_cap = max(1, row_cap // seq_len)

    divisors = [d for d in range(1, units + 1) if units % d == 0]
    feasible = [d for d in divisors
                if d <= blk_cap and (units // d >= 2 or units == 1)]
    b_blk = max(feasible) if feasible else 1
    return G, b_blk


def pack_tcn_params(params, *, dilations, kernel_size, num_channels,
                    lane_groups, compute_dtype=jnp.float32):
    """One-time parameter packing (hoisted out of the forward path)."""
    w, b, rw, rb, wo, bo = params
    L, K, C, G = len(dilations), kernel_size, num_channels, lane_groups

    # Fused per-tap weight (C, 3C): [gated conv 2C | 1x1 residual C], residual
    # only on the zero-shift tap (k = K-1).
    res_taps = jnp.zeros((L, K, C, C), w.dtype).at[:, K - 1].set(rw)
    wfull = jnp.concatenate([w, res_taps], axis=-1)            # (L, K, C, 3C)

    # Block-diagonal expansion over lane groups:
    #   W[l,k][g*C+c, p*G*C+g*C+c2] = wfull[l,k][c, p*C+c2]
    wparts = wfull.reshape(L, K, C, 3, C)
    eye = jnp.eye(G, dtype=wfull.dtype)
    w_bd = jnp.einsum("lkcpd,gh->lkgcphd", wparts, eye)
    w_bd = w_bd.reshape(L * K, G * C, 3 * G * C).astype(compute_dtype)

    bfull = jnp.concatenate([b, rb], axis=-1).astype(jnp.float32)   # (L,1,3C)
    b_bd = jnp.tile(bfull.reshape(L, 1, 3, 1, C),
                    (1, 1, 1, G, 1)).reshape(L, 1, 3 * G * C)

    wo_l = wo.astype(jnp.float32).reshape(L, C)
    wo_bd = jnp.tile(wo_l[:, None, :], (1, G, 1)).reshape(L, 1, 1, G * C)

    sel = jnp.repeat(jnp.eye(G, dtype=jnp.float32), C, axis=0)      # (G*C, G)
    bo2 = bo.astype(jnp.float32).reshape(1, 1)
    return w_bd, b_bd, wo_bd, sel, bo2


def tcn_forward(x, packed_params, *, dilations, kernel_size, num_channels,
                lane_groups, b_blk, compute_dtype=jnp.float32,
                vmem_limit_bytes=32 * 1024 * 1024):
    """x: (B, T, 1) -> (B, T, 1).  packed_params from pack_tcn_params."""
    B, T, cin = x.shape
    C, K, G = num_channels, kernel_size, lane_groups
    assert T % 8 == 0, "T must be a multiple of 8 (sublane-aligned staging)"
    assert B % (G * b_blk) == 0, "batch must divide by lane_groups * b_blk"
    LC = G * C
    nb = B // (G * b_blk)

    wf, bf, wo_bd, sel, bo2 = packed_params

    # Pad the single input channel up to C lanes (block 0's extra weight rows
    # are zero in the real module and the padded activations are zero here, so
    # the math is unchanged), then fold G batch elements into the lane dim.
    x32 = jnp.pad(x.astype(jnp.float32), ((0, 0), (0, 0), (0, C - cin)))
    x_blk = (x32.reshape(nb, b_blk, G, T, C)
                .transpose(0, 1, 3, 2, 4)
                .reshape(nb, b_blk, T, LC))

    # Causal tap delays per layer, ordered to match the packed weight taps.
    shifts = tuple(tuple((K - 1 - k) * d for k in range(K)) for d in dilations)
    max_shift = max(s for ls in shifts for s in ls)
    ms_pad = max(8, ((max_shift + 7) // 8) * 8)      # sublane-aligned pad head

    kernel = functools.partial(_tcn_kernel, shifts=shifts, lanes=LC,
                               pad_rows=ms_pad, compute_dtype=compute_dtype)

    out = pl.pallas_call(
        kernel,
        out_shape=jax.ShapeDtypeStruct((nb, b_blk, T, G), jnp.float32),
        grid_spec=pltpu.PrefetchScalarGridSpec(
            num_scalar_prefetch=0,
            grid=(nb,),
            in_specs=[
                pl.BlockSpec((None, b_blk, T, LC), lambda bi: (bi, 0, 0, 0)),
                pl.BlockSpec(wf.shape, lambda bi: (0, 0, 0)),
                pl.BlockSpec(bf.shape, lambda bi: (0, 0, 0)),
                pl.BlockSpec(wo_bd.shape, lambda bi: (0, 0, 0, 0)),
                pl.BlockSpec(sel.shape, lambda bi: (0, 0)),
                pl.BlockSpec(bo2.shape, lambda bi: (0, 0)),
            ],
            out_specs=pl.BlockSpec((None, b_blk, T, G),
                                   lambda bi: (bi, 0, 0, 0)),
            scratch_shapes=[pltpu.VMEM((b_blk, ms_pad + T, LC), compute_dtype)],
        ),
        compiler_params=pltpu.CompilerParams(
            dimension_semantics=("parallel",),       # >=2 steps -> both TCs on v7x
            vmem_limit_bytes=vmem_limit_bytes),
    )(x_blk, wf, bf, wo_bd, sel, bo2)

    # Unpack lane groups back onto the batch axis: (nb,b_blk,T,G) -> (B,T,1).
    return out.transpose(0, 1, 3, 2).reshape(B, T, 1)


def tcn_reference(x, params, *, dilations, kernel_size, num_channels):
    """Pure-JAX reference with identical semantics."""
    w, b, rw, rb, wo, bo = params
    K, C = kernel_size, num_channels
    B, T, cin = x.shape
    z = jnp.pad(x, ((0, 0), (0, 0), (0, C - cin)))
    skips = []
    for i, d in enumerate(dilations):
        acc = jnp.zeros((B, T, 2 * C), jnp.float32)
        for k in range(K):
            s = (K - 1 - k) * d
            xs = jnp.pad(z, ((0, 0), (s, 0), (0, 0)))[:, :T, :]
            acc = acc + jnp.einsum("btc,cd->btd", xs, w[i, k])
        y = acc + b[i][None]
        z_skip = jnp.tanh(y[..., :C]) * jax.nn.sigmoid(y[..., C:])
        res = jnp.einsum("btc,cd->btd", z, rw[i]) + rb[i][None]
        z = z_skip + res
        skips.append(z_skip)
    cat = jnp.concatenate(skips, axis=-1)
    return jnp.einsum("btc,co->bto", cat, wo) + bo[0, 0]


if __name__ == "__main__":
    # Small shapes consistent with the module: batch=8, seq=64,
    # num_channels=16, kernel_size=3, layers=4 (module default 10, reduced for
    # the demo), repeats=1, df=1, groups=1, act_type='gated',
    # block_type='standard', conv_in=False.
    B, T = 8, 64
    C, K, LAYERS, REPEATS, DF = 16, 3, 4, 1, 1
    dilations = tuple(REPEATS * [2 ** i * DF for i in range(LAYERS)])
    L = len(dilations)

    key = jax.random.PRNGKey(0)
    kx, kw, kb, krw, krb, kwo, kbo = jax.random.split(key, 7)

    x = jax.random.normal(kx, (B, T, 1), jnp.float32)

    # Deterministic synthetic parameters (shapes implied by the module).
    w = jax.random.normal(kw, (L, K, C, 2 * C), jnp.float32) * 0.3
    w = w.at[0, :, 1:, :].set(0.0)   # block 0 really has one input channel
    b = jax.random.normal(kb, (L, 1, 2 * C), jnp.float32) * 0.1
    rw = jax.random.normal(krw, (L, C, C), jnp.float32) * 0.3
    rw = rw.at[0, 1:, :].set(0.0)
    rb = jax.random.normal(krb, (L, 1, C), jnp.float32) * 0.1
    wo = jax.random.normal(kwo, (L * C, 1), jnp.float32) * 0.3
    bo = jax.random.normal(kbo, (1, 1), jnp.float32) * 0.1
    params = (w, b, rw, rb, wo, bo)

    # Plan lane packing / grid blocking once and pack parameters once (both
    # hoisted out of the forward path).  With B=8, C=16 this gives G=4
    # (64 lanes), b_blk=1, nb=2 grid steps.
    G, b_blk = plan_tcn(B, T, num_channels=C, kernel_size=K,
                        dilations=dilations, compute_dtype=jnp.float32)
    packed = pack_tcn_params(params, dilations=dilations, kernel_size=K,
                             num_channels=C, lane_groups=G,
                             compute_dtype=jnp.float32)

    # compute_dtype=jnp.bfloat16 is the v6e/v7x full-rate MXU option; keep f32
    # here so the tolerance check against the f32 reference stays tight.
    out = tcn_forward(x, packed, dilations=dilations, kernel_size=K,
                      num_channels=C, lane_groups=G, b_blk=b_blk,
                      compute_dtype=jnp.float32)
    out = jax.block_until_ready(out)

    ref = tcn_reference(x, params, dilations=dilations,
                        kernel_size=K, num_channels=C)

    assert out.shape == (B, T, 1)
    if not np.allclose(np.asarray(out), np.asarray(ref), rtol=2e-2, atol=2e-2):
        raise AssertionError("Pallas TCN output mismatches JAX reference")
    print("KERNEL_OK")
</pallas_src>

<mosaic_0001>
module attributes {stable_mosaic.version = 11 : i64} {
  func.func @_tcn_kernel(%arg0: i32, %arg1: memref<1x1x64x64xf32, #tpu.memory_space<vmem>>, %arg2: memref<12x64x192xf32, #tpu.memory_space<vmem>>, %arg3: memref<4x1x192xf32, #tpu.memory_space<vmem>>, %arg4: memref<4x1x1x64xf32, #tpu.memory_space<vmem>>, %arg5: memref<64x4xf32, #tpu.memory_space<vmem>>, %arg6: memref<1x1xf32, #tpu.memory_space<vmem>>, %arg7: memref<1x1x64x4xf32, #tpu.memory_space<vmem>>, %arg8: memref<1x80x64xf32, #tpu.memory_space<vmem>>) attributes {dimension_semantics = [#tpu.dimension_semantics<parallel>], iteration_bounds = array<i64: 2>, scalar_prefetch = 0 : i64, scratch_operands = 1 : i64, tpu.core_type = #tpu.core_type<tc>, window_params = [{transform_indices = @transform_0, window_bounds = array<i64: 1, 1, 64, 64>}, {pipeline_mode = #tpu.pipeline_mode<synchronous>, transform_indices = @transform_1, window_bounds = array<i64: 12, 64, 192>}, {pipeline_mode = #tpu.pipeline_mode<synchronous>, transform_indices = @transform_2, window_bounds = array<i64: 4, 1, 192>}, {pipeline_mode = #tpu.pipeline_mode<synchronous>, transform_indices = @transform_3, window_bounds = array<i64: 4, 1, 1, 64>}, {pipeline_mode = #tpu.pipeline_mode<synchronous>, transform_indices = @transform_4, window_bounds = array<i64: 64, 4>}, {pipeline_mode = #tpu.pipeline_mode<synchronous>, transform_indices = @transform_5, window_bounds = array<i64: 1, 1>}, {transform_indices = @transform_6, window_bounds = array<i64: 1, 1, 64, 4>}]} {
    %cst = arith.constant 0.000000e+00 : f32
    %0 = vector.broadcast %cst : f32 to vector<1x16x64xf32>
    %c0 = arith.constant 0 : index
    %c0_0 = arith.constant 0 : index
    %c0_1 = arith.constant 0 : index
    %1 = vector.load %arg8[%c0, %c0_0, %c0_1] : memref<1x80x64xf32, #tpu.memory_space<vmem>>, vector<1x16x64xf32>
    tpu.vector_store %arg8[%c0, %c0_0, %c0_1], %0 {strides = array<i32>} : memref<1x80x64xf32, #tpu.memory_space<vmem>>, vector<1x16x64xf32>,
    %c0_2 = arith.constant 0 : index
    %c0_3 = arith.constant 0 : index
    %c0_4 = arith.constant 0 : index
    %c0_5 = arith.constant 0 : index
    %2 = vector.load %arg1[%c0_2, %c0_3, %c0_4, %c0_5] : memref<1x1x64x64xf32, #tpu.memory_space<vmem>>, vector<1x1x64x64xf32>
    %3 = vector.shape_cast %2 : vector<1x1x64x64xf32> to vector<1x64x64xf32>
    %cst_6 = arith.constant 0.000000e+00 : f32
    %4 = vector.broadcast %cst_6 : f32 to vector<1x64x64xf32>
    %c0_7 = arith.constant 0 : index
    %c16 = arith.constant 16 : index
    %c0_8 = arith.constant 0 : index
    %5 = vector.load %arg8[%c0_7, %c16, %c0_8] : memref<1x80x64xf32, #tpu.memory_space<vmem>>, vector<1x64x64xf32>
    tpu.vector_store %arg8[%c0_7, %c16, %c0_8], %3 {strides = array<i32>} : memref<1x80x64xf32, #tpu.memory_space<vmem>>, vector<1x64x64xf32>,
    %cst_9 = arith.constant 0.000000e+00 : f32
    %6 = vector.broadcast %cst_9 : f32 to vector<64x192xf32>
    %c0_10 = arith.constant 0 : index
    %c14 = arith.constant 14 : index
    %c0_11 = arith.constant 0 : index
    %7 = vector.load %arg8[%c0_10, %c14, %c0_11] : memref<1x80x64xf32, #tpu.memory_space<vmem>>, vector<1x64x64xf32>
    %8 = vector.shape_cast %7 : vector<1x64x64xf32> to vector<64x64xf32>
    %c0_12 = arith.constant 0 : index
    %c0_13 = arith.constant 0 : index
    %c0_14 = arith.constant 0 : index
    %9 = vector.load %arg2[%c0_12, %c0_13, %c0_14] : memref<12x64x192xf32, #tpu.memory_space<vmem>>, vector<1x64x192xf32>
    %10 = vector.shape_cast %9 : vector<1x64x192xf32> to vector<64x192xf32>
    %cst_15 = arith.constant dense<0.000000e+00> : vector<64x192xf32>
    %11 = tpu.matmul %8, %10, %cst_15 {dimension_numbers = #tpu.dot_dimension_numbers<[1], [0], [0], [1], [0, 0, 1, 1], [], []>} : vector<64x64xf32>, vector<64x192xf32>, vector<64x192xf32> -> vector<64x192xf32>
    %12 = arith.addf %6, %11 : vector<64x192xf32>
    %c0_16 = arith.constant 0 : index
    %c15 = arith.constant 15 : index
    %c0_17 = arith.constant 0 : index
    %13 = vector.load %arg8[%c0_16, %c15, %c0_17] : memref<1x80x64xf32, #tpu.memory_space<vmem>>, vector<1x64x64xf32>
    %14 = vector.shape_cast %13 : vector<1x64x64xf32> to vector<64x64xf32>
    %c1 = arith.constant 1 : index
    %c0_18 = arith.constant 0 : index
    %c0_19 = arith.constant 0 : index
    %15 = vector.load %arg2[%c1, %c0_18, %c0_19] : memref<12x64x192xf32, #tpu.memory_space<vmem>>, vector<1x64x192xf32>
    %16 = vector.shape_cast %15 : vector<1x64x192xf32> to vector<64x192xf32>
    %cst_20 = arith.constant dense<0.000000e+00> : vector<64x192xf32>
    %17 = tpu.matmul %14, %16, %cst_20 {dimension_numbers = #tpu.dot_dimension_numbers<[1], [0], [0], [1], [0, 0, 1, 1], [], []>} : vector<64x64xf32>, vector<64x192xf32>, vector<64x192xf32> -> vector<64x192xf32>
    %18 = arith.addf %12, %17 : vector<64x192xf32>
    %c0_21 = arith.constant 0 : index
    %c16_22 = arith.constant 16 : index
    %c0_23 = arith.constant 0 : index
    %19 = vector.load %arg8[%c0_21, %c16_22, %c0_23] : memref<1x80x64xf32, #tpu.memory_space<vmem>>, vector<1x64x64xf32>
    %20 = vector.shape_cast %19 : vector<1x64x64xf32> to vector<64x64xf32>
    %c2 = arith.constant 2 : index
    %c0_24 = arith.constant 0 : index
    %c0_25 = arith.constant 0 : index
    %21 = vector.load %arg2[%c2, %c0_24, %c0_25] : memref<12x64x192xf32, #tpu.memory_space<vmem>>, vector<1x64x192xf32>
    %22 = vector.shape_cast %21 : vector<1x64x192xf32> to vector<64x192xf32>
    %cst_26 = arith.constant dense<0.000000e+00> : vector<64x192xf32>
    %23 = tpu.matmul %20, %22, %cst_26 {dimension_numbers = #tpu.dot_dimension_numbers<[1], [0], [0], [1], [0, 0, 1, 1], [], []>} : vector<64x64xf32>, vector<64x192xf32>, vector<64x192xf32> -> vector<64x192xf32>
    %24 = arith.addf %18, %23 : vector<64x192xf32>
    %c0_27 = arith.constant 0 : index
    %c0_28 = arith.constant 0 : index
    %c0_29 = arith.constant 0 : index
    %25 = vector.load %arg3[%c0_27, %c0_28, %c0_29] : memref<4x1x192xf32, #tpu.memory_space<vmem>>, vector<1x1x192xf32>
    %26 = vector.shape_cast %25 : vector<1x1x192xf32> to vector<1x192xf32>
    %27 = vector.broadcast %26 : vector<1x192xf32> to vector<64x192xf32>
    %28 = arith.addf %24, %27 : vector<64x192xf32>
    %29 = vector.extract_strided_slice %28 {offsets = [0, 0], sizes = [64, 64], strides = [1, 1]} : vector<64x192xf32> to vector<64x64xf32>
    %30 = math.tanh %29 : vector<64x64xf32>
    %31 = vector.extract_strided_slice %28 {offsets = [0, 64], sizes = [64, 64], strides = [1, 1]} : vector<64x192xf32> to vector<64x64xf32>
    %32 = arith.negf %31 : vector<64x64xf32>
    %33 = math.exp %32 : vector<64x64xf32>
    %cst_30 = arith.constant 1.000000e+00 : f32
    %34 = vector.broadcast %cst_30 : f32 to vector<64x64xf32>
    %35 = arith.addf %34, %33 : vector<64x64xf32>
    %36 = arith.divf %34, %35 : vector<64x64xf32>
    %37 = arith.mulf %30, %36 : vector<64x64xf32>
    %38 = vector.extract_strided_slice %28 {offsets = [0, 128], sizes = [64, 64], strides = [1, 1]} : vector<64x192xf32> to vector<64x64xf32>
    %39 = arith.addf %37, %38 : vector<64x64xf32>
    %40 = vector.shape_cast %39 : vector<64x64xf32> to vector<1x64x64xf32>
    %41 = vector.shape_cast %37 : vector<64x64xf32> to vector<1x64x64xf32>
    %c0_31 = arith.constant 0 : index
    %c0_32 = arith.constant 0 : index
    %c0_33 = arith.constant 0 : index
    %c0_34 = arith.constant 0 : index
    %42 = vector.load %arg4[%c0_31, %c0_32, %c0_33, %c0_34] : memref<4x1x1x64xf32, #tpu.memory_space<vmem>>, vector<1x1x1x64xf32>
    %43 = vector.shape_cast %42 : vector<1x1x1x64xf32> to vector<1x1x64xf32>
    %44 = vector.broadcast %43 : vector<1x1x64xf32> to vector<1x64x64xf32>
    %45 = arith.mulf %41, %44 : vector<1x64x64xf32>
    %46 = arith.addf %4, %45 : vector<1x64x64xf32>
    %c0_35 = arith.constant 0 : index
    %c16_36 = arith.constant 16 : index
    %c0_37 = arith.constant 0 : index
    %47 = vector.load %arg8[%c0_35, %c16_36, %c0_37] : memref<1x80x64xf32, #tpu.memory_space<vmem>>, vector<1x64x64xf32>
    tpu.vector_store %arg8[%c0_35, %c16_36, %c0_37], %40 {strides = array<i32>} : memref<1x80x64xf32, #tpu.memory_space<vmem>>, vector<1x64x64xf32>,
    %cst_38 = arith.constant 0.000000e+00 : f32
    %48 = vector.broadcast %cst_38 : f32 to vector<64x192xf32>
    %c0_39 = arith.constant 0 : index
    %c12 = arith.constant 12 : index
    %c0_40 = arith.constant 0 : index
    %49 = vector.load %arg8[%c0_39, %c12, %c0_40] : memref<1x80x64xf32, #tpu.memory_space<vmem>>, vector<1x64x64xf32>
    %50 = vector.shape_cast %49 : vector<1x64x64xf32> to vector<64x64xf32>
    %c3 = arith.constant 3 : index
    %c0_41 = arith.constant 0 : index
    %c0_42 = arith.constant 0 : index
    %51 = vector.load %arg2[%c3, %c0_41, %c0_42] : memref<12x64x192xf32, #tpu.memory_space<vmem>>, vector<1x64x192xf32>
    %52 = vector.shape_cast %51 : vector<1x64x192xf32> to vector<64x192xf32>
    %cst_43 = arith.constant dense<0.000000e+00> : vector<64x192xf32>
    %53 = tpu.matmul %50, %52, %cst_43 {dimension_numbers = #tpu.dot_dimension_numbers<[1], [0], [0], [1], [0, 0, 1, 1], [], []>} : vector<64x64xf32>, vector<64x192xf32>, vector<64x192xf32> -> vector<64x192xf32>
    %54 = arith.addf %48, %53 : vector<64x192xf32>
    %c0_44 = arith.constant 0 : index
    %c14_45 = arith.constant 14 : index
    %c0_46 = arith.constant 0 : index
    %55 = vector.load %arg8[%c0_44, %c14_45, %c0_46] : memref<1x80x64xf32, #tpu.memory_space<vmem>>, vector<1x64x64xf32>
    %56 = vector.shape_cast %55 : vector<1x64x64xf32> to vector<64x64xf32>
    %c4 = arith.constant 4 : index
    %c0_47 = arith.constant 0 : index
    %c0_48 = arith.constant 0 : index
    %57 = vector.load %arg2[%c4, %c0_47, %c0_48] : memref<12x64x192xf32, #tpu.memory_space<vmem>>, vector<1x64x192xf32>
    %58 = vector.shape_cast %57 : vector<1x64x192xf32> to vector<64x192xf32>
    %cst_49 = arith.constant dense<0.000000e+00> : vector<64x192xf32>
    %59 = tpu.matmul %56, %58, %cst_49 {dimension_numbers = #tpu.dot_dimension_numbers<[1], [0], [0], [1], [0, 0, 1, 1], [], []>} : vector<64x64xf32>, vector<64x192xf32>, vector<64x192xf32> -> vector<64x192xf32>
    %60 = arith.addf %54, %59 : vector<64x192xf32>
    %c0_50 = arith.constant 0 : index
    %c16_51 = arith.constant 16 : index
    %c0_52 = arith.constant 0 : index
    %61 = vector.load %arg8[%c0_50, %c16_51, %c0_52] : memref<1x80x64xf32, #tpu.memory_space<vmem>>, vector<1x64x64xf32>
    %62 = vector.shape_cast %61 : vector<1x64x64xf32> to vector<64x64xf32>
    %c5 = arith.constant 5 : index
    %c0_53 = arith.constant 0 : index
    %c0_54 = arith.constant 0 : index
    %63 = vector.load %arg2[%c5, %c0_53, %c0_54] : memref<12x64x192xf32, #tpu.memory_space<vmem>>, vector<1x64x192xf32>
    %64 = vector.shape_cast %63 : vector<1x64x192xf32> to vector<64x192xf32>
    %cst_55 = arith.constant dense<0.000000e+00> : vector<64x192xf32>
    %65 = tpu.matmul %62, %64, %cst_55 {dimension_numbers = #tpu.dot_dimension_numbers<[1], [0], [0], [1], [0, 0, 1, 1], [], []>} : vector<64x64xf32>, vector<64x192xf32>, vector<64x192xf32> -> vector<64x192xf32>
    %66 = arith.addf %60, %65 : vector<64x192xf32>
    %c1_56 = arith.constant 1 : index
    %c0_57 = arith.constant 0 : index
    %c0_58 = arith.constant 0 : index
    %67 = vector.load %arg3[%c1_56, %c0_57, %c0_58] : memref<4x1x192xf32, #tpu.memory_space<vmem>>, vector<1x1x192xf32>
    %68 = vector.shape_cast %67 : vector<1x1x192xf32> to vector<1x192xf32>
    %69 = vector.broadcast %68 : vector<1x192xf32> to vector<64x192xf32>
    %70 = arith.addf %66, %69 : vector<64x192xf32>
    %71 = vector.extract_strided_slice %70 {offsets = [0, 0], sizes = [64, 64], strides = [1, 1]} : vector<64x192xf32> to vector<64x64xf32>
    %72 = math.tanh %71 : vector<64x64xf32>
    %73 = vector.extract_strided_slice %70 {offsets = [0, 64], sizes = [64, 64], strides = [1, 1]} : vector<64x192xf32> to vector<64x64xf32>
    %74 = arith.negf %73 : vector<64x64xf32>
    %75 = math.exp %74 : vector<64x64xf32>
    %cst_59 = arith.constant 1.000000e+00 : f32
    %76 = vector.broadcast %cst_59 : f32 to vector<64x64xf32>
    %77 = arith.addf %76, %75 : vector<64x64xf32>
    %78 = arith.divf %76, %77 : vector<64x64xf32>
    %79 = arith.mulf %72, %78 : vector<64x64xf32>
    %80 = vector.extract_strided_slice %70 {offsets = [0, 128], sizes = [64, 64], strides = [1, 1]} : vector<64x192xf32> to vector<64x64xf32>
    %81 = arith.addf %79, %80 : vector<64x64xf32>
    %82 = vector.shape_cast %81 : vector<64x64xf32> to vector<1x64x64xf32>
    %83 = vector.shape_cast %79 : vector<64x64xf32> to vector<1x64x64xf32>
    %c1_60 = arith.constant 1 : index
    %c0_61 = arith.constant 0 : index
    %c0_62 = arith.constant 0 : index
    %c0_63 = arith.constant 0 : index
    %84 = vector.load %arg4[%c1_60, %c0_61, %c0_62, %c0_63] : memref<4x1x1x64xf32, #tpu.memory_space<vmem>>, vector<1x1x1x64xf32>
    %85 = vector.shape_cast %84 : vector<1x1x1x64xf32> to vector<1x1x64xf32>
    %86 = vector.broadcast %85 : vector<1x1x64xf32> to vector<1x64x64xf32>
    %87 = arith.mulf %83, %86 : vector<1x64x64xf32>
    %88 = arith.addf %46, %87 : vector<1x64x64xf32>
    %c0_64 = arith.constant 0 : index
    %c16_65 = arith.constant 16 : index
    %c0_66 = arith.constant 0 : index
    %89 = vector.load %arg8[%c0_64, %c16_65, %c0_66] : memref<1x80x64xf32, #tpu.memory_space<vmem>>, vector<1x64x64xf32>
    tpu.vector_store %arg8[%c0_64, %c16_65, %c0_66], %82 {strides = array<i32>} : memref<1x80x64xf32, #tpu.memory_space<vmem>>, vector<1x64x64xf32>,
    %cst_67 = arith.constant 0.000000e+00 : f32
    %90 = vector.broadcast %cst_67 : f32 to vector<64x192xf32>
    %c0_68 = arith.constant 0 : index
    %c8 = arith.constant 8 : index
    %c0_69 = arith.constant 0 : index
    %91 = vector.load %arg8[%c0_68, %c8, %c0_69] : memref<1x80x64xf32, #tpu.memory_space<vmem>>, vector<1x64x64xf32>
    %92 = vector.shape_cast %91 : vector<1x64x64xf32> to vector<64x64xf32>
    %c6 = arith.constant 6 : index
    %c0_70 = arith.constant 0 : index
    %c0_71 = arith.constant 0 : index
    %93 = vector.load %arg2[%c6, %c0_70, %c0_71] : memref<12x64x192xf32, #tpu.memory_space<vmem>>, vector<1x64x192xf32>
    %94 = vector.shape_cast %93 : vector<1x64x192xf32> to vector<64x192xf32>
    %cst_72 = arith.constant dense<0.000000e+00> : vector<64x192xf32>
    %95 = tpu.matmul %92, %94, %cst_72 {dimension_numbers = #tpu.dot_dimension_numbers<[1], [0], [0], [1], [0, 0, 1, 1], [], []>} : vector<64x64xf32>, vector<64x192xf32>, vector<64x192xf32> -> vector<64x192xf32>
    %96 = arith.addf %90, %95 : vector<64x192xf32>
    %c0_73 = arith.constant 0 : index
    %c12_74 = arith.constant 12 : index
    %c0_75 = arith.constant 0 : index
    %97 = vector.load %arg8[%c0_73, %c12_74, %c0_75] : memref<1x80x64xf32, #tpu.memory_space<vmem>>, vector<1x64x64xf32>
    %98 = vector.shape_cast %97 : vector<1x64x64xf32> to vector<64x64xf32>
    %c7 = arith.constant 7 : index
    %c0_76 = arith.constant 0 : index
    %c0_77 = arith.constant 0 : index
    %99 = vector.load %arg2[%c7, %c0_76, %c0_77] : memref<12x64x192xf32, #tpu.memory_space<vmem>>, vector<1x64x192xf32>
    %100 = vector.shape_cast %99 : vector<1x64x192xf32> to vector<64x192xf32>
    %cst_78 = arith.constant dense<0.000000e+00> : vector<64x192xf32>
    %101 = tpu.matmul %98, %100, %cst_78 {dimension_numbers = #tpu.dot_dimension_numbers<[1], [0], [0], [1], [0, 0, 1, 1], [], []>} : vector<64x64xf32>, vector<64x192xf32>, vector<64x192xf32> -> vector<64x192xf32>
    %102 = arith.addf %96, %101 : vector<64x192xf32>
    %c0_79 = arith.constant 0 : index
    %c16_80 = arith.constant 16 : index
    %c0_81 = arith.constant 0 : index
    %103 = vector.load %arg8[%c0_79, %c16_80, %c0_81] : memref<1x80x64xf32, #tpu.memory_space<vmem>>, vector<1x64x64xf32>
    %104 = vector.shape_cast %103 : vector<1x64x64xf32> to vector<64x64xf32>
    %c8_82 = arith.constant 8 : index
    %c0_83 = arith.constant 0 : index
    %c0_84 = arith.constant 0 : index
    %105 = vector.load %arg2[%c8_82, %c0_83, %c0_84] : memref<12x64x192xf32, #tpu.memory_space<vmem>>, vector<1x64x192xf32>
    %106 = vector.shape_cast %105 : vector<1x64x192xf32> to vector<64x192xf32>
    %cst_85 = arith.constant dense<0.000000e+00> : vector<64x192xf32>
    %107 = tpu.matmul %104, %106, %cst_85 {dimension_numbers = #tpu.dot_dimension_numbers<[1], [0], [0], [1], [0, 0, 1, 1], [], []>} : vector<64x64xf32>, vector<64x192xf32>, vector<64x192xf32> -> vector<64x192xf32>
    %108 = arith.addf %102, %107 : vector<64x192xf32>
    %c2_86 = arith.constant 2 : index
    %c0_87 = arith.constant 0 : index
    %c0_88 = arith.constant 0 : index
    %109 = vector.load %arg3[%c2_86, %c0_87, %c0_88] : memref<4x1x192xf32, #tpu.memory_space<vmem>>, vector<1x1x192xf32>
    %110 = vector.shape_cast %109 : vector<1x1x192xf32> to vector<1x192xf32>
    %111 = vector.broadcast %110 : vector<1x192xf32> to vector<64x192xf32>
    %112 = arith.addf %108, %111 : vector<64x192xf32>
    %113 = vector.extract_strided_slice %112 {offsets = [0, 0], sizes = [64, 64], strides = [1, 1]} : vector<64x192xf32> to vector<64x64xf32>
    %114 = math.tanh %113 : vector<64x64xf32>
    %115 = vector.extract_strided_slice %112 {offsets = [0, 64], sizes = [64, 64], strides = [1, 1]} : vector<64x192xf32> to vector<64x64xf32>
    %116 = arith.negf %115 : vector<64x64xf32>
    %117 = math.exp %116 : vector<64x64xf32>
    %cst_89 = arith.constant 1.000000e+00 : f32
    %118 = vector.broadcast %cst_89 : f32 to vector<64x64xf32>
    %119 = arith.addf %118, %117 : vector<64x64xf32>
    %120 = arith.divf %118, %119 : vector<64x64xf32>
    %121 = arith.mulf %114, %120 : vector<64x64xf32>
    %122 = vector.extract_strided_slice %112 {offsets = [0, 128], sizes = [64, 64], strides = [1, 1]} : vector<64x192xf32> to vector<64x64xf32>
    %123 = arith.addf %121, %122 : vector<64x64xf32>
    %124 = vector.shape_cast %123 : vector<64x64xf32> to vector<1x64x64xf32>
    %125 = vector.shape_cast %121 : vector<64x64xf32> to vector<1x64x64xf32>
    %c2_90 = arith.constant 2 : index
    %c0_91 = arith.constant 0 : index
    %c0_92 = arith.constant 0 : index
    %c0_93 = arith.constant 0 : index
    %126 = vector.load %arg4[%c2_90, %c0_91, %c0_92, %c0_93] : memref<4x1x1x64xf32, #tpu.memory_space<vmem>>, vector<1x1x1x64xf32>
    %127 = vector.shape_cast %126 : vector<1x1x1x64xf32> to vector<1x1x64xf32>
    %128 = vector.broadcast %127 : vector<1x1x64xf32> to vector<1x64x64xf32>
    %129 = arith.mulf %125, %128 : vector<1x64x64xf32>
    %130 = arith.addf %88, %129 : vector<1x64x64xf32>
    %c0_94 = arith.constant 0 : index
    %c16_95 = arith.constant 16 : index
    %c0_96 = arith.constant 0 : index
    %131 = vector.load %arg8[%c0_94, %c16_95, %c0_96] : memref<1x80x64xf32, #tpu.memory_space<vmem>>, vector<1x64x64xf32>
    tpu.vector_store %arg8[%c0_94, %c16_95, %c0_96], %124 {strides = array<i32>} : memref<1x80x64xf32, #tpu.memory_space<vmem>>, vector<1x64x64xf32>,
    %cst_97 = arith.constant 0.000000e+00 : f32
    %132 = vector.broadcast %cst_97 : f32 to vector<64x192xf32>
    %c0_98 = arith.constant 0 : index
    %c0_99 = arith.constant 0 : index
    %c0_100 = arith.constant 0 : index
    %133 = vector.load %arg8[%c0_98, %c0_99, %c0_100] : memref<1x80x64xf32, #tpu.memory_space<vmem>>, vector<1x64x64xf32>
    %134 = vector.shape_cast %133 : vector<1x64x64xf32> to vector<64x64xf32>
    %c9 = arith.constant 9 : index
    %c0_101 = arith.constant 0 : index
    %c0_102 = arith.constant 0 : index
    %135 = vector.load %arg2[%c9, %c0_101, %c0_102] : memref<12x64x192xf32, #tpu.memory_space<vmem>>, vector<1x64x192xf32>
    %136 = vector.shape_cast %135 : vector<1x64x192xf32> to vector<64x192xf32>
    %cst_103 = arith.constant dense<0.000000e+00> : vector<64x192xf32>
    %137 = tpu.matmul %134, %136, %cst_103 {dimension_numbers = #tpu.dot_dimension_numbers<[1], [0], [0], [1], [0, 0, 1, 1], [], []>} : vector<64x64xf32>, vector<64x192xf32>, vector<64x192xf32> -> vector<64x192xf32>
    %138 = arith.addf %132, %137 : vector<64x192xf32>
    %c0_104 = arith.constant 0 : index
    %c8_105 = arith.constant 8 : index
    %c0_106 = arith.constant 0 : index
    %139 = vector.load %arg8[%c0_104, %c8_105, %c0_106] : memref<1x80x64xf32, #tpu.memory_space<vmem>>, vector<1x64x64xf32>
    %140 = vector.shape_cast %139 : vector<1x64x64xf32> to vector<64x64xf32>
    %c10 = arith.constant 10 : index
    %c0_107 = arith.constant 0 : index
    %c0_108 = arith.constant 0 : index
    %141 = vector.load %arg2[%c10, %c0_107, %c0_108] : memref<12x64x192xf32, #tpu.memory_space<vmem>>, vector<1x64x192xf32>
    %142 = vector.shape_cast %141 : vector<1x64x192xf32> to vector<64x192xf32>
    %cst_109 = arith.constant dense<0.000000e+00> : vector<64x192xf32>
    %143 = tpu.matmul %140, %142, %cst_109 {dimension_numbers = #tpu.dot_dimension_numbers<[1], [0], [0], [1], [0, 0, 1, 1], [], []>} : vector<64x64xf32>, vector<64x192xf32>, vector<64x192xf32> -> vector<64x192xf32>
    %144 = arith.addf %138, %143 : vector<64x192xf32>
    %c0_110 = arith.constant 0 : index
    %c16_111 = arith.constant 16 : index
    %c0_112 = arith.constant 0 : index
    %145 = vector.load %arg8[%c0_110, %c16_111, %c0_112] : memref<1x80x64xf32, #tpu.memory_space<vmem>>, vector<1x64x64xf32>
    %146 = vector.shape_cast %145 : vector<1x64x64xf32> to vector<64x64xf32>
    %c11 = arith.constant 11 : index
    %c0_113 = arith.constant 0 : index
    %c0_114 = arith.constant 0 : index
    %147 = vector.load %arg2[%c11, %c0_113, %c0_114] : memref<12x64x192xf32, #tpu.memory_space<vmem>>, vector<1x64x192xf32>
    %148 = vector.shape_cast %147 : vector<1x64x192xf32> to vector<64x192xf32>
    %cst_115 = arith.constant dense<0.000000e+00> : vector<64x192xf32>
    %149 = tpu.matmul %146, %148, %cst_115 {dimension_numbers = #tpu.dot_dimension_numbers<[1], [0], [0], [1], [0, 0, 1, 1], [], []>} : vector<64x64xf32>, vector<64x192xf32>, vector<64x192xf32> -> vector<64x192xf32>
    %150 = arith.addf %144, %149 : vector<64x192xf32>
    %c3_116 = arith.constant 3 : index
    %c0_117 = arith.constant 0 : index
    %c0_118 = arith.constant 0 : index
    %151 = vector.load %arg3[%c3_116, %c0_117, %c0_118] : memref<4x1x192xf32, #tpu.memory_space<vmem>>, vector<1x1x192xf32>
    %152 = vector.shape_cast %151 : vector<1x1x192xf32> to vector<1x192xf32>
    %153 = vector.broadcast %152 : vector<1x192xf32> to vector<64x192xf32>
    %154 = arith.addf %150, %153 : vector<64x192xf32>
    %155 = vector.extract_strided_slice %154 {offsets = [0, 0], sizes = [64, 64], strides = [1, 1]} : vector<64x192xf32> to vector<64x64xf32>
    %156 = math.tanh %155 : vector<64x64xf32>
    %157 = vector.extract_strided_slice %154 {offsets = [0, 64], sizes = [64, 64], strides = [1, 1]} : vector<64x192xf32> to vector<64x64xf32>
    %158 = arith.negf %157 : vector<64x64xf32>
    %159 = math.exp %158 : vector<64x64xf32>
    %cst_119 = arith.constant 1.000000e+00 : f32
    %160 = vector.broadcast %cst_119 : f32 to vector<64x64xf32>
    %161 = arith.addf %160, %159 : vector<64x64xf32>
    %162 = arith.divf %160, %161 : vector<64x64xf32>
    %163 = arith.mulf %156, %162 : vector<64x64xf32>
    %164 = vector.shape_cast %163 : vector<64x64xf32> to vector<1x64x64xf32>
    %c3_120 = arith.constant 3 : index
    %c0_121 = arith.constant 0 : index
    %c0_122 = arith.constant 0 : index
    %c0_123 = arith.constant 0 : index
    %165 = vector.load %arg4[%c3_120, %c0_121, %c0_122, %c0_123] : memref<4x1x1x64xf32, #tpu.memory_space<vmem>>, vector<1x1x1x64xf32>
    %166 = vector.shape_cast %165 : vector<1x1x1x64xf32> to vector<1x1x64xf32>
    %167 = vector.broadcast %166 : vector<1x1x64xf32> to vector<1x64x64xf32>
    %168 = arith.mulf %164, %167 : vector<1x64x64xf32>
    %169 = arith.addf %130, %168 : vector<1x64x64xf32>
    %170 = vector.shape_cast %169 : vector<1x64x64xf32> to vector<64x64xf32>
    %c0_124 = arith.constant 0 : index
    %c0_125 = arith.constant 0 : index
    %171 = vector.load %arg5[%c0_124, %c0_125] : memref<64x4xf32, #tpu.memory_space<vmem>>, vector<64x4xf32>
    %cst_126 = arith.constant dense<0.000000e+00> : vector<64x4xf32>
    %172 = tpu.matmul %170, %171, %cst_126 {dimension_numbers = #tpu.dot_dimension_numbers<[1], [0], [0], [1], [0, 0, 1, 1], [], []>} : vector<64x64xf32>, vector<64x4xf32>, vector<64x4xf32> -> vector<64x4xf32>
    %173 = vector.shape_cast %172 : vector<64x4xf32> to vector<1x64x4xf32>
    %c0_127 = arith.constant 0 : index
    %c0_128 = arith.constant 0 : index
    %174 = vector.load %arg6[%c0_127, %c0_128] : memref<1x1xf32, #tpu.memory_space<vmem>>, vector<1x1xf32>
    %175 = vector.shape_cast %174 : vector<1x1xf32> to vector<1x1x1xf32>
    %176 = vector.broadcast %175 : vector<1x1x1xf32> to vector<1x64x4xf32>
    %177 = arith.addf %173, %176 : vector<1x64x4xf32>
    %c0_129 = arith.constant 0 : index
    %c0_130 = arith.constant 0 : index
    %c0_131 = arith.constant 0 : index
    %c0_132 = arith.constant 0 : index
    %178 = vector.load %arg7[%c0_129, %c0_130, %c0_131, %c0_132] : memref<1x1x64x4xf32, #tpu.memory_space<vmem>>, vector<1x1x64x4xf32>
    %179 = vector.shape_cast %178 : vector<1x1x64x4xf32> to vector<1x64x4xf32>
    %180 = vector.shape_cast %177 : vector<1x64x4xf32> to vector<1x1x64x4xf32>
    tpu.vector_store %arg7[%c0_129, %c0_130, %c0_131, %c0_132], %180 {strides = array<i32>} : memref<1x1x64x4xf32, #tpu.memory_space<vmem>>, vector<1x1x64x4xf32>,
    return
  }
  func.func @transform_0(%arg0: i32) -> (i32, i32, i32, i32) {
    %c0_i32 = arith.constant 0 : i32
    %c0_i32_0 = arith.constant 0 : i32
    %c0_i32_1 = arith.constant 0 : i32
    %c0_i32_2 = arith.constant 0 : i32
    return %arg0, %c0_i32, %c0_i32_0, %c0_i32_1 : i32, i32, i32, i32
  }
  func.func @transform_1(%arg0: i32) -> (i32, i32, i32) {
    %c0_i32 = arith.constant 0 : i32
    %c0_i32_0 = arith.constant 0 : i32
    %c0_i32_1 = arith.constant 0 : i32
    %c0_i32_2 = arith.constant 0 : i32
    return %c0_i32, %c0_i32_0, %c0_i32_1 : i32, i32, i32
  }
  func.func @transform_2(%arg0: i32) -> (i32, i32, i32) {
    %c0_i32 = arith.constant 0 : i32
    %c0_i32_0 = arith.constant 0 : i32
    %c0_i32_1 = arith.constant 0 : i32
    %c0_i32_2 = arith.constant 0 : i32
    return %c0_i32, %c0_i32_0, %c0_i32_1 : i32, i32, i32
  }
  func.func @transform_3(%arg0: i32) -> (i32, i32, i32, i32) {
    %c0_i32 = arith.constant 0 : i32
    %c0_i32_0 = arith.constant 0 : i32
    %c0_i32_1 = arith.constant 0 : i32
    %c0_i32_2 = arith.constant 0 : i32
    %c0_i32_3 = arith.constant 0 : i32
    return %c0_i32, %c0_i32_0, %c0_i32_1, %c0_i32_2 : i32, i32, i32, i32
  }
  func.func @transform_4(%arg0: i32) -> (i32, i32) {
    %c0_i32 = arith.constant 0 : i32
    %c0_i32_0 = arith.constant 0 : i32
    %c0_i32_1 = arith.constant 0 : i32
    return %c0_i32, %c0_i32_0 : i32, i32
  }
  func.func @transform_5(%arg0: i32) -> (i32, i32) {
    %c0_i32 = arith.constant 0 : i32
    %c0_i32_0 = arith.constant 0 : i32
    %c0_i32_1 = arith.constant 0 : i32
    return %c0_i32, %c0_i32_0 : i32, i32
  }
  func.func @transform_6(%arg0: i32) -> (i32, i32, i32, i32) {
    %c0_i32 = arith.constant 0 : i32
    %c0_i32_0 = arith.constant 0 : i32
    %c0_i32_1 = arith.constant 0 : i32
    %c0_i32_2 = arith.constant 0 : i32
    return %arg0, %c0_i32, %c0_i32_0, %c0_i32_1 : i32, i32, i32, i32
  }
}

</mosaic_0001>

<llo_original>
// kernel: tpu_custom_call.1
$region0: #{tpu_custom_call.1}
  #allocation0 [shape = 'u32[]', space=smem, size = 0x4, offset = 0x4, fixed_abs, tag = 'smem constant byte address 0x4 - core index']
  #allocation1 [shape = 'u32[144,128]{1,0:T(1,128)}', space=vmem, size = 0x12000, scoped, tag = 'internal scratch']
  #allocation2 [shape = 'f32[1,80,64]{2,1,0:T(8,128)}', space=vmem, size = 0xa000, scoped, tag = 'scratch operand']
  #allocation3 [shape = 'f32[1,1]{1,0:T(1,128)S(1)}', space=vmem, size = 0x200, scoped, tag = 'scoped memory for tpu_custom_call.1']
  %s0 = inlined_call_operand.hbm [shape: f32[2,1,64,64], index: 0, kind: input, shape index: {}]
  %s1 = inlined_call_operand.hbm [shape: f32[12,64,192], index: 1, kind: input, shape index: {}]
  %s2 = inlined_call_operand.vmem [shape: f32[4,1,192], index: 2, kind: input, shape index: {}]
  %s3 = inlined_call_operand.vmem [shape: f32[4,1,1,64], index: 3, kind: input, shape index: {}]
  %s4 = inlined_call_operand.vmem [shape: f32[64,4], index: 4, kind: input, shape index: {}]
  %s5 = inlined_call_operand.<no memory space> [shape: f32[1,1], index: 5, kind: input, shape index: {}]
  %s6 = inlined_call_operand.vmem [shape: f32[2,1,64,4], index: 6, kind: output, shape index: {}]
  %s7 = sld [smem:[#allocation0]]
  $region65: #{tpu_custom_call.1} parent=0
    _
  %s9 = ssub.s32 1, %s7
  %s10 = scalar_select 0, %s9, %s7
  %v11 = vstv %s5
  %12 = vst [vmem:[#allocation3] sm:$0x1] %v11
  $region1: #{tpu_custom_call.1} parent=0
    #allocation4 [shape = 'u8[65536]{0}', space=vmem, size = 0x10000, scoped, tag = 'input window, operand 0']
    #allocation5 [shape = 's32[2]{0}', space=sflag, size = 0x8, scoped, tag = 'scoped memory for tpu_custom_call.1']
    #allocation6 [shape = 'u8[786432]{0}', space=vmem, size = 0xc0000, scoped, tag = 'input window, operand 1, single buffered']
    #allocation7 [shape = 's32[1]{0}', space=sflag, size = 0x4, scoped, tag = 'scoped memory for tpu_custom_call.1']
    %13 = vsyncpa [#allocation5], 0
    %s14 = scalar_lea.sflag [#allocation5], 1
    %15 = vsyncpa %s14, 0
    %16 = vsyncpa [#allocation7], 0
    loop: start=0, step=1, limit=4
    $region2: #{tpu_custom_call.1} parent=1 // loop_pre_header
      _
    $region3: #{tpu_custom_call.1} parent=1 // loop_header
      %s18 = sphi 0, %s22
      %p19 = scmp.ge.s32.totalorder %s18, 4
      %s28 = sphi 0, %s30
      %s31 = sphi 0, %s28
      %s32 = sphi 0, %s31
      %s48 = sphi 0, %s32
      %s52 = sphi 0, %s52
      %s54 = sphi 0, %s52
      %s55 = sphi 0, %s54
      %s69 = sphi 0, %s55
      %s73 = sphi 0, %s73
      %s75 = sphi 0, %s73
      %s76 = sphi 0, %s75
      %s90 = sphi 0, %s76
      %s94 = sphi 0, %s94
      %s96 = sphi 0, %s94
      %s97 = sphi 0, %s96
      %s111 = sphi 0, %s97
      %s115 = sphi 0, %s115
      %s117 = sphi 0, %s115
      %s118 = sphi 0, %s117
      %s132 = sphi 0, %s118
      %s136 = sphi 0, %s136
      %s138 = sphi 0, %s136
      %s139 = sphi 0, %s138
      %s153 = sphi 0, %s139
      %s159 = sphi 0, %s161
      %s162 = sphi 0, %s159
      %s163 = sphi 0, %s162
      %s179 = sphi 0, %s163
    $region4: #{tpu_custom_call.1} parent=1 // loop_header_branch
      %21 = sbr.rel (%p19) target = $region8
    $region5: #{tpu_custom_call.1} parent=1 // loop_body
      %s23 = ssub.s32 %s18, 1
      %s24 = ssub.s32 %s18, 2
      %s25 = sadd.s32 %s18, 1
      %s26 = ssub.s32 %s18, %s25
      %p27 = scmp.eq.s32.totalorder %s26, 0
      %s29 = sadd.s32 %s28, 1
      %s30 = scalar_select %p27, %s28, %s29
      %p33 = pneg %p27
      %p34 = scmp.eq.s32.totalorder %s18, 1
      %p35 = por %p33, %p34
      %p36 = scmp.ne.s32.totalorder %s28, %s31
      %p37 = scmp.eq.s32.totalorder %s18, 0
      %p38 = por %p36, %p37
      %p39 = scmp.ne.s32.totalorder %s28, %s31
      %p40 = scmp.eq.s32.totalorder %s23, 1
      %p41 = por %p39, %p40
      %p42 = scmp.ne.s32.totalorder %s31, %s32
      %p43 = scmp.eq.s32.totalorder %s23, 0
      %p44 = por %p42, %p43
      %p45 = scmp.ne.s32.totalorder %s31, %s32
      %p46 = scmp.eq.s32.totalorder %s24, 1
      %p47 = por %p45, %p46
      %p49 = scmp.ne.s32.totalorder %s32, %s48
      %p50 = scmp.eq.s32.totalorder %s24, 0
      %p51 = por %p49, %p50
      %s53 = sadd.s32 %s52, 1
      %p56 = scmp.eq.s32.totalorder %s18, 1
      %p57 = scmp.ne.s32.totalorder %s52, %s54
      %p58 = scmp.eq.s32.totalorder %s18, 0
      %p59 = por %p57, %p58
      %p60 = scmp.ne.s32.totalorder %s52, %s54
      %p61 = scmp.eq.s32.totalorder %s23, 1
      %p62 = por %p60, %p61
      %p63 = scmp.ne.s32.totalorder %s54, %s55
      %p64 = scmp.eq.s32.totalorder %s23, 0
      %p65 = por %p63, %p64
      %p66 = scmp.ne.s32.totalorder %s54, %s55
      %p67 = scmp.eq.s32.totalorder %s24, 1
      %p68 = por %p66, %p67
      %p70 = scmp.ne.s32.totalorder %s55, %s69
      %p71 = scmp.eq.s32.totalorder %s24, 0
      %p72 = por %p70, %p71
      %s74 = sadd.s32 %s73, 1
      %p77 = scmp.eq.s32.totalorder %s18, 1
      %p78 = scmp.ne.s32.totalorder %s73, %s75
      %p79 = scmp.eq.s32.totalorder %s18, 0
      %p80 = por %p78, %p79
      %p81 = scmp.ne.s32.totalorder %s73, %s75
      %p82 = scmp.eq.s32.totalorder %s23, 1
      %p83 = por %p81, %p82
      %p84 = scmp.ne.s32.totalorder %s75, %s76
      %p85 = scmp.eq.s32.totalorder %s23, 0
      %p86 = por %p84, %p85
      %p87 = scmp.ne.s32.totalorder %s75, %s76
      %p88 = scmp.eq.s32.totalorder %s24, 1
      %p89 = por %p87, %p88
      %p91 = scmp.ne.s32.totalorder %s76, %s90
      %p92 = scmp.eq.s32.totalorder %s24, 0
      %p93 = por %p91, %p92
      %s95 = sadd.s32 %s94, 1
      %p98 = scmp.eq.s32.totalorder %s18, 1
      %p99 = scmp.ne.s32.totalorder %s94, %s96
      %p100 = scmp.eq.s32.totalorder %s18, 0
      %p101 = por %p99, %p100
      %p102 = scmp.ne.s32.totalorder %s94, %s96
      %p103 = scmp.eq.s32.totalorder %s23, 1
      %p104 = por %p102, %p103
      %p105 = scmp.ne.s32.totalorder %s96, %s97
      %p106 = scmp.eq.s32.totalorder %s23, 0
      %p107 = por %p105, %p106
      %p108 = scmp.ne.s32.totalorder %s96, %s97
      %p109 = scmp.eq.s32.totalorder %s24, 1
      %p110 = por %p108, %p109
      %p112 = scmp.ne.s32.totalorder %s97, %s111
      %p113 = scmp.eq.s32.totalorder %s24, 0
      %p114 = por %p112, %p113
      %s116 = sadd.s32 %s115, 1
      %p119 = scmp.eq.s32.totalorder %s18, 1
      %p120 = scmp.ne.s32.totalorder %s115, %s117
      %p121 = scmp.eq.s32.totalorder %s18, 0
      %p122 = por %p120, %p121
      %p123 = scmp.ne.s32.totalorder %s115, %s117
      %p124 = scmp.eq.s32.totalorder %s23, 1
      %p125 = por %p123, %p124
      %p126 = scmp.ne.s32.totalorder %s117, %s118
      %p127 = scmp.eq.s32.totalorder %s23, 0
      %p128 = por %p126, %p127
      %p129 = scmp.ne.s32.totalorder %s117, %s118
      %p130 = scmp.eq.s32.totalorder %s24, 1
      %p131 = por %p129, %p130
      %p133 = scmp.ne.s32.totalorder %s118, %s132
      %p134 = scmp.eq.s32.totalorder %s24, 0
      %p135 = por %p133, %p134
      %s137 = sadd.s32 %s136, 1
      %p140 = scmp.eq.s32.totalorder %s18, 1
      %p141 = scmp.ne.s32.totalorder %s136, %s138
      %p142 = scmp.eq.s32.totalorder %s18, 0
      %p143 = por %p141, %p142
      %p144 = scmp.ne.s32.totalorder %s136, %s138
      %p145 = scmp.eq.s32.totalorder %s23, 1
      %p146 = por %p144, %p145
      %p147 = scmp.ne.s32.totalorder %s138, %s139
      %p148 = scmp.eq.s32.totalorder %s23, 0
      %p149 = por %p147, %p148
      %p150 = scmp.ne.s32.totalorder %s138, %s139
      %p151 = scmp.eq.s32.totalorder %s24, 1
      %p152 = por %p150, %p151
      %p154 = scmp.ne.s32.totalorder %s139, %s153
      %p155 = scmp.eq.s32.totalorder %s24, 0
      %p156 = por %p154, %p155
      %s157 = ssub.s32 %s18, %s25
      %p158 = scmp.eq.s32.totalorder %s157, 0
      %s160 = sadd.s32 %s159, 1
      %s161 = scalar_select %p158, %s159, %s160
      %p164 = pneg %p158
      %p165 = scmp.eq.s32.totalorder %s18, 1
      %p166 = por %p164, %p165
      %p167 = scmp.ne.s32.totalorder %s159, %s162
      %p168 = scmp.eq.s32.totalorder %s18, 0
      %p169 = por %p167, %p168
      %p170 = scmp.ne.s32.totalorder %s159, %s162
      %p171 = scmp.eq.s32.totalorder %s23, 1
      %p172 = por %p170, %p171
      %p173 = scmp.ne.s32.totalorder %s162, %s163
      %p174 = scmp.eq.s32.totalorder %s23, 0
      %p175 = por %p173, %p174
      %p176 = scmp.ne.s32.totalorder %s162, %s163
      %p177 = scmp.eq.s32.totalorder %s24, 1
      %p178 = por %p176, %p177
      %p180 = scmp.ne.s32.totalorder %s163, %s179
      %p181 = scmp.eq.s32.totalorder %s24, 0
      %p182 = por %p180, %p181
      %p183 = scmp.le.s32.totalorder 1, %s18
      %p184 = scmp.lt.s32.totalorder %s18, 3
      %p185 = pnand %p183, %p184
      %p186 = pneg %p185
      // Predicated region
      $region9: #{tpu_custom_call.1} parent=5 // pred_check
        _
      $region10: #{tpu_custom_call.1} parent=5 // pred_check_branch
        %188 = sbr.rel (%p185) target = $region12
      $region11: #{tpu_custom_call.1} parent=5 // pred_region
        %s189 = ssub.s32 %s18, 1
        // Predicated region
        $region13: #{tpu_custom_call.1} parent=11 // pred_check
          %p190 = pneg %p65
        $region14: #{tpu_custom_call.1} parent=11 // pred_check_branch
          %192 = sbr.rel (%p190) target = $region16
        $region15: #{tpu_custom_call.1} parent=11 // pred_region
          %s194 = ssub.s32 24576, 24576
          %195 = vsyncadd [#allocation7], %s194
          %s196 = sshll.u32 [#allocation6], 4
          %s197 = int_to_ptr.vmem [resolvable:$true] %s196
          %202 = dma.hbm_to_vmem [thread:$0]  %s1, 24576, %s197, [#allocation7], 256, 256, 16
        $region16: #{tpu_custom_call.1} parent=11 // pred_fallthru
          _
        // Predicated region
        $region17: #{tpu_custom_call.1} parent=11 // pred_check
          %p203 = pneg %p86
        $region18: #{tpu_custom_call.1} parent=11 // pred_check_branch
          %205 = sbr.rel (%p203) target = $region20
        $region19: #{tpu_custom_call.1} parent=11 // pred_region
          _
        $region20: #{tpu_custom_call.1} parent=11 // pred_fallthru
          _
        // Predicated region
        $region21: #{tpu_custom_call.1} parent=11 // pred_check
          %p206 = pneg %p107
        $region22: #{tpu_custom_call.1} parent=11 // pred_check_branch
          %208 = sbr.rel (%p206) target = $region24
        $region23: #{tpu_custom_call.1} parent=11 // pred_region
          _
        $region24: #{tpu_custom_call.1} parent=11 // pred_fallthru
          _
        // Predicated region
        $region25: #{tpu_custom_call.1} parent=11 // pred_check
          %p209 = pneg %p128
        $region26: #{tpu_custom_call.1} parent=11 // pred_check_branch
          %211 = sbr.rel (%p209) target = $region28
        $region27: #{tpu_custom_call.1} parent=11 // pred_region
          _
        $region28: #{tpu_custom_call.1} parent=11 // pred_fallthru
          _
        // Predicated region
        $region29: #{tpu_custom_call.1} parent=11 // pred_check
          %p212 = pneg %p149
        $region30: #{tpu_custom_call.1} parent=11 // pred_check_branch
          %214 = sbr.rel (%p212) target = $region32
        $region31: #{tpu_custom_call.1} parent=11 // pred_region
          _
        $region32: #{tpu_custom_call.1} parent=11 // pred_fallthru
          _
      $region12: #{tpu_custom_call.1} parent=5 // pred_fallthru
        _
      %p215 = scmp.lt.s32.totalorder %s18, 2
      // Predicated region
      $region33: #{tpu_custom_call.1} parent=5 // pred_check
        %p216 = pneg %p215
      $region34: #{tpu_custom_call.1} parent=5 // pred_check_branch
        %218 = sbr.rel (%p216) target = $region36
      $region35: #{tpu_custom_call.1} parent=5 // pred_region
        // Predicated region
        $region37: #{tpu_custom_call.1} parent=35 // pred_check
          %p219 = pneg %p38
        $region38: #{tpu_custom_call.1} parent=35 // pred_check_branch
          %221 = sbr.rel (%p219) target = $region40
        $region39: #{tpu_custom_call.1} parent=35 // pred_region
          %s222 = sand.u32 %s28, 1
          %s223 = scalar_lea.sflag [#allocation5], %s222
          %s224 = sand.u32 %s28, 1
          %s225 = smul.addr %s224, 64
          %s226 = scalar_lea.vmem [#allocation4], %s225
          %s228 = ssub.s32 1024, 1024
          %229 = vsyncadd %s223, %s228
          %s230 = smul.addr %s18, 8
          %s231 = smul.addr %s230, 128
          %s232 = scalar_lea.hbm %s0, %s231
          %s233 = sshll.u32 %s226, 4
          %s234 = int_to_ptr.vmem [resolvable:$true] %s233
          %239 = dma.hbm_to_vmem [thread:$0]  %s232, 1024, %s234, %s223, 128, 128, 8
        $region40: #{tpu_custom_call.1} parent=35 // pred_fallthru
          _
      $region36: #{tpu_custom_call.1} parent=5 // pred_fallthru
        _
      %p240 = scmp.le.s32.totalorder 1, %s18
      %p241 = scmp.lt.s32.totalorder %s18, 3
      %p242 = pnand %p240, %p241
      %p243 = pneg %p242
      // Predicated region
      $region41: #{tpu_custom_call.1} parent=5 // pred_check
        _
      $region42: #{tpu_custom_call.1} parent=5 // pred_check_branch
        %245 = sbr.rel (%p242) target = $region44
      $region43: #{tpu_custom_call.1} parent=5 // pred_region
        %s246 = ssub.s32 %s18, 1
        %s247 = sand.u32 %s31, 1
        %s248 = scalar_lea.sflag [#allocation5], %s247
        %s249 = sand.u32 %s31, 1
        %s250 = smul.addr %s249, 64
        %s251 = scalar_lea.vmem [#allocation4], %s250
        // Predicated region
        $region45: #{tpu_custom_call.1} parent=43 // pred_check
          %p252 = pneg %p44
        $region46: #{tpu_custom_call.1} parent=43 // pred_check_branch
          %254 = sbr.rel (%p252) target = $region48
        $region47: #{tpu_custom_call.1} parent=43 // pred_region
          %255 = dma.done %s248, 1024
        $region48: #{tpu_custom_call.1} parent=43 // pred_fallthru
          _
        // Predicated region
        $region49: #{tpu_custom_call.1} parent=43 // pred_check
          %p256 = pneg %p65
        $region50: #{tpu_custom_call.1} parent=43 // pred_check_branch
          %258 = sbr.rel (%p256) target = $region52
        $region51: #{tpu_custom_call.1} parent=43 // pred_region
          %259 = dma.done [#allocation7], 24576
        $region52: #{tpu_custom_call.1} parent=43 // pred_fallthru
          _
        %s260 = sand.u32 %s31, 1
        %s261 = scalar_lea.sflag [#allocation5], %s260
        %s262 = sand.u32 %s31, 1
        %s263 = smul.addr %s262, 64
        %s264 = scalar_lea.vmem [#allocation4], %s263
        %p265 = pneg %p44
        %p266 = pneg %p41
        %p267 = pneg %p65
        %p268 = pneg %p62
        %p269 = pneg %p86
        %p270 = pneg %p83
        %p271 = pneg %p107
        %p272 = pneg %p104
        %p273 = pneg %p128
        %p274 = pneg %p125
        %p275 = pneg %p149
        %p276 = pneg %p146
        %p277 = pneg %p175
        %p278 = pneg %p172
        %p279 = scmp.lt.s32.totalorder %s23, 1
        %s280 = scalar_select %p279, %s23, 1
        %s281 = smul.addr %s280, 8
        %s282 = smul.addr %s281, 8
        %s283 = scalar_lea.vmem %s6, %s282
        %p284 = scmp.lt.s32.totalorder %s23, 1
        %s285 = scalar_select %p284, %s23, 1
        %s286 = smul.addr %s285, 8
        %s287 = smul.addr %s286, 8
        %s288 = scalar_lea.vmem %s6, %s287
        %vm289 = vcmask 523264
        %290 = vst.msk [vmem:[#allocation2] sm:$0xff] %vm289, 0.0
        %291 = vst.msk [vmem:[#allocation2 + $0x8] sm:$0xff] %vm289, 0.0
        %v292 = vld [vmem:[%s251] sm:$0xff]
        %v293 = vld [vmem:[%s251 + $0x8] sm:$0xff]
        %v294 = vld [vmem:[%s251 + $0x10] sm:$0xff]
        %v295 = vld [vmem:[%s251 + $0x18] sm:$0xff]
        %v296 = vld [vmem:[%s251 + $0x20] sm:$0xff]
        %v297 = vld [vmem:[%s251 + $0x28] sm:$0xff]
        %v298 = vld [vmem:[%s251 + $0x30] sm:$0xff]
        %v299 = vld [vmem:[%s251 + $0x38] sm:$0xff]
        %300 = vst.msk [vmem:[#allocation2 + $0x10] sm:$0xff] %vm289, %v292
        %301 = vst.msk [vmem:[#allocation2 + $0x18] sm:$0xff] %vm289, %v293
        %302 = vst.msk [vmem:[#allocation2 + $0x20] sm:$0xff] %vm289, %v294
        %303 = vst.msk [vmem:[#allocation2 + $0x28] sm:$0xff] %vm289, %v295
        %304 = vst.msk [vmem:[#allocation2 + $0x30] sm:$0xff] %vm289, %v296
        %305 = vst.msk [vmem:[#allocation2 + $0x38] sm:$0xff] %vm289, %v297
        %306 = vst.msk [vmem:[#allocation2 + $0x40] sm:$0xff] %vm289, %v298
        %307 = vst.msk [vmem:[#allocation2 + $0x48] sm:$0xff] %vm289, %v299
        %v308 = vld [vmem:[#allocation2 + $0xe] sm:$0xff]
        %v309 = vld [vmem:[#allocation2 + $0x16] sm:$0xff]
        %v310 = vld [vmem:[#allocation2 + $0x1e] sm:$0xff]
        %v311 = vld [vmem:[#allocation2 + $0x26] sm:$0xff]
        %v312 = vld [vmem:[#allocation2 + $0x2e] sm:$0xff]
        %v313 = vld [vmem:[#allocation2 + $0x36] sm:$0xff]
        %v314 = vld [vmem:[#allocation2 + $0x3e] sm:$0xff]
        %v315 = vld [vmem:[#allocation2 + $0x46] sm:$0xff]
        %v316 = vld [vmem:[#allocation6] sm:$0xff]
        %v317 = vld [vmem:[#allocation6 + $0x8] sm:$0xff]
        %v318 = vld [vmem:[#allocation6 + $0x10] sm:$0xff]
        %v319 = vld [vmem:[#allocation6 + $0x18] sm:$0xff]
        %v320 = vld [vmem:[#allocation6 + $0x20] sm:$0xff]
        %v321 = vld [vmem:[#allocation6 + $0x28] sm:$0xff]
        %v322 = vld [vmem:[#allocation6 + $0x30] sm:$0xff]
        %v323 = vld [vmem:[#allocation6 + $0x38] sm:$0xff]
        %v324 = vld [vmem:[#allocation6 + $0x40] sm:$0xff]
        %v325 = vld [vmem:[#allocation6 + $0x48] sm:$0xff]
        %v326 = vld [vmem:[#allocation6 + $0x50] sm:$0xff]
        %v327 = vld [vmem:[#allocation6 + $0x58] sm:$0xff]
        %v328 = vld [vmem:[#allocation6 + $0x60] sm:$0xff]
        %v329 = vld [vmem:[#allocation6 + $0x68] sm:$0xff]
        %v330 = vld [vmem:[#allocation6 + $0x70] sm:$0xff]
        %v331 = vld [vmem:[#allocation6 + $0x78] sm:$0xff]
        %v332 = vld [vmem:[#allocation2 + $0xf] sm:$0xff]
        %v333 = vld [vmem:[#allocation2 + $0x17] sm:$0xff]
        %v334 = vld [vmem:[#allocation2 + $0x1f] sm:$0xff]
        %v335 = vld [vmem:[#allocation2 + $0x27] sm:$0xff]
        %v336 = vld [vmem:[#allocation2 + $0x2f] sm:$0xff]
        %v337 = vld [vmem:[#allocation2 + $0x37] sm:$0xff]
        %v338 = vld [vmem:[#allocation2 + $0x3f] sm:$0xff]
        %v339 = vld [vmem:[#allocation2 + $0x47] sm:$0xff]
        %s340 = scalar_lea.vmem [#allocation6], 128
        %v341 = vld [vmem:[%s340] sm:$0xff]
        %v342 = vld [vmem:[%s340 + $0x8] sm:$0xff]
        %v343 = vld [vmem:[%s340 + $0x10] sm:$0xff]
        %v344 = vld [vmem:[%s340 + $0x18] sm:$0xff]
        %v345 = vld [vmem:[%s340 + $0x20] sm:$0xff]
        %v346 = vld [vmem:[%s340 + $0x28] sm:$0xff]
        %v347 = vld [vmem:[%s340 + $0x30] sm:$0xff]
        %v348 = vld [vmem:[%s340 + $0x38] sm:$0xff]
        %v349 = vld [vmem:[%s340 + $0x40] sm:$0xff]
        %v350 = vld [vmem:[%s340 + $0x48] sm:$0xff]
        %v351 = vld [vmem:[%s340 + $0x50] sm:$0xff]
        %v352 = vld [vmem:[%s340 + $0x58] sm:$0xff]
        %v353 = vld [vmem:[%s340 + $0x60] sm:$0xff]
        %v354 = vld [vmem:[%s340 + $0x68] sm:$0xff]
        %v355 = vld [vmem:[%s340 + $0x70] sm:$0xff]
        %v356 = vld [vmem:[%s340 + $0x78] sm:$0xff]
        %v358 = vsel %vm289, %v332, 0
        %v361 = vsel %vm289, %v333, 0
        %v364 = vsel %vm289, %v334, 0
        %v367 = vsel %vm289, %v335, 0
        %v370 = vsel %vm289, %v336, 0
        %v373 = vsel %vm289, %v337, 0
        %v376 = vsel %vm289, %v338, 0
        %v379 = vsel %vm289, %v339, 0
        %381 = vmatprep.subr.mxu0 0.0
        %382 = vmatpush1.msra.mxu0 0.0
        %383 = vmatprep.subr.mxu0 0.0
        %384 = vmatpush1.msra.mxu0 0.0
        %385 = vmatprep.subr.mxu0 0.0
        %386 = vmatpush1.msra.mxu0 0.0
        %387 = vmatprep.subr.mxu0 0.0
        %388 = vmatpush1.msra.mxu0 0.0
        %389 = vmatprep.subr.mxu0 0.0
        %390 = vmatpush1.msra.mxu0 0.0
        %391 = vmatprep.subr.mxu0 0.0
        %392 = vmatpush1.msra.mxu0 0.0
        %393 = vmatprep.subr.mxu0 0.0
        %394 = vmatpush1.msra.mxu0 0.0
        %395 = vmatprep.subr.mxu0 0.0
        %396 = vmatpush1.msra.mxu0 0.0
        %397 = vmatprep.subr.mxu0 %v356
        %398 = vmatpush1.msra.mxu0 %v355
        %399 = vmatprep.subr.mxu0 %v354
        %400 = vmatpush1.msra.mxu0 %v353
        %401 = vmatprep.subr.mxu0 %v352
        %402 = vmatpush1.msra.mxu0 %v351
        %403 = vmatprep.subr.mxu0 %v350
        %404 = vmatpush1.msra.mxu0 %v349
        %405 = vmatprep.subr.mxu0 %v348
        %406 = vmatpush1.msra.mxu0 %v347
        %407 = vmatprep.subr.mxu0 %v346
        %408 = vmatpush1.msra.mxu0 %v345
        %409 = vmatprep.subr.mxu0 %v344
        %410 = vmatpush1.msra.mxu0 %v343
        %411 = vmatprep.subr.mxu0 %v342
        %412 = vmatpush1.msra.mxu0 %v341
        %413 = vmatprep.subr.mxu0 0.0
        %414 = vmatpush2.msra.mxu0 0.0
        %415 = vmatprep.subr.mxu0 0.0
        %416 = vmatpush2.msra.mxu0 0.0
        %417 = vmatprep.subr.mxu0 0.0
        %418 = vmatpush2.msra.mxu0 0.0
        %419 = vmatprep.subr.mxu0 0.0
        %420 = vmatpush2.msra.mxu0 0.0
        %421 = vmatprep.subr.mxu0 0.0
        %422 = vmatpush2.msra.mxu0 0.0
        %423 = vmatprep.subr.mxu0 0.0
        %424 = vmatpush2.msra.mxu0 0.0
        %425 = vmatprep.subr.mxu0 0.0
        %426 = vmatpush2.msra.mxu0 0.0
        %427 = vmatprep.subr.mxu0 0.0
        %428 = vmatpush2.msra.mxu0 0.0
        %429 = vmatprep.subr.mxu0 0.0
        %430 = vmatpush2.msra.mxu0 0.0
        %431 = vmatprep.subr.mxu0 0.0
        %432 = vmatpush2.msra.mxu0 0.0
        %433 = vmatprep.subr.mxu0 0.0
        %434 = vmatpush2.msra.mxu0 0.0
        %435 = vmatprep.subr.mxu0 0.0
        %436 = vmatpush2.msra.mxu0 0.0
        %437 = vmatprep.subr.mxu0 0.0
        %438 = vmatpush2.msra.mxu0 0.0
        %439 = vmatprep.subr.mxu0 0.0
        %440 = vmatpush2.msra.mxu0 0.0
        %441 = vmatprep.subr.mxu0 0.0
        %442 = vmatpush2.msra.mxu0 0.0
        %443 = vmatprep.subr.mxu0 0.0
        %444 = vmatpush2.msra.mxu0 0.0
        %445 = vmatprep.mubr.f32.mxu0 0.0
        %446 = vmatmul.mubr.f32.gmra.mxu0 %v358
        %v447 = vpop.f32.mrf.mxu0
        %v448 = vadd.f32 0.0, %v447
        %v449 = vpop.f32.mrf.mxu0
        %v450 = vadd.f32 0.0, %v449
        %451 = vmatprep.mubr.f32.mxu0 0.0
        %452 = vmatmul.mubr.f32.gmra.mxu0 %v361
        %v453 = vpop.f32.mrf.mxu0
        %v454 = vadd.f32 0.0, %v453
        %v455 = vpop.f32.mrf.mxu0
        %v456 = vadd.f32 0.0, %v455
        %457 = vmatprep.mubr.f32.mxu0 0.0
        %458 = vmatmul.mubr.f32.gmra.mxu0 %v364
        %v459 = vpop.f32.mrf.mxu0
        %v460 = vadd.f32 0.0, %v459
        %v461 = vpop.f32.mrf.mxu0
        %v462 = vadd.f32 0.0, %v461
        %463 = vmatprep.mubr.f32.mxu0 0.0
        %464 = vmatmul.mubr.f32.gmra.mxu0 %v367
        %v465 = vpop.f32.mrf.mxu0
        %v466 = vadd.f32 0.0, %v465
        %v467 = vpop.f32.mrf.mxu0
        %v468 = vadd.f32 0.0, %v467
        %469 = vmatprep.mubr.f32.mxu0 0.0
        %470 = vmatmul.mubr.f32.gmra.mxu0 %v370
        %v471 = vpop.f32.mrf.mxu0
        %v472 = vadd.f32 0.0, %v471
        %v473 = vpop.f32.mrf.mxu0
        %v474 = vadd.f32 0.0, %v473
        %475 = vmatprep.mubr.f32.mxu0 0.0
        %476 = vmatmul.mubr.f32.gmra.mxu0 %v373
        %v477 = vpop.f32.mrf.mxu0
        %v478 = vadd.f32 0.0, %v477
        %v479 = vpop.f32.mrf.mxu0
        %v480 = vadd.f32 0.0, %v479
        %481 = vmatprep.mubr.f32.mxu0 0.0
        %482 = vmatmul.mubr.f32.gmra.mxu0 %v376
        %v483 = vpop.f32.mrf.mxu0
        %v484 = vadd.f32 0.0, %v483
        %v485 = vpop.f32.mrf.mxu0
        %v486 = vadd.f32 0.0, %v485
        %487 = vmatprep.mubr.f32.mxu0 0.0
        %488 = vmatmul.mubr.f32.gmra.mxu0 %v379
        %v489 = vpop.f32.mrf.mxu0
        %v490 = vadd.f32 0.0, %v489
        %v491 = vpop.f32.mrf.mxu0
        %v492 = vadd.f32 0.0, %v491
        %493 = vdwg.mxu0
        %v495 = vsel %vm289, %v308, 0
        %v498 = vsel %vm289, %v309, 0
        %v501 = vsel %vm289, %v310, 0
        %v504 = vsel %vm289, %v311, 0
        %v507 = vsel %vm289, %v312, 0
        %v510 = vsel %vm289, %v313, 0
        %v513 = vsel %vm289, %v314, 0
        %v516 = vsel %vm289, %v315, 0
        %518 = vmatprep.subr.mxu0 0.0
        %519 = vmatpush1.msra.mxu0 0.0
        %520 = vmatprep.subr.mxu0 0.0
        %521 = vmatpush1.msra.mxu0 0.0
        %522 = vmatprep.subr.mxu0 0.0
        %523 = vmatpush1.msra.mxu0 0.0
        %524 = vmatprep.subr.mxu0 0.0
        %525 = vmatpush1.msra.mxu0 0.0
        %526 = vmatprep.subr.mxu0 0.0
        %527 = vmatpush1.msra.mxu0 0.0
        %528 = vmatprep.subr.mxu0 0.0
        %529 = vmatpush1.msra.mxu0 0.0
        %530 = vmatprep.subr.mxu0 0.0
        %531 = vmatpush1.msra.mxu0 0.0
        %532 = vmatprep.subr.mxu0 0.0
        %533 = vmatpush1.msra.mxu0 0.0
        %534 = vmatprep.subr.mxu0 %v331
        %535 = vmatpush1.msra.mxu0 %v330
        %536 = vmatprep.subr.mxu0 %v329
        %537 = vmatpush1.msra.mxu0 %v328
        %538 = vmatprep.subr.mxu0 %v327
        %539 = vmatpush1.msra.mxu0 %v326
        %540 = vmatprep.subr.mxu0 %v325
        %541 = vmatpush1.msra.mxu0 %v324
        %542 = vmatprep.subr.mxu0 %v323
        %543 = vmatpush1.msra.mxu0 %v322
        %544 = vmatprep.subr.mxu0 %v321
        %545 = vmatpush1.msra.mxu0 %v320
        %546 = vmatprep.subr.mxu0 %v319
        %547 = vmatpush1.msra.mxu0 %v318
        %548 = vmatprep.subr.mxu0 %v317
        %549 = vmatpush1.msra.mxu0 %v316
        %550 = vmatprep.subr.mxu0 0.0
        %551 = vmatpush2.msra.mxu0 0.0
        %552 = vmatprep.subr.mxu0 0.0
        %553 = vmatpush2.msra.mxu0 0.0
        %554 = vmatprep.subr.mxu0 0.0
        %555 = vmatpush2.msra.mxu0 0.0
        %556 = vmatprep.subr.mxu0 0.0
        %557 = vmatpush2.msra.mxu0 0.0
        %558 = vmatprep.subr.mxu0 0.0
        %559 = vmatpush2.msra.mxu0 0.0
        %560 = vmatprep.subr.mxu0 0.0
        %561 = vmatpush2.msra.mxu0 0.0
        %562 = vmatprep.subr.mxu0 0.0
        %563 = vmatpush2.msra.mxu0 0.0
        %564 = vmatprep.subr.mxu0 0.0
        %565 = vmatpush2.msra.mxu0 0.0
        %566 = vmatprep.subr.mxu0 0.0
        %567 = vmatpush2.msra.mxu0 0.0
        %568 = vmatprep.subr.mxu0 0.0
        %569 = vmatpush2.msra.mxu0 0.0
        %570 = vmatprep.subr.mxu0 0.0
        %571 = vmatpush2.msra.mxu0 0.0
        %572 = vmatprep.subr.mxu0 0.0
        %573 = vmatpush2.msra.mxu0 0.0
        %574 = vmatprep.subr.mxu0 0.0
        %575 = vmatpush2.msra.mxu0 0.0
        %576 = vmatprep.subr.mxu0 0.0
        %577 = vmatpush2.msra.mxu0 0.0
        %578 = vmatprep.subr.mxu0 0.0
        %579 = vmatpush2.msra.mxu0 0.0
        %580 = vmatprep.subr.mxu0 0.0
        %581 = vmatpush2.msra.mxu0 0.0
        %582 = vmatprep.mubr.f32.mxu0 0.0
        %583 = vmatmul.mubr.f32.gmra.mxu0 %v495
        %v584 = vpop.f32.mrf.mxu0
        %v585 = vadd.f32 %v448, %v584
        %v586 = vpop.f32.mrf.mxu0
        %v587 = vadd.f32 %v450, %v586
        %588 = vmatprep.mubr.f32.mxu0 0.0
        %589 = vmatmul.mubr.f32.gmra.mxu0 %v498
        %v590 = vpop.f32.mrf.mxu0
        %v591 = vadd.f32 %v454, %v590
        %v592 = vpop.f32.mrf.mxu0
        %v593 = vadd.f32 %v456, %v592
        %594 = vmatprep.mubr.f32.mxu0 0.0
        %595 = vmatmul.mubr.f32.gmra.mxu0 %v501
        %v596 = vpop.f32.mrf.mxu0
        %v597 = vadd.f32 %v460, %v596
        %v598 = vpop.f32.mrf.mxu0
        %v599 = vadd.f32 %v462, %v598
        %600 = vmatprep.mubr.f32.mxu0 0.0
        %601 = vmatmul.mubr.f32.gmra.mxu0 %v504
        %v602 = vpop.f32.mrf.mxu0
        %v603 = vadd.f32 %v466, %v602
        %v604 = vpop.f32.mrf.mxu0
        %v605 = vadd.f32 %v468, %v604
        %606 = vmatprep.mubr.f32.mxu0 0.0
        %607 = vmatmul.mubr.f32.gmra.mxu0 %v507
        %v608 = vpop.f32.mrf.mxu0
        %v609 = vadd.f32 %v472, %v608
        %v610 = vpop.f32.mrf.mxu0
        %v611 = vadd.f32 %v474, %v610
        %612 = vmatprep.mubr.f32.mxu0 0.0
        %613 = vmatmul.mubr.f32.gmra.mxu0 %v510
        %v614 = vpop.f32.mrf.mxu0
        %v615 = vadd.f32 %v478, %v614
        %v616 = vpop.f32.mrf.mxu0
        %v617 = vadd.f32 %v480, %v616
        %618 = vmatprep.mubr.f32.mxu0 0.0
        %619 = vmatmul.mubr.f32.gmra.mxu0 %v513
        %v620 = vpop.f32.mrf.mxu0
        %v621 = vadd.f32 %v484, %v620
        %v622 = vpop.f32.mrf.mxu0
        %v623 = vadd.f32 %v486, %v622
        %624 = vmatprep.mubr.f32.mxu0 0.0
        %625 = vmatmul.mubr.f32.gmra.mxu0 %v516
        %v626 = vpop.f32.mrf.mxu0
        %v627 = vadd.f32 %v490, %v626
        %v628 = vpop.f32.mrf.mxu0
        %v629 = vadd.f32 %v492, %v628
        %630 = vdwg.mxu0
        %v631 = vld [vmem:[#allocation2 + $0x10] sm:$0xff]
        %v632 = vld [vmem:[#allocation2 + $0x18] sm:$0xff]
        %v633 = vld [vmem:[#allocation2 + $0x20] sm:$0xff]
        %v634 = vld [vmem:[#allocation2 + $0x28] sm:$0xff]
        %v635 = vld [vmem:[#allocation2 + $0x30] sm:$0xff]
        %v636 = vld [vmem:[#allocation2 + $0x38] sm:$0xff]
        %v637 = vld [vmem:[#allocation2 + $0x40] sm:$0xff]
        %v638 = vld [vmem:[#allocation2 + $0x48] sm:$0xff]
        %s639 = scalar_lea.vmem [#allocation6], 256
        %v640 = vld [vmem:[%s639] sm:$0xff]
        %v641 = vld [vmem:[%s639 + $0x8] sm:$0xff]
        %v642 = vld [vmem:[%s639 + $0x10] sm:$0xff]
        %v643 = vld [vmem:[%s639 + $0x18] sm:$0xff]
        %v644 = vld [vmem:[%s639 + $0x20] sm:$0xff]
        %v645 = vld [vmem:[%s639 + $0x28] sm:$0xff]
        %v646 = vld [vmem:[%s639 + $0x30] sm:$0xff]
        %v647 = vld [vmem:[%s639 + $0x38] sm:$0xff]
        %v648 = vld [vmem:[%s639 + $0x40] sm:$0xff]
        %v649 = vld [vmem:[%s639 + $0x48] sm:$0xff]
        %v650 = vld [vmem:[%s639 + $0x50] sm:$0xff]
        %v651 = vld [vmem:[%s639 + $0x58] sm:$0xff]
        %v652 = vld [vmem:[%s639 + $0x60] sm:$0xff]
        %v653 = vld [vmem:[%s639 + $0x68] sm:$0xff]
        %v654 = vld [vmem:[%s639 + $0x70] sm:$0xff]
        %v655 = vld [vmem:[%s639 + $0x78] sm:$0xff]
        %v657 = vsel %vm289, %v631, 0
        %v660 = vsel %vm289, %v632, 0
        %v663 = vsel %vm289, %v633, 0
        %v666 = vsel %vm289, %v634, 0
        %v669 = vsel %vm289, %v635, 0
        %v672 = vsel %vm289, %v636, 0
        %v675 = vsel %vm289, %v637, 0
        %v678 = vsel %vm289, %v638, 0
        %680 = vmatprep.subr.mxu0 0.0
        %681 = vmatpush1.msra.mxu0 0.0
        %682 = vmatprep.subr.mxu0 0.0
        %683 = vmatpush1.msra.mxu0 0.0
        %684 = vmatprep.subr.mxu0 0.0
        %685 = vmatpush1.msra.mxu0 0.0
        %686 = vmatprep.subr.mxu0 0.0
        %687 = vmatpush1.msra.mxu0 0.0
        %688 = vmatprep.subr.mxu0 0.0
        %689 = vmatpush1.msra.mxu0 0.0
        %690 = vmatprep.subr.mxu0 0.0
        %691 = vmatpush1.msra.mxu0 0.0
        %692 = vmatprep.subr.mxu0 0.0
        %693 = vmatpush1.msra.mxu0 0.0
        %694 = vmatprep.subr.mxu0 0.0
        %695 = vmatpush1.msra.mxu0 0.0
        %696 = vmatprep.subr.mxu0 %v655
        %697 = vmatpush1.msra.mxu0 %v654
        %698 = vmatprep.subr.mxu0 %v653
        %699 = vmatpush1.msra.mxu0 %v652
        %700 = vmatprep.subr.mxu0 %v651
        %701 = vmatpush1.msra.mxu0 %v650
        %702 = vmatprep.subr.mxu0 %v649
        %703 = vmatpush1.msra.mxu0 %v648
        %704 = vmatprep.subr.mxu0 %v647
        %705 = vmatpush1.msra.mxu0 %v646
        %706 = vmatprep.subr.mxu0 %v645
        %707 = vmatpush1.msra.mxu0 %v644
        %708 = vmatprep.subr.mxu0 %v643
        %709 = vmatpush1.msra.mxu0 %v642
        %710 = vmatprep.subr.mxu0 %v641
        %711 = vmatpush1.msra.mxu0 %v640
        %712 = vmatprep.subr.mxu0 0.0
        %713 = vmatpush2.msra.mxu0 0.0
        %714 = vmatprep.subr.mxu0 0.0
        %715 = vmatpush2.msra.mxu0 0.0
        %716 = vmatprep.subr.mxu0 0.0
        %717 = vmatpush2.msra.mxu0 0.0
        %718 = vmatprep.subr.mxu0 0.0
        %719 = vmatpush2.msra.mxu0 0.0
        %720 = vmatprep.subr.mxu0 0.0
        %721 = vmatpush2.msra.mxu0 0.0
        %722 = vmatprep.subr.mxu0 0.0
        %723 = vmatpush2.msra.mxu0 0.0
        %724 = vmatprep.subr.mxu0 0.0
        %725 = vmatpush2.msra.mxu0 0.0
        %726 = vmatprep.subr.mxu0 0.0
        %727 = vmatpush2.msra.mxu0 0.0
        %728 = vmatprep.subr.mxu0 0.0
        %729 = vmatpush2.msra.mxu0 0.0
        %730 = vmatprep.subr.mxu0 0.0
        %731 = vmatpush2.msra.mxu0 0.0
        %732 = vmatprep.subr.mxu0 0.0
        %733 = vmatpush2.msra.mxu0 0.0
        %734 = vmatprep.subr.mxu0 0.0
        %735 = vmatpush2.msra.mxu0 0.0
        %736 = vmatprep.subr.mxu0 0.0
        %737 = vmatpush2.msra.mxu0 0.0
        %738 = vmatprep.subr.mxu0 0.0
        %739 = vmatpush2.msra.mxu0 0.0
        %740 = vmatprep.subr.mxu0 0.0
        %741 = vmatpush2.msra.mxu0 0.0
        %742 = vmatprep.subr.mxu0 0.0
        %743 = vmatpush2.msra.mxu0 0.0
        %744 = vmatprep.mubr.f32.mxu0 0.0
        %745 = vmatmul.mubr.f32.gmra.mxu0 %v657
        %v746 = vpop.f32.mrf.mxu0
        %v747 = vadd.f32 0.0, %v746
        %v748 = vpop.f32.mrf.mxu0
        %v749 = vadd.f32 0.0, %v748
        %750 = vmatprep.mubr.f32.mxu0 0.0
        %751 = vmatmul.mubr.f32.gmra.mxu0 %v660
        %v752 = vpop.f32.mrf.mxu0
        %v753 = vadd.f32 0.0, %v752
        %v754 = vpop.f32.mrf.mxu0
        %v755 = vadd.f32 0.0, %v754
        %756 = vmatprep.mubr.f32.mxu0 0.0
        %757 = vmatmul.mubr.f32.gmra.mxu0 %v663
        %v758 = vpop.f32.mrf.mxu0
        %v759 = vadd.f32 0.0, %v758
        %v760 = vpop.f32.mrf.mxu0
        %v761 = vadd.f32 0.0, %v760
        %762 = vmatprep.mubr.f32.mxu0 0.0
        %763 = vmatmul.mubr.f32.gmra.mxu0 %v666
        %v764 = vpop.f32.mrf.mxu0
        %v765 = vadd.f32 0.0, %v764
        %v766 = vpop.f32.mrf.mxu0
        %v767 = vadd.f32 0.0, %v766
        %768 = vmatprep.mubr.f32.mxu0 0.0
        %769 = vmatmul.mubr.f32.gmra.mxu0 %v669
        %v770 = vpop.f32.mrf.mxu0
        %v771 = vadd.f32 0.0, %v770
        %v772 = vpop.f32.mrf.mxu0
        %v773 = vadd.f32 0.0, %v772
        %774 = vmatprep.mubr.f32.mxu0 0.0
        %775 = vmatmul.mubr.f32.gmra.mxu0 %v672
        %v776 = vpop.f32.mrf.mxu0
        %v777 = vadd.f32 0.0, %v776
        %v778 = vpop.f32.mrf.mxu0
        %v779 = vadd.f32 0.0, %v778
        %780 = vmatprep.mubr.f32.mxu0 0.0
        %781 = vmatmul.mubr.f32.gmra.mxu0 %v675
        %v782 = vpop.f32.mrf.mxu0
        %v783 = vadd.f32 0.0, %v782
        %v784 = vpop.f32.mrf.mxu0
        %v785 = vadd.f32 0.0, %v784
        %786 = vmatprep.mubr.f32.mxu0 0.0
        %787 = vmatmul.mubr.f32.gmra.mxu0 %v678
        %v788 = vpop.f32.mrf.mxu0
        %v789 = vadd.f32 0.0, %v788
        %v790 = vpop.f32.mrf.mxu0
        %v791 = vadd.f32 0.0, %v790
        %792 = vdwg.mxu0
        %v793 = vadd.f32 %v585, %v747
        %v794 = vadd.f32 %v587, %v749
        %v795 = vadd.f32 %v591, %v753
        %v796 = vadd.f32 %v593, %v755
        %v797 = vadd.f32 %v597, %v759
        %v798 = vadd.f32 %v599, %v761
        %v799 = vadd.f32 %v603, %v765
        %v800 = vadd.f32 %v605, %v767
        %v801 = vadd.f32 %v609, %v771
        %v802 = vadd.f32 %v611, %v773
        %v803 = vadd.f32 %v615, %v777
        %v804 = vadd.f32 %v617, %v779
        %v805 = vadd.f32 %v621, %v783
        %v806 = vadd.f32 %v623, %v785
        %v807 = vadd.f32 %v627, %v789
        %v808 = vadd.f32 %v629, %v791
        %v809 = vld [vmem:[%s2] sm:$0x3]
        %v811 = vlaneseq
        %v812 = vshrl.u32 %v811, 7
        %v813 = vsub.s32 0, %v812
        %v814 = vrot.slane %v809, %v813
        %v815 = vlaneseq
        %v816 = vshrl.u32 %v815, 7
        %v817 = vsub.s32 1, %v816
        %v818 = vrot.slane %v809, %v817
        %v821 = vadd.f32 %v793, %v814
        %v822 = vadd.f32 %v794, %v818
        %v823 = vadd.f32 %v795, %v814
        %v824 = vadd.f32 %v796, %v818
        %v825 = vadd.f32 %v797, %v814
        %v826 = vadd.f32 %v798, %v818
        %v827 = vadd.f32 %v799, %v814
        %v828 = vadd.f32 %v800, %v818
        %v829 = vadd.f32 %v801, %v814
        %v830 = vadd.f32 %v802, %v818
        %v831 = vadd.f32 %v803, %v814
        %v832 = vadd.f32 %v804, %v818
        %v833 = vadd.f32 %v805, %v814
        %v834 = vadd.f32 %v806, %v818
        %v835 = vadd.f32 %v807, %v814
        %v836 = vadd.f32 %v808, %v818
        %v837 = vtanh.pop %v821
        %v838 = vtanh.pop %v823
        %v839 = vtanh.pop %v825
        %v840 = vtanh.pop %v827
        %v841 = vtanh.pop %v829
        %v842 = vtanh.pop %v831
        %v843 = vtanh.pop %v833
        %v844 = vtanh.pop %v835
        %v845 = vxor.u32 %v821, 2147483648
        %v846 = vxor.u32 %v823, 2147483648
        %v847 = vxor.u32 %v825, 2147483648
        %v848 = vxor.u32 %v827, 2147483648
        %v849 = vxor.u32 %v829, 2147483648
        %v850 = vxor.u32 %v831, 2147483648
        %v851 = vxor.u32 %v833, 2147483648
        %v852 = vxor.u32 %v835, 2147483648
        %v853 = vmul.f32 %v845, 1.442695
        %v854 = vpow.pop %v853
        %v855 = vmul.f32 %v846, 1.442695
        %v856 = vpow.pop %v855
        %v857 = vmul.f32 %v847, 1.442695
        %v858 = vpow.pop %v857
        %v859 = vmul.f32 %v848, 1.442695
        %v860 = vpow.pop %v859
        %v861 = vmul.f32 %v849, 1.442695
        %v862 = vpow.pop %v861
        %v863 = vmul.f32 %v850, 1.442695
        %v864 = vpow.pop %v863
        %v865 = vmul.f32 %v851, 1.442695
        %v866 = vpow.pop %v865
        %v867 = vmul.f32 %v852, 1.442695
        %v868 = vpow.pop %v867
        %v869 = vadd.f32 %v854, 1.0
        %v870 = vadd.f32 %v856, 1.0
        %v871 = vadd.f32 %v858, 1.0
        %v872 = vadd.f32 %v860, 1.0
        %v873 = vadd.f32 %v862, 1.0
        %v874 = vadd.f32 %v864, 1.0
        %v875 = vadd.f32 %v866, 1.0
        %v876 = vadd.f32 %v868, 1.0
        %v877 = vrcp.pop %v869
        %v878 = vmul.f32 1.0, %v877
        %v879 = vrcp.pop %v870
        %v880 = vmul.f32 1.0, %v879
        %v881 = vrcp.pop %v871
        %v882 = vmul.f32 1.0, %v881
        %v883 = vrcp.pop %v872
        %v884 = vmul.f32 1.0, %v883
        %v885 = vrcp.pop %v873
        %v886 = vmul.f32 1.0, %v885
        %v887 = vrcp.pop %v874
        %v888 = vmul.f32 1.0, %v887
        %v889 = vrcp.pop %v875
        %v890 = vmul.f32 1.0, %v889
        %v891 = vrcp.pop %v876
        %v892 = vmul.f32 1.0, %v891
        %901 = vrot.lane.b32.xlu0 %v878, 64
        %v902 = vpop.permute.xlu0 %901
        %903 = vrot.lane.b32.xlu0 %v880, 64
        %v904 = vpop.permute.xlu0 %903
        %905 = vrot.lane.b32.xlu0 %v882, 64
        %v906 = vpop.permute.xlu0 %905
        %907 = vrot.lane.b32.xlu0 %v884, 64
        %v908 = vpop.permute.xlu0 %907
        %909 = vrot.lane.b32.xlu0 %v886, 64
        %v910 = vpop.permute.xlu0 %909
        %911 = vrot.lane.b32.xlu0 %v888, 64
        %v912 = vpop.permute.xlu0 %911
        %913 = vrot.lane.b32.xlu0 %v890, 64
        %v914 = vpop.permute.xlu0 %913
        %915 = vrot.lane.b32.xlu0 %v892, 64
        %v916 = vpop.permute.xlu0 %915
        %v925 = vmul.f32 %v837, %v902
        %v926 = vmul.f32 %v838, %v904
        %v927 = vmul.f32 %v839, %v906
        %v928 = vmul.f32 %v840, %v908
        %v929 = vmul.f32 %v841, %v910
        %v930 = vmul.f32 %v842, %v912
        %v931 = vmul.f32 %v843, %v914
        %v932 = vmul.f32 %v844, %v916
        %v933 = vadd.f32 %v925, %v822
        %v934 = vadd.f32 %v926, %v824
        %v935 = vadd.f32 %v927, %v826
        %v936 = vadd.f32 %v928, %v828
        %v937 = vadd.f32 %v929, %v830
        %v938 = vadd.f32 %v930, %v832
        %v939 = vadd.f32 %v931, %v834
        %v940 = vadd.f32 %v932, %v836
        %v941 = vld [vmem:[%s3] sm:$0x1]
        %v943 = vlaneseq
        %v944 = vshrl.u32 %v943, 7
        %v945 = vsub.s32 0, %v944
        %v946 = vrot.slane %v941, %v945
        %v948 = vmul.f32 %v925, %v946
        %v949 = vmul.f32 %v926, %v946
        %v950 = vmul.f32 %v927, %v946
        %v951 = vmul.f32 %v928, %v946
        %v952 = vmul.f32 %v929, %v946
        %v953 = vmul.f32 %v930, %v946
        %v954 = vmul.f32 %v931, %v946
        %v955 = vmul.f32 %v932, %v946
        %v956 = vadd.f32 %v948, 0.0
        %v957 = vadd.f32 %v949, 0.0
        %v958 = vadd.f32 %v950, 0.0
        %v959 = vadd.f32 %v951, 0.0
        %v960 = vadd.f32 %v952, 0.0
        %v961 = vadd.f32 %v953, 0.0
        %v962 = vadd.f32 %v954, 0.0
        %v963 = vadd.f32 %v955, 0.0
        %964 = vst.msk [vmem:[#allocation2 + $0x10] sm:$0xff] %vm289, %v933
        %965 = vst.msk [vmem:[#allocation2 + $0x18] sm:$0xff] %vm289, %v934
        %966 = vst.msk [vmem:[#allocation2 + $0x20] sm:$0xff] %vm289, %v935
        %967 = vst.msk [vmem:[#allocation2 + $0x28] sm:$0xff] %vm289, %v936
        %968 = vst.msk [vmem:[#allocation2 + $0x30] sm:$0xff] %vm289, %v937
        %969 = vst.msk [vmem:[#allocation2 + $0x38] sm:$0xff] %vm289, %v938
        %970 = vst.msk [vmem:[#allocation2 + $0x40] sm:$0xff] %vm289, %v939
        %971 = vst.msk [vmem:[#allocation2 + $0x48] sm:$0xff] %vm289, %v940
        %v972 = vld [vmem:[#allocation2 + $0xc] sm:$0xff]
        %v973 = vld [vmem:[#allocation2 + $0x14] sm:$0xff]
        %v974 = vld [vmem:[#allocation2 + $0x1c] sm:$0xff]
        %v975 = vld [vmem:[#allocation2 + $0x24] sm:$0xff]
        %v976 = vld [vmem:[#allocation2 + $0x2c] sm:$0xff]
        %v977 = vld [vmem:[#allocation2 + $0x34] sm:$0xff]
        %v978 = vld [vmem:[#allocation2 + $0x3c] sm:$0xff]
        %v979 = vld [vmem:[#allocation2 + $0x44] sm:$0xff]
        %s980 = scalar_lea.vmem [#allocation6], 384
        %v981 = vld [vmem:[%s980] sm:$0xff]
        %v982 = vld [vmem:[%s980 + $0x8] sm:$0xff]
        %v983 = vld [vmem:[%s980 + $0x10] sm:$0xff]
        %v984 = vld [vmem:[%s980 + $0x18] sm:$0xff]
        %v985 = vld [vmem:[%s980 + $0x20] sm:$0xff]
        %v986 = vld [vmem:[%s980 + $0x28] sm:$0xff]
        %v987 = vld [vmem:[%s980 + $0x30] sm:$0xff]
        %v988 = vld [vmem:[%s980 + $0x38] sm:$0xff]
        %v989 = vld [vmem:[%s980 + $0x40] sm:$0xff]
        %v990 = vld [vmem:[%s980 + $0x48] sm:$0xff]
        %v991 = vld [vmem:[%s980 + $0x50] sm:$0xff]
        %v992 = vld [vmem:[%s980 + $0x58] sm:$0xff]
        %v993 = vld [vmem:[%s980 + $0x60] sm:$0xff]
        %v994 = vld [vmem:[%s980 + $0x68] sm:$0xff]
        %v995 = vld [vmem:[%s980 + $0x70] sm:$0xff]
        %v996 = vld [vmem:[%s980 + $0x78] sm:$0xff]
        %v997 = vld [vmem:[#allocation2 + $0xe] sm:$0xff]
        %v998 = vld [vmem:[#allocation2 + $0x16] sm:$0xff]
        %v999 = vld [vmem:[#allocation2 + $0x1e] sm:$0xff]
        %v1000 = vld [vmem:[#allocation2 + $0x26] sm:$0xff]
        %v1001 = vld [vmem:[#allocation2 + $0x2e] sm:$0xff]
        %v1002 = vld [vmem:[#allocation2 + $0x36] sm:$0xff]
        %v1003 = vld [vmem:[#allocation2 + $0x3e] sm:$0xff]
        %v1004 = vld [vmem:[#allocation2 + $0x46] sm:$0xff]
        %s1005 = scalar_lea.vmem [#allocation6], 512
        %v1006 = vld [vmem:[%s1005] sm:$0xff]
        %v1007 = vld [vmem:[%s1005 + $0x8] sm:$0xff]
        %v1008 = vld [vmem:[%s1005 + $0x10] sm:$0xff]
        %v1009 = vld [vmem:[%s1005 + $0x18] sm:$0xff]
        %v1010 = vld [vmem:[%s1005 + $0x20] sm:$0xff]
        %v1011 = vld [vmem:[%s1005 + $0x28] sm:$0xff]
        %v1012 = vld [vmem:[%s1005 + $0x30] sm:$0xff]
        %v1013 = vld [vmem:[%s1005 + $0x38] sm:$0xff]
        %v1014 = vld [vmem:[%s1005 + $0x40] sm:$0xff]
        %v1015 = vld [vmem:[%s1005 + $0x48] sm:$0xff]
        %v1016 = vld [vmem:[%s1005 + $0x50] sm:$0xff]
        %v1017 = vld [vmem:[%s1005 + $0x58] sm:$0xff]
        %v1018 = vld [vmem:[%s1005 + $0x60] sm:$0xff]
        %v1019 = vld [vmem:[%s1005 + $0x68] sm:$0xff]
        %v1020 = vld [vmem:[%s1005 + $0x70] sm:$0xff]
        %v1021 = vld [vmem:[%s1005 + $0x78] sm:$0xff]
        %v1023 = vsel %vm289, %v997, 0
        %v1026 = vsel %vm289, %v998, 0
        %v1029 = vsel %vm289, %v999, 0
        %v1032 = vsel %vm289, %v1000, 0
        %v1035 = vsel %vm289, %v1001, 0
        %v1038 = vsel %vm289, %v1002, 0
        %v1041 = vsel %vm289, %v1003, 0
        %v1044 = vsel %vm289, %v1004, 0
        %1046 = vmatprep.subr.mxu0 0.0
        %1047 = vmatpush1.msra.mxu0 0.0
        %1048 = vmatprep.subr.mxu0 0.0
        %1049 = vmatpush1.msra.mxu0 0.0
        %1050 = vmatprep.subr.mxu0 0.0
        %1051 = vmatpush1.msra.mxu0 0.0
        %1052 = vmatprep.subr.mxu0 0.0
        %1053 = vmatpush1.msra.mxu0 0.0
        %1054 = vmatprep.subr.mxu0 0.0
        %1055 = vmatpush1.msra.mxu0 0.0
        %1056 = vmatprep.subr.mxu0 0.0
        %1057 = vmatpush1.msra.mxu0 0.0
        %1058 = vmatprep.subr.mxu0 0.0
        %1059 = vmatpush1.msra.mxu0 0.0
        %1060 = vmatprep.subr.mxu0 0.0
        %1061 = vmatpush1.msra.mxu0 0.0
        %1062 = vmatprep.subr.mxu0 %v1021
        %1063 = vmatpush1.msra.mxu0 %v1020
        %1064 = vmatprep.subr.mxu0 %v1019
        %1065 = vmatpush1.msra.mxu0 %v1018
        %1066 = vmatprep.subr.mxu0 %v1017
        %1067 = vmatpush1.msra.mxu0 %v1016
        %1068 = vmatprep.subr.mxu0 %v1015
        %1069 = vmatpush1.msra.mxu0 %v1014
        %1070 = vmatprep.subr.mxu0 %v1013
        %1071 = vmatpush1.msra.mxu0 %v1012
        %1072 = vmatprep.subr.mxu0 %v1011
        %1073 = vmatpush1.msra.mxu0 %v1010
        %1074 = vmatprep.subr.mxu0 %v1009
        %1075 = vmatpush1.msra.mxu0 %v1008
        %1076 = vmatprep.subr.mxu0 %v1007
        %1077 = vmatpush1.msra.mxu0 %v1006
        %1078 = vmatprep.subr.mxu0 0.0
        %1079 = vmatpush2.msra.mxu0 0.0
        %1080 = vmatprep.subr.mxu0 0.0
        %1081 = vmatpush2.msra.mxu0 0.0
        %1082 = vmatprep.subr.mxu0 0.0
        %1083 = vmatpush2.msra.mxu0 0.0
        %1084 = vmatprep.subr.mxu0 0.0
        %1085 = vmatpush2.msra.mxu0 0.0
        %1086 = vmatprep.subr.mxu0 0.0
        %1087 = vmatpush2.msra.mxu0 0.0
        %1088 = vmatprep.subr.mxu0 0.0
        %1089 = vmatpush2.msra.mxu0 0.0
        %1090 = vmatprep.subr.mxu0 0.0
        %1091 = vmatpush2.msra.mxu0 0.0
        %1092 = vmatprep.subr.mxu0 0.0
        %1093 = vmatpush2.msra.mxu0 0.0
        %1094 = vmatprep.subr.mxu0 0.0
        %1095 = vmatpush2.msra.mxu0 0.0
        %1096 = vmatprep.subr.mxu0 0.0
        %1097 = vmatpush2.msra.mxu0 0.0
        %1098 = vmatprep.subr.mxu0 0.0
        %1099 = vmatpush2.msra.mxu0 0.0
        %1100 = vmatprep.subr.mxu0 0.0
        %1101 = vmatpush2.msra.mxu0 0.0
        %1102 = vmatprep.subr.mxu0 0.0
        %1103 = vmatpush2.msra.mxu0 0.0
        %1104 = vmatprep.subr.mxu0 0.0
        %1105 = vmatpush2.msra.mxu0 0.0
        %1106 = vmatprep.subr.mxu0 0.0
        %1107 = vmatpush2.msra.mxu0 0.0
        %1108 = vmatprep.subr.mxu0 0.0
        %1109 = vmatpush2.msra.mxu0 0.0
        %1110 = vmatprep.mubr.f32.mxu0 0.0
        %1111 = vmatmul.mubr.f32.gmra.mxu0 %v1023
        %v1112 = vpop.f32.mrf.mxu0
        %v1113 = vadd.f32 0.0, %v1112
        %v1114 = vpop.f32.mrf.mxu0
        %v1115 = vadd.f32 0.0, %v1114
        %1116 = vmatprep.mubr.f32.mxu0 0.0
        %1117 = vmatmul.mubr.f32.gmra.mxu0 %v1026
        %v1118 = vpop.f32.mrf.mxu0
        %v1119 = vadd.f32 0.0, %v1118
        %v1120 = vpop.f32.mrf.mxu0
        %v1121 = vadd.f32 0.0, %v1120
        %1122 = vmatprep.mubr.f32.mxu0 0.0
        %1123 = vmatmul.mubr.f32.gmra.mxu0 %v1029
        %v1124 = vpop.f32.mrf.mxu0
        %v1125 = vadd.f32 0.0, %v1124
        %v1126 = vpop.f32.mrf.mxu0
        %v1127 = vadd.f32 0.0, %v1126
        %1128 = vmatprep.mubr.f32.mxu0 0.0
        %1129 = vmatmul.mubr.f32.gmra.mxu0 %v1032
        %v1130 = vpop.f32.mrf.mxu0
        %v1131 = vadd.f32 0.0, %v1130
        %v1132 = vpop.f32.mrf.mxu0
        %v1133 = vadd.f32 0.0, %v1132
        %1134 = vmatprep.mubr.f32.mxu0 0.0
        %1135 = vmatmul.mubr.f32.gmra.mxu0 %v1035
        %v1136 = vpop.f32.mrf.mxu0
        %v1137 = vadd.f32 0.0, %v1136
        %v1138 = vpop.f32.mrf.mxu0
        %v1139 = vadd.f32 0.0, %v1138
        %1140 = vmatprep.mubr.f32.mxu0 0.0
        %1141 = vmatmul.mubr.f32.gmra.mxu0 %v1038
        %v1142 = vpop.f32.mrf.mxu0
        %v1143 = vadd.f32 0.0, %v1142
        %v1144 = vpop.f32.mrf.mxu0
        %v1145 = vadd.f32 0.0, %v1144
        %1146 = vmatprep.mubr.f32.mxu0 0.0
        %1147 = vmatmul.mubr.f32.gmra.mxu0 %v1041
        %v1148 = vpop.f32.mrf.mxu0
        %v1149 = vadd.f32 0.0, %v1148
        %v1150 = vpop.f32.mrf.mxu0
        %v1151 = vadd.f32 0.0, %v1150
        %1152 = vmatprep.mubr.f32.mxu0 0.0
        %1153 = vmatmul.mubr.f32.gmra.mxu0 %v1044
        %v1154 = vpop.f32.mrf.mxu0
        %v1155 = vadd.f32 0.0, %v1154
        %v1156 = vpop.f32.mrf.mxu0
        %v1157 = vadd.f32 0.0, %v1156
        %1158 = vdwg.mxu0
        %v1160 = vsel %vm289, %v972, 0
        %v1163 = vsel %vm289, %v973, 0
        %v1166 = vsel %vm289, %v974, 0
        %v1169 = vsel %vm289, %v975, 0
        %v1172 = vsel %vm289, %v976, 0
        %v1175 = vsel %vm289, %v977, 0
        %v1178 = vsel %vm289, %v978, 0
        %v1181 = vsel %vm289, %v979, 0
        %1183 = vmatprep.subr.mxu0 0.0
        %1184 = vmatpush1.msra.mxu0 0.0
        %1185 = vmatprep.subr.mxu0 0.0
        %1186 = vmatpush1.msra.mxu0 0.0
        %1187 = vmatprep.subr.mxu0 0.0
        %1188 = vmatpush1.msra.mxu0 0.0
        %1189 = vmatprep.subr.mxu0 0.0
        %1190 = vmatpush1.msra.mxu0 0.0
        %1191 = vmatprep.subr.mxu0 0.0
        %1192 = vmatpush1.msra.mxu0 0.0
        %1193 = vmatprep.subr.mxu0 0.0
        %1194 = vmatpush1.msra.mxu0 0.0
        %1195 = vmatprep.subr.mxu0 0.0
        %1196 = vmatpush1.msra.mxu0 0.0
        %1197 = vmatprep.subr.mxu0 0.0
        %1198 = vmatpush1.msra.mxu0 0.0
        %1199 = vmatprep.subr.mxu0 %v996
        %1200 = vmatpush1.msra.mxu0 %v995
        %1201 = vmatprep.subr.mxu0 %v994
        %1202 = vmatpush1.msra.mxu0 %v993
        %1203 = vmatprep.subr.mxu0 %v992
        %1204 = vmatpush1.msra.mxu0 %v991
        %1205 = vmatprep.subr.mxu0 %v990
        %1206 = vmatpush1.msra.mxu0 %v989
        %1207 = vmatprep.subr.mxu0 %v988
        %1208 = vmatpush1.msra.mxu0 %v987
        %1209 = vmatprep.subr.mxu0 %v986
        %1210 = vmatpush1.msra.mxu0 %v985
        %1211 = vmatprep.subr.mxu0 %v984
        %1212 = vmatpush1.msra.mxu0 %v983
        %1213 = vmatprep.subr.mxu0 %v982
        %1214 = vmatpush1.msra.mxu0 %v981
        %1215 = vmatprep.subr.mxu0 0.0
        %1216 = vmatpush2.msra.mxu0 0.0
        %1217 = vmatprep.subr.mxu0 0.0
        %1218 = vmatpush2.msra.mxu0 0.0
        %1219 = vmatprep.subr.mxu0 0.0
        %1220 = vmatpush2.msra.mxu0 0.0
        %1221 = vmatprep.subr.mxu0 0.0
        %1222 = vmatpush2.msra.mxu0 0.0
        %1223 = vmatprep.subr.mxu0 0.0
        %1224 = vmatpush2.msra.mxu0 0.0
        %1225 = vmatprep.subr.mxu0 0.0
        %1226 = vmatpush2.msra.mxu0 0.0
        %1227 = vmatprep.subr.mxu0 0.0
        %1228 = vmatpush2.msra.mxu0 0.0
        %1229 = vmatprep.subr.mxu0 0.0
        %1230 = vmatpush2.msra.mxu0 0.0
        %1231 = vmatprep.subr.mxu0 0.0
        %1232 = vmatpush2.msra.mxu0 0.0
        %1233 = vmatprep.subr.mxu0 0.0
        %1234 = vmatpush2.msra.mxu0 0.0
        %1235 = vmatprep.subr.mxu0 0.0
        %1236 = vmatpush2.msra.mxu0 0.0
        %1237 = vmatprep.subr.mxu0 0.0
        %1238 = vmatpush2.msra.mxu0 0.0
        %1239 = vmatprep.subr.mxu0 0.0
        %1240 = vmatpush2.msra.mxu0 0.0
        %1241 = vmatprep.subr.mxu0 0.0
        %1242 = vmatpush2.msra.mxu0 0.0
        %1243 = vmatprep.subr.mxu0 0.0
        %1244 = vmatpush2.msra.mxu0 0.0
        %1245 = vmatprep.subr.mxu0 0.0
        %1246 = vmatpush2.msra.mxu0 0.0
        %1247 = vmatprep.mubr.f32.mxu0 0.0
        %1248 = vmatmul.mubr.f32.gmra.mxu0 %v1160
        %v1249 = vpop.f32.mrf.mxu0
        %v1250 = vadd.f32 %v1113, %v1249
        %v1251 = vpop.f32.mrf.mxu0
        %v1252 = vadd.f32 %v1115, %v1251
        %1253 = vmatprep.mubr.f32.mxu0 0.0
        %1254 = vmatmul.mubr.f32.gmra.mxu0 %v1163
        %v1255 = vpop.f32.mrf.mxu0
        %v1256 = vadd.f32 %v1119, %v1255
        %v1257 = vpop.f32.mrf.mxu0
        %v1258 = vadd.f32 %v1121, %v1257
        %1259 = vmatprep.mubr.f32.mxu0 0.0
        %1260 = vmatmul.mubr.f32.gmra.mxu0 %v1166
        %v1261 = vpop.f32.mrf.mxu0
        %v1262 = vadd.f32 %v1125, %v1261
        %v1263 = vpop.f32.mrf.mxu0
        %v1264 = vadd.f32 %v1127, %v1263
        %1265 = vmatprep.mubr.f32.mxu0 0.0
        %1266 = vmatmul.mubr.f32.gmra.mxu0 %v1169
        %v1267 = vpop.f32.mrf.mxu0
        %v1268 = vadd.f32 %v1131, %v1267
        %v1269 = vpop.f32.mrf.mxu0
        %v1270 = vadd.f32 %v1133, %v1269
        %1271 = vmatprep.mubr.f32.mxu0 0.0
        %1272 = vmatmul.mubr.f32.gmra.mxu0 %v1172
        %v1273 = vpop.f32.mrf.mxu0
        %v1274 = vadd.f32 %v1137, %v1273
        %v1275 = vpop.f32.mrf.mxu0
        %v1276 = vadd.f32 %v1139, %v1275
        %1277 = vmatprep.mubr.f32.mxu0 0.0
        %1278 = vmatmul.mubr.f32.gmra.mxu0 %v1175
        %v1279 = vpop.f32.mrf.mxu0
        %v1280 = vadd.f32 %v1143, %v1279
        %v1281 = vpop.f32.mrf.mxu0
        %v1282 = vadd.f32 %v1145, %v1281
        %1283 = vmatprep.mubr.f32.mxu0 0.0
        %1284 = vmatmul.mubr.f32.gmra.mxu0 %v1178
        %v1285 = vpop.f32.mrf.mxu0
        %v1286 = vadd.f32 %v1149, %v1285
        %v1287 = vpop.f32.mrf.mxu0
        %v1288 = vadd.f32 %v1151, %v1287
        %1289 = vmatprep.mubr.f32.mxu0 0.0
        %1290 = vmatmul.mubr.f32.gmra.mxu0 %v1181
        %v1291 = vpop.f32.mrf.mxu0
        %v1292 = vadd.f32 %v1155, %v1291
        %v1293 = vpop.f32.mrf.mxu0
        %v1294 = vadd.f32 %v1157, %v1293
        %1295 = vdwg.mxu0
        %v1296 = vld [vmem:[#allocation2 + $0x10] sm:$0xff]
        %v1297 = vld [vmem:[#allocation2 + $0x18] sm:$0xff]
        %v1298 = vld [vmem:[#allocation2 + $0x20] sm:$0xff]
        %v1299 = vld [vmem:[#allocation2 + $0x28] sm:$0xff]
        %v1300 = vld [vmem:[#allocation2 + $0x30] sm:$0xff]
        %v1301 = vld [vmem:[#allocation2 + $0x38] sm:$0xff]
        %v1302 = vld [vmem:[#allocation2 + $0x40] sm:$0xff]
        %v1303 = vld [vmem:[#allocation2 + $0x48] sm:$0xff]
        %s1304 = scalar_lea.vmem [#allocation6], 640
        %v1305 = vld [vmem:[%s1304] sm:$0xff]
        %v1306 = vld [vmem:[%s1304 + $0x8] sm:$0xff]
        %v1307 = vld [vmem:[%s1304 + $0x10] sm:$0xff]
        %v1308 = vld [vmem:[%s1304 + $0x18] sm:$0xff]
        %v1309 = vld [vmem:[%s1304 + $0x20] sm:$0xff]
        %v1310 = vld [vmem:[%s1304 + $0x28] sm:$0xff]
        %v1311 = vld [vmem:[%s1304 + $0x30] sm:$0xff]
        %v1312 = vld [vmem:[%s1304 + $0x38] sm:$0xff]
        %v1313 = vld [vmem:[%s1304 + $0x40] sm:$0xff]
        %v1314 = vld [vmem:[%s1304 + $0x48] sm:$0xff]
        %v1315 = vld [vmem:[%s1304 + $0x50] sm:$0xff]
        %v1316 = vld [vmem:[%s1304 + $0x58] sm:$0xff]
        %v1317 = vld [vmem:[%s1304 + $0x60] sm:$0xff]
        %v1318 = vld [vmem:[%s1304 + $0x68] sm:$0xff]
        %v1319 = vld [vmem:[%s1304 + $0x70] sm:$0xff]
        %v1320 = vld [vmem:[%s1304 + $0x78] sm:$0xff]
        %v1322 = vsel %vm289, %v1296, 0
        %v1325 = vsel %vm289, %v1297, 0
        %v1328 = vsel %vm289, %v1298, 0
        %v1331 = vsel %vm289, %v1299, 0
        %v1334 = vsel %vm289, %v1300, 0
        %v1337 = vsel %vm289, %v1301, 0
        %v1340 = vsel %vm289, %v1302, 0
        %v1343 = vsel %vm289, %v1303, 0
        %1345 = vmatprep.subr.mxu0 0.0
        %1346 = vmatpush1.msra.mxu0 0.0
        %1347 = vmatprep.subr.mxu0 0.0
        %1348 = vmatpush1.msra.mxu0 0.0
        %1349 = vmatprep.subr.mxu0 0.0
        %1350 = vmatpush1.msra.mxu0 0.0
        %1351 = vmatprep.subr.mxu0 0.0
        %1352 = vmatpush1.msra.mxu0 0.0
        %1353 = vmatprep.subr.mxu0 0.0
        %1354 = vmatpush1.msra.mxu0 0.0
        %1355 = vmatprep.subr.mxu0 0.0
        %1356 = vmatpush1.msra.mxu0 0.0
        %1357 = vmatprep.subr.mxu0 0.0
        %1358 = vmatpush1.msra.mxu0 0.0
        %1359 = vmatprep.subr.mxu0 0.0
        %1360 = vmatpush1.msra.mxu0 0.0
        %1361 = vmatprep.subr.mxu0 %v1320
        %1362 = vmatpush1.msra.mxu0 %v1319
        %1363 = vmatprep.subr.mxu0 %v1318
        %1364 = vmatpush1.msra.mxu0 %v1317
        %1365 = vmatprep.subr.mxu0 %v1316
        %1366 = vmatpush1.msra.mxu0 %v1315
        %1367 = vmatprep.subr.mxu0 %v1314
        %1368 = vmatpush1.msra.mxu0 %v1313
        %1369 = vmatprep.subr.mxu0 %v1312
        %1370 = vmatpush1.msra.mxu0 %v1311
        %1371 = vmatprep.subr.mxu0 %v1310
        %1372 = vmatpush1.msra.mxu0 %v1309
        %1373 = vmatprep.subr.mxu0 %v1308
        %1374 = vmatpush1.msra.mxu0 %v1307
        %1375 = vmatprep.subr.mxu0 %v1306
        %1376 = vmatpush1.msra.mxu0 %v1305
        %1377 = vmatprep.subr.mxu0 0.0
        %1378 = vmatpush2.msra.mxu0 0.0
        %1379 = vmatprep.subr.mxu0 0.0
        %1380 = vmatpush2.msra.mxu0 0.0
        %1381 = vmatprep.subr.mxu0 0.0
        %1382 = vmatpush2.msra.mxu0 0.0
        %1383 = vmatprep.subr.mxu0 0.0
        %1384 = vmatpush2.msra.mxu0 0.0
        %1385 = vmatprep.subr.mxu0 0.0
        %1386 = vmatpush2.msra.mxu0 0.0
        %1387 = vmatprep.subr.mxu0 0.0
        %1388 = vmatpush2.msra.mxu0 0.0
        %1389 = vmatprep.subr.mxu0 0.0
        %1390 = vmatpush2.msra.mxu0 0.0
        %1391 = vmatprep.subr.mxu0 0.0
        %1392 = vmatpush2.msra.mxu0 0.0
        %1393 = vmatprep.subr.mxu0 0.0
        %1394 = vmatpush2.msra.mxu0 0.0
        %1395 = vmatprep.subr.mxu0 0.0
        %1396 = vmatpush2.msra.mxu0 0.0
        %1397 = vmatprep.subr.mxu0 0.0
        %1398 = vmatpush2.msra.mxu0 0.0
        %1399 = vmatprep.subr.mxu0 0.0
        %1400 = vmatpush2.msra.mxu0 0.0
        %1401 = vmatprep.subr.mxu0 0.0
        %1402 = vmatpush2.msra.mxu0 0.0
        %1403 = vmatprep.subr.mxu0 0.0
        %1404 = vmatpush2.msra.mxu0 0.0
        %1405 = vmatprep.subr.mxu0 0.0
        %1406 = vmatpush2.msra.mxu0 0.0
        %1407 = vmatprep.subr.mxu0 0.0
        %1408 = vmatpush2.msra.mxu0 0.0
        %1409 = vmatprep.mubr.f32.mxu0 0.0
        %1410 = vmatmul.mubr.f32.gmra.mxu0 %v1322
        %v1411 = vpop.f32.mrf.mxu0
        %v1412 = vadd.f32 0.0, %v1411
        %v1413 = vpop.f32.mrf.mxu0
        %v1414 = vadd.f32 0.0, %v1413
        %1415 = vmatprep.mubr.f32.mxu0 0.0
        %1416 = vmatmul.mubr.f32.gmra.mxu0 %v1325
        %v1417 = vpop.f32.mrf.mxu0
        %v1418 = vadd.f32 0.0, %v1417
        %v1419 = vpop.f32.mrf.mxu0
        %v1420 = vadd.f32 0.0, %v1419
        %1421 = vmatprep.mubr.f32.mxu0 0.0
        %1422 = vmatmul.mubr.f32.gmra.mxu0 %v1328
        %v1423 = vpop.f32.mrf.mxu0
        %v1424 = vadd.f32 0.0, %v1423
        %v1425 = vpop.f32.mrf.mxu0
        %v1426 = vadd.f32 0.0, %v1425
        %1427 = vmatprep.mubr.f32.mxu0 0.0
        %1428 = vmatmul.mubr.f32.gmra.mxu0 %v1331
        %v1429 = vpop.f32.mrf.mxu0
        %v1430 = vadd.f32 0.0, %v1429
        %v1431 = vpop.f32.mrf.mxu0
        %v1432 = vadd.f32 0.0, %v1431
        %1433 = vmatprep.mubr.f32.mxu0 0.0
        %1434 = vmatmul.mubr.f32.gmra.mxu0 %v1334
        %v1435 = vpop.f32.mrf.mxu0
        %v1436 = vadd.f32 0.0, %v1435
        %v1437 = vpop.f32.mrf.mxu0
        %v1438 = vadd.f32 0.0, %v1437
        %1439 = vmatprep.mubr.f32.mxu0 0.0
        %1440 = vmatmul.mubr.f32.gmra.mxu0 %v1337
        %v1441 = vpop.f32.mrf.mxu0
        %v1442 = vadd.f32 0.0, %v1441
        %v1443 = vpop.f32.mrf.mxu0
        %v1444 = vadd.f32 0.0, %v1443
        %1445 = vmatprep.mubr.f32.mxu0 0.0
        %1446 = vmatmul.mubr.f32.gmra.mxu0 %v1340
        %v1447 = vpop.f32.mrf.mxu0
        %v1448 = vadd.f32 0.0, %v1447
        %v1449 = vpop.f32.mrf.mxu0
        %v1450 = vadd.f32 0.0, %v1449
        %1451 = vmatprep.mubr.f32.mxu0 0.0
        %1452 = vmatmul.mubr.f32.gmra.mxu0 %v1343
        %v1453 = vpop.f32.mrf.mxu0
        %v1454 = vadd.f32 0.0, %v1453
        %v1455 = vpop.f32.mrf.mxu0
        %v1456 = vadd.f32 0.0, %v1455
        %1457 = vdwg.mxu0
        %v1458 = vadd.f32 %v1250, %v1412
        %v1459 = vadd.f32 %v1252, %v1414
        %v1460 = vadd.f32 %v1256, %v1418
        %v1461 = vadd.f32 %v1258, %v1420
        %v1462 = vadd.f32 %v1262, %v1424
        %v1463 = vadd.f32 %v1264, %v1426
        %v1464 = vadd.f32 %v1268, %v1430
        %v1465 = vadd.f32 %v1270, %v1432
        %v1466 = vadd.f32 %v1274, %v1436
        %v1467 = vadd.f32 %v1276, %v1438
        %v1468 = vadd.f32 %v1280, %v1442
        %v1469 = vadd.f32 %v1282, %v1444
        %v1470 = vadd.f32 %v1286, %v1448
        %v1471 = vadd.f32 %v1288, %v1450
        %v1472 = vadd.f32 %v1292, %v1454
        %v1473 = vadd.f32 %v1294, %v1456
        %s1474 = scalar_lea.vmem %s2, 2
        %v1475 = vld [vmem:[%s1474] sm:$0x3]
        %v1477 = vlaneseq
        %v1478 = vshrl.u32 %v1477, 7
        %v1479 = vsub.s32 0, %v1478
        %v1480 = vrot.slane %v1475, %v1479
        %v1481 = vlaneseq
        %v1482 = vshrl.u32 %v1481, 7
        %v1483 = vsub.s32 1, %v1482
        %v1484 = vrot.slane %v1475, %v1483
        %v1487 = vadd.f32 %v1458, %v1480
        %v1488 = vadd.f32 %v1459, %v1484
        %v1489 = vadd.f32 %v1460, %v1480
        %v1490 = vadd.f32 %v1461, %v1484
        %v1491 = vadd.f32 %v1462, %v1480
        %v1492 = vadd.f32 %v1463, %v1484
        %v1493 = vadd.f32 %v1464, %v1480
        %v1494 = vadd.f32 %v1465, %v1484
        %v1495 = vadd.f32 %v1466, %v1480
        %v1496 = vadd.f32 %v1467, %v1484
        %v1497 = vadd.f32 %v1468, %v1480
        %v1498 = vadd.f32 %v1469, %v1484
        %v1499 = vadd.f32 %v1470, %v1480
        %v1500 = vadd.f32 %v1471, %v1484
        %v1501 = vadd.f32 %v1472, %v1480
        %v1502 = vadd.f32 %v1473, %v1484
        %v1503 = vtanh.pop %v1487
        %v1504 = vtanh.pop %v1489
        %v1505 = vtanh.pop %v1491
        %v1506 = vtanh.pop %v1493
        %v1507 = vtanh.pop %v1495
        %v1508 = vtanh.pop %v1497
        %v1509 = vtanh.pop %v1499
        %v1510 = vtanh.pop %v1501
        %v1511 = vxor.u32 %v1487, 2147483648
        %v1512 = vxor.u32 %v1489, 2147483648
        %v1513 = vxor.u32 %v1491, 2147483648
        %v1514 = vxor.u32 %v1493, 2147483648
        %v1515 = vxor.u32 %v1495, 2147483648
        %v1516 = vxor.u32 %v1497, 2147483648
        %v1517 = vxor.u32 %v1499, 2147483648
        %v1518 = vxor.u32 %v1501, 2147483648
        %v1519 = vmul.f32 %v1511, 1.442695
        %v1520 = vpow.pop %v1519
        %v1521 = vmul.f32 %v1512, 1.442695
        %v1522 = vpow.pop %v1521
        %v1523 = vmul.f32 %v1513, 1.442695
        %v1524 = vpow.pop %v1523
        %v1525 = vmul.f32 %v1514, 1.442695
        %v1526 = vpow.pop %v1525
        %v1527 = vmul.f32 %v1515, 1.442695
        %v1528 = vpow.pop %v1527
        %v1529 = vmul.f32 %v1516, 1.442695
        %v1530 = vpow.pop %v1529
        %v1531 = vmul.f32 %v1517, 1.442695
        %v1532 = vpow.pop %v1531
        %v1533 = vmul.f32 %v1518, 1.442695
        %v1534 = vpow.pop %v1533
        %v1535 = vadd.f32 %v1520, 1.0
        %v1536 = vadd.f32 %v1522, 1.0
        %v1537 = vadd.f32 %v1524, 1.0
        %v1538 = vadd.f32 %v1526, 1.0
        %v1539 = vadd.f32 %v1528, 1.0
        %v1540 = vadd.f32 %v1530, 1.0
        %v1541 = vadd.f32 %v1532, 1.0
        %v1542 = vadd.f32 %v1534, 1.0
        %v1543 = vrcp.pop %v1535
        %v1544 = vmul.f32 1.0, %v1543
        %v1545 = vrcp.pop %v1536
        %v1546 = vmul.f32 1.0, %v1545
        %v1547 = vrcp.pop %v1537
        %v1548 = vmul.f32 1.0, %v1547
        %v1549 = vrcp.pop %v1538
        %v1550 = vmul.f32 1.0, %v1549
        %v1551 = vrcp.pop %v1539
        %v1552 = vmul.f32 1.0, %v1551
        %v1553 = vrcp.pop %v1540
        %v1554 = vmul.f32 1.0, %v1553
        %v1555 = vrcp.pop %v1541
        %v1556 = vmul.f32 1.0, %v1555
        %v1557 = vrcp.pop %v1542
        %v1558 = vmul.f32 1.0, %v1557
        %1567 = vrot.lane.b32.xlu0 %v1544, 64
        %v1568 = vpop.permute.xlu0 %1567
        %1569 = vrot.lane.b32.xlu0 %v1546, 64
        %v1570 = vpop.permute.xlu0 %1569
        %1571 = vrot.lane.b32.xlu0 %v1548, 64
        %v1572 = vpop.permute.xlu0 %1571
        %1573 = vrot.lane.b32.xlu0 %v1550, 64
        %v1574 = vpop.permute.xlu0 %1573
        %1575 = vrot.lane.b32.xlu0 %v1552, 64
        %v1576 = vpop.permute.xlu0 %1575
        %1577 = vrot.lane.b32.xlu0 %v1554, 64
        %v1578 = vpop.permute.xlu0 %1577
        %1579 = vrot.lane.b32.xlu0 %v1556, 64
        %v1580 = vpop.permute.xlu0 %1579
        %1581 = vrot.lane.b32.xlu0 %v1558, 64
        %v1582 = vpop.permute.xlu0 %1581
        %v1591 = vmul.f32 %v1503, %v1568
        %v1592 = vmul.f32 %v1504, %v1570
        %v1593 = vmul.f32 %v1505, %v1572
        %v1594 = vmul.f32 %v1506, %v1574
        %v1595 = vmul.f32 %v1507, %v1576
        %v1596 = vmul.f32 %v1508, %v1578
        %v1597 = vmul.f32 %v1509, %v1580
        %v1598 = vmul.f32 %v1510, %v1582
        %v1599 = vadd.f32 %v1591, %v1488
        %v1600 = vadd.f32 %v1592, %v1490
        %v1601 = vadd.f32 %v1593, %v1492
        %v1602 = vadd.f32 %v1594, %v1494
        %v1603 = vadd.f32 %v1595, %v1496
        %v1604 = vadd.f32 %v1596, %v1498
        %v1605 = vadd.f32 %v1597, %v1500
        %v1606 = vadd.f32 %v1598, %v1502
        %s1607 = scalar_lea.vmem %s3, 1
        %v1608 = vld [vmem:[%s1607] sm:$0x1]
        %v1610 = vlaneseq
        %v1611 = vshrl.u32 %v1610, 7
        %v1612 = vsub.s32 0, %v1611
        %v1613 = vrot.slane %v1608, %v1612
        %v1615 = vmul.f32 %v1591, %v1613
        %v1616 = vmul.f32 %v1592, %v1613
        %v1617 = vmul.f32 %v1593, %v1613
        %v1618 = vmul.f32 %v1594, %v1613
        %v1619 = vmul.f32 %v1595, %v1613
        %v1620 = vmul.f32 %v1596, %v1613
        %v1621 = vmul.f32 %v1597, %v1613
        %v1622 = vmul.f32 %v1598, %v1613
        %v1623 = vadd.f32 %v956, %v1615
        %v1624 = vadd.f32 %v957, %v1616
        %v1625 = vadd.f32 %v958, %v1617
        %v1626 = vadd.f32 %v959, %v1618
        %v1627 = vadd.f32 %v960, %v1619
        %v1628 = vadd.f32 %v961, %v1620
        %v1629 = vadd.f32 %v962, %v1621
        %v1630 = vadd.f32 %v963, %v1622
        %1631 = vst.msk [vmem:[#allocation2 + $0x10] sm:$0xff] %vm289, %v1599
        %1632 = vst.msk [vmem:[#allocation2 + $0x18] sm:$0xff] %vm289, %v1600
        %1633 = vst.msk [vmem:[#allocation2 + $0x20] sm:$0xff] %vm289, %v1601
        %1634 = vst.msk [vmem:[#allocation2 + $0x28] sm:$0xff] %vm289, %v1602
        %1635 = vst.msk [vmem:[#allocation2 + $0x30] sm:$0xff] %vm289, %v1603
        %1636 = vst.msk [vmem:[#allocation2 + $0x38] sm:$0xff] %vm289, %v1604
        %1637 = vst.msk [vmem:[#allocation2 + $0x40] sm:$0xff] %vm289, %v1605
        %1638 = vst.msk [vmem:[#allocation2 + $0x48] sm:$0xff] %vm289, %v1606
        %v1639 = vld [vmem:[#allocation2 + $0x8] sm:$0xff]
        %v1640 = vld [vmem:[#allocation2 + $0x10] sm:$0xff]
        %v1641 = vld [vmem:[#allocation2 + $0x18] sm:$0xff]
        %v1642 = vld [vmem:[#allocation2 + $0x20] sm:$0xff]
        %v1643 = vld [vmem:[#allocation2 + $0x28] sm:$0xff]
        %v1644 = vld [vmem:[#allocation2 + $0x30] sm:$0xff]
        %v1645 = vld [vmem:[#allocation2 + $0x38] sm:$0xff]
        %v1646 = vld [vmem:[#allocation2 + $0x40] sm:$0xff]
        %s1647 = scalar_lea.vmem [#allocation6], 768
        %v1648 = vld [vmem:[%s1647] sm:$0xff]
        %v1649 = vld [vmem:[%s1647 + $0x8] sm:$0xff]
        %v1650 = vld [vmem:[%s1647 + $0x10] sm:$0xff]
        %v1651 = vld [vmem:[%s1647 + $0x18] sm:$0xff]
        %v1652 = vld [vmem:[%s1647 + $0x20] sm:$0xff]
        %v1653 = vld [vmem:[%s1647 + $0x28] sm:$0xff]
        %v1654 = vld [vmem:[%s1647 + $0x30] sm:$0xff]
        %v1655 = vld [vmem:[%s1647 + $0x38] sm:$0xff]
        %v1656 = vld [vmem:[%s1647 + $0x40] sm:$0xff]
        %v1657 = vld [vmem:[%s1647 + $0x48] sm:$0xff]
        %v1658 = vld [vmem:[%s1647 + $0x50] sm:$0xff]
        %v1659 = vld [vmem:[%s1647 + $0x58] sm:$0xff]
        %v1660 = vld [vmem:[%s1647 + $0x60] sm:$0xff]
        %v1661 = vld [vmem:[%s1647 + $0x68] sm:$0xff]
        %v1662 = vld [vmem:[%s1647 + $0x70] sm:$0xff]
        %v1663 = vld [vmem:[%s1647 + $0x78] sm:$0xff]
        %v1664 = vld [vmem:[#allocation2 + $0xc] sm:$0xff]
        %v1665 = vld [vmem:[#allocation2 + $0x14] sm:$0xff]
        %v1666 = vld [vmem:[#allocation2 + $0x1c] sm:$0xff]
        %v1667 = vld [vmem:[#allocation2 + $0x24] sm:$0xff]
        %v1668 = vld [vmem:[#allocation2 + $0x2c] sm:$0xff]
        %v1669 = vld [vmem:[#allocation2 + $0x34] sm:$0xff]
        %v1670 = vld [vmem:[#allocation2 + $0x3c] sm:$0xff]
        %v1671 = vld [vmem:[#allocation2 + $0x44] sm:$0xff]
        %s1672 = scalar_lea.vmem [#allocation6], 896
        %v1673 = vld [vmem:[%s1672] sm:$0xff]
        %v1674 = vld [vmem:[%s1672 + $0x8] sm:$0xff]
        %v1675 = vld [vmem:[%s1672 + $0x10] sm:$0xff]
        %v1676 = vld [vmem:[%s1672 + $0x18] sm:$0xff]
        %v1677 = vld [vmem:[%s1672 + $0x20] sm:$0xff]
        %v1678 = vld [vmem:[%s1672 + $0x28] sm:$0xff]
        %v1679 = vld [vmem:[%s1672 + $0x30] sm:$0xff]
        %v1680 = vld [vmem:[%s1672 + $0x38] sm:$0xff]
        %v1681 = vld [vmem:[%s1672 + $0x40] sm:$0xff]
        %v1682 = vld [vmem:[%s1672 + $0x48] sm:$0xff]
        %v1683 = vld [vmem:[%s1672 + $0x50] sm:$0xff]
        %v1684 = vld [vmem:[%s1672 + $0x58] sm:$0xff]
        %v1685 = vld [vmem:[%s1672 + $0x60] sm:$0xff]
        %v1686 = vld [vmem:[%s1672 + $0x68] sm:$0xff]
        %v1687 = vld [vmem:[%s1672 + $0x70] sm:$0xff]
        %v1688 = vld [vmem:[%s1672 + $0x78] sm:$0xff]
        %v1690 = vsel %vm289, %v1664, 0
        %v1693 = vsel %vm289, %v1665, 0
        %v1696 = vsel %vm289, %v1666, 0
        %v1699 = vsel %vm289, %v1667, 0
        %v1702 = vsel %vm289, %v1668, 0
        %v1705 = vsel %vm289, %v1669, 0
        %v1708 = vsel %vm289, %v1670, 0
        %v1711 = vsel %vm289, %v1671, 0
        %1713 = vmatprep.subr.mxu0 0.0
        %1714 = vmatpush1.msra.mxu0 0.0
        %1715 = vmatprep.subr.mxu0 0.0
        %1716 = vmatpush1.msra.mxu0 0.0
        %1717 = vmatprep.subr.mxu0 0.0
        %1718 = vmatpush1.msra.mxu0 0.0
        %1719 = vmatprep.subr.mxu0 0.0
        %1720 = vmatpush1.msra.mxu0 0.0
        %1721 = vmatprep.subr.mxu0 0.0
        %1722 = vmatpush1.msra.mxu0 0.0
        %1723 = vmatprep.subr.mxu0 0.0
        %1724 = vmatpush1.msra.mxu0 0.0
        %1725 = vmatprep.subr.mxu0 0.0
        %1726 = vmatpush1.msra.mxu0 0.0
        %1727 = vmatprep.subr.mxu0 0.0
        %1728 = vmatpush1.msra.mxu0 0.0
        %1729 = vmatprep.subr.mxu0 %v1688
        %1730 = vmatpush1.msra.mxu0 %v1687
        %1731 = vmatprep.subr.mxu0 %v1686
        %1732 = vmatpush1.msra.mxu0 %v1685
        %1733 = vmatprep.subr.mxu0 %v1684
        %1734 = vmatpush1.msra.mxu0 %v1683
        %1735 = vmatprep.subr.mxu0 %v1682
        %1736 = vmatpush1.msra.mxu0 %v1681
        %1737 = vmatprep.subr.mxu0 %v1680
        %1738 = vmatpush1.msra.mxu0 %v1679
        %1739 = vmatprep.subr.mxu0 %v1678
        %1740 = vmatpush1.msra.mxu0 %v1677
        %1741 = vmatprep.subr.mxu0 %v1676
        %1742 = vmatpush1.msra.mxu0 %v1675
        %1743 = vmatprep.subr.mxu0 %v1674
        %1744 = vmatpush1.msra.mxu0 %v1673
        %1745 = vmatprep.subr.mxu0 0.0
        %1746 = vmatpush2.msra.mxu0 0.0
        %1747 = vmatprep.subr.mxu0 0.0
        %1748 = vmatpush2.msra.mxu0 0.0
        %1749 = vmatprep.subr.mxu0 0.0
        %1750 = vmatpush2.msra.mxu0 0.0
        %1751 = vmatprep.subr.mxu0 0.0
        %1752 = vmatpush2.msra.mxu0 0.0
        %1753 = vmatprep.subr.mxu0 0.0
        %1754 = vmatpush2.msra.mxu0 0.0
        %1755 = vmatprep.subr.mxu0 0.0
        %1756 = vmatpush2.msra.mxu0 0.0
        %1757 = vmatprep.subr.mxu0 0.0
        %1758 = vmatpush2.msra.mxu0 0.0
        %1759 = vmatprep.subr.mxu0 0.0
        %1760 = vmatpush2.msra.mxu0 0.0
        %1761 = vmatprep.subr.mxu0 0.0
        %1762 = vmatpush2.msra.mxu0 0.0
        %1763 = vmatprep.subr.mxu0 0.0
        %1764 = vmatpush2.msra.mxu0 0.0
        %1765 = vmatprep.subr.mxu0 0.0
        %1766 = vmatpush2.msra.mxu0 0.0
        %1767 = vmatprep.subr.mxu0 0.0
        %1768 = vmatpush2.msra.mxu0 0.0
        %1769 = vmatprep.subr.mxu0 0.0
        %1770 = vmatpush2.msra.mxu0 0.0
        %1771 = vmatprep.subr.mxu0 0.0
        %1772 = vmatpush2.msra.mxu0 0.0
        %1773 = vmatprep.subr.mxu0 0.0
        %1774 = vmatpush2.msra.mxu0 0.0
        %1775 = vmatprep.subr.mxu0 0.0
        %1776 = vmatpush2.msra.mxu0 0.0
        %1777 = vmatprep.mubr.f32.mxu0 0.0
        %1778 = vmatmul.mubr.f32.gmra.mxu0 %v1690
        %v1779 = vpop.f32.mrf.mxu0
        %v1780 = vadd.f32 0.0, %v1779
        %v1781 = vpop.f32.mrf.mxu0
        %v1782 = vadd.f32 0.0, %v1781
        %1783 = vmatprep.mubr.f32.mxu0 0.0
        %1784 = vmatmul.mubr.f32.gmra.mxu0 %v1693
        %v1785 = vpop.f32.mrf.mxu0
        %v1786 = vadd.f32 0.0, %v1785
        %v1787 = vpop.f32.mrf.mxu0
        %v1788 = vadd.f32 0.0, %v1787
        %1789 = vmatprep.mubr.f32.mxu0 0.0
        %1790 = vmatmul.mubr.f32.gmra.mxu0 %v1696
        %v1791 = vpop.f32.mrf.mxu0
        %v1792 = vadd.f32 0.0, %v1791
        %v1793 = vpop.f32.mrf.mxu0
        %v1794 = vadd.f32 0.0, %v1793
        %1795 = vmatprep.mubr.f32.mxu0 0.0
        %1796 = vmatmul.mubr.f32.gmra.mxu0 %v1699
        %v1797 = vpop.f32.mrf.mxu0
        %v1798 = vadd.f32 0.0, %v1797
        %v1799 = vpop.f32.mrf.mxu0
        %v1800 = vadd.f32 0.0, %v1799
        %1801 = vmatprep.mubr.f32.mxu0 0.0
        %1802 = vmatmul.mubr.f32.gmra.mxu0 %v1702
        %v1803 = vpop.f32.mrf.mxu0
        %v1804 = vadd.f32 0.0, %v1803
        %v1805 = vpop.f32.mrf.mxu0
        %v1806 = vadd.f32 0.0, %v1805
        %1807 = vmatprep.mubr.f32.mxu0 0.0
        %1808 = vmatmul.mubr.f32.gmra.mxu0 %v1705
        %v1809 = vpop.f32.mrf.mxu0
        %v1810 = vadd.f32 0.0, %v1809
        %v1811 = vpop.f32.mrf.mxu0
        %v1812 = vadd.f32 0.0, %v1811
        %1813 = vmatprep.mubr.f32.mxu0 0.0
        %1814 = vmatmul.mubr.f32.gmra.mxu0 %v1708
        %v1815 = vpop.f32.mrf.mxu0
        %v1816 = vadd.f32 0.0, %v1815
        %v1817 = vpop.f32.mrf.mxu0
        %v1818 = vadd.f32 0.0, %v1817
        %1819 = vmatprep.mubr.f32.mxu0 0.0
        %1820 = vmatmul.mubr.f32.gmra.mxu0 %v1711
        %v1821 = vpop.f32.mrf.mxu0
        %v1822 = vadd.f32 0.0, %v1821
        %v1823 = vpop.f32.mrf.mxu0
        %v1824 = vadd.f32 0.0, %v1823
        %1825 = vdwg.mxu0
        %v1827 = vsel %vm289, %v1639, 0
        %v1830 = vsel %vm289, %v1640, 0
        %v1833 = vsel %vm289, %v1641, 0
        %v1836 = vsel %vm289, %v1642, 0
        %v1839 = vsel %vm289, %v1643, 0
        %v1842 = vsel %vm289, %v1644, 0
        %v1845 = vsel %vm289, %v1645, 0
        %v1848 = vsel %vm289, %v1646, 0
        %1850 = vmatprep.subr.mxu0 0.0
        %1851 = vmatpush1.msra.mxu0 0.0
        %1852 = vmatprep.subr.mxu0 0.0
        %1853 = vmatpush1.msra.mxu0 0.0
        %1854 = vmatprep.subr.mxu0 0.0
        %1855 = vmatpush1.msra.mxu0 0.0
        %1856 = vmatprep.subr.mxu0 0.0
        %1857 = vmatpush1.msra.mxu0 0.0
        %1858 = vmatprep.subr.mxu0 0.0
        %1859 = vmatpush1.msra.mxu0 0.0
        %1860 = vmatprep.subr.mxu0 0.0
        %1861 = vmatpush1.msra.mxu0 0.0
        %1862 = vmatprep.subr.mxu0 0.0
        %1863 = vmatpush1.msra.mxu0 0.0
        %1864 = vmatprep.subr.mxu0 0.0
        %1865 = vmatpush1.msra.mxu0 0.0
        %1866 = vmatprep.subr.mxu0 %v1663
        %1867 = vmatpush1.msra.mxu0 %v1662
        %1868 = vmatprep.subr.mxu0 %v1661
        %1869 = vmatpush1.msra.mxu0 %v1660
        %1870 = vmatprep.subr.mxu0 %v1659
        %1871 = vmatpush1.msra.mxu0 %v1658
        %1872 = vmatprep.subr.mxu0 %v1657
        %1873 = vmatpush1.msra.mxu0 %v1656
        %1874 = vmatprep.subr.mxu0 %v1655
        %1875 = vmatpush1.msra.mxu0 %v1654
        %1876 = vmatprep.subr.mxu0 %v1653
        %1877 = vmatpush1.msra.mxu0 %v1652
        %1878 = vmatprep.subr.mxu0 %v1651
        %1879 = vmatpush1.msra.mxu0 %v1650
        %1880 = vmatprep.subr.mxu0 %v1649
        %1881 = vmatpush1.msra.mxu0 %v1648
        %1882 = vmatprep.subr.mxu0 0.0
        %1883 = vmatpush2.msra.mxu0 0.0
        %1884 = vmatprep.subr.mxu0 0.0
        %1885 = vmatpush2.msra.mxu0 0.0
        %1886 = vmatprep.subr.mxu0 0.0
        %1887 = vmatpush2.msra.mxu0 0.0
        %1888 = vmatprep.subr.mxu0 0.0
        %1889 = vmatpush2.msra.mxu0 0.0
        %1890 = vmatprep.subr.mxu0 0.0
        %1891 = vmatpush2.msra.mxu0 0.0
        %1892 = vmatprep.subr.mxu0 0.0
        %1893 = vmatpush2.msra.mxu0 0.0
        %1894 = vmatprep.subr.mxu0 0.0
        %1895 = vmatpush2.msra.mxu0 0.0
        %1896 = vmatprep.subr.mxu0 0.0
        %1897 = vmatpush2.msra.mxu0 0.0
        %1898 = vmatprep.subr.mxu0 0.0
        %1899 = vmatpush2.msra.mxu0 0.0
        %1900 = vmatprep.subr.mxu0 0.0
        %1901 = vmatpush2.msra.mxu0 0.0
        %1902 = vmatprep.subr.mxu0 0.0
        %1903 = vmatpush2.msra.mxu0 0.0
        %1904 = vmatprep.subr.mxu0 0.0
        %1905 = vmatpush2.msra.mxu0 0.0
        %1906 = vmatprep.subr.mxu0 0.0
        %1907 = vmatpush2.msra.mxu0 0.0
        %1908 = vmatprep.subr.mxu0 0.0
        %1909 = vmatpush2.msra.mxu0 0.0
        %1910 = vmatprep.subr.mxu0 0.0
        %1911 = vmatpush2.msra.mxu0 0.0
        %1912 = vmatprep.subr.mxu0 0.0
        %1913 = vmatpush2.msra.mxu0 0.0
        %1914 = vmatprep.mubr.f32.mxu0 0.0
        %1915 = vmatmul.mubr.f32.gmra.mxu0 %v1827
        %v1916 = vpop.f32.mrf.mxu0
        %v1917 = vadd.f32 %v1780, %v1916
        %v1918 = vpop.f32.mrf.mxu0
        %v1919 = vadd.f32 %v1782, %v1918
        %1920 = vmatprep.mubr.f32.mxu0 0.0
        %1921 = vmatmul.mubr.f32.gmra.mxu0 %v1830
        %v1922 = vpop.f32.mrf.mxu0
        %v1923 = vadd.f32 %v1786, %v1922
        %v1924 = vpop.f32.mrf.mxu0
        %v1925 = vadd.f32 %v1788, %v1924
        %1926 = vmatprep.mubr.f32.mxu0 0.0
        %1927 = vmatmul.mubr.f32.gmra.mxu0 %v1833
        %v1928 = vpop.f32.mrf.mxu0
        %v1929 = vadd.f32 %v1792, %v1928
        %v1930 = vpop.f32.mrf.mxu0
        %v1931 = vadd.f32 %v1794, %v1930
        %1932 = vmatprep.mubr.f32.mxu0 0.0
        %1933 = vmatmul.mubr.f32.gmra.mxu0 %v1836
        %v1934 = vpop.f32.mrf.mxu0
        %v1935 = vadd.f32 %v1798, %v1934
        %v1936 = vpop.f32.mrf.mxu0
        %v1937 = vadd.f32 %v1800, %v1936
        %1938 = vmatprep.mubr.f32.mxu0 0.0
        %1939 = vmatmul.mubr.f32.gmra.mxu0 %v1839
        %v1940 = vpop.f32.mrf.mxu0
        %v1941 = vadd.f32 %v1804, %v1940
        %v1942 = vpop.f32.mrf.mxu0
        %v1943 = vadd.f32 %v1806, %v1942
        %1944 = vmatprep.mubr.f32.mxu0 0.0
        %1945 = vmatmul.mubr.f32.gmra.mxu0 %v1842
        %v1946 = vpop.f32.mrf.mxu0
        %v1947 = vadd.f32 %v1810, %v1946
        %v1948 = vpop.f32.mrf.mxu0
        %v1949 = vadd.f32 %v1812, %v1948
        %1950 = vmatprep.mubr.f32.mxu0 0.0
        %1951 = vmatmul.mubr.f32.gmra.mxu0 %v1845
        %v1952 = vpop.f32.mrf.mxu0
        %v1953 = vadd.f32 %v1816, %v1952
        %v1954 = vpop.f32.mrf.mxu0
        %v1955 = vadd.f32 %v1818, %v1954
        %1956 = vmatprep.mubr.f32.mxu0 0.0
        %1957 = vmatmul.mubr.f32.gmra.mxu0 %v1848
        %v1958 = vpop.f32.mrf.mxu0
        %v1959 = vadd.f32 %v1822, %v1958
        %v1960 = vpop.f32.mrf.mxu0
        %v1961 = vadd.f32 %v1824, %v1960
        %1962 = vdwg.mxu0
        %v1963 = vld [vmem:[#allocation2 + $0x10] sm:$0xff]
        %v1964 = vld [vmem:[#allocation2 + $0x18] sm:$0xff]
        %v1965 = vld [vmem:[#allocation2 + $0x20] sm:$0xff]
        %v1966 = vld [vmem:[#allocation2 + $0x28] sm:$0xff]
        %v1967 = vld [vmem:[#allocation2 + $0x30] sm:$0xff]
        %v1968 = vld [vmem:[#allocation2 + $0x38] sm:$0xff]
        %v1969 = vld [vmem:[#allocation2 + $0x40] sm:$0xff]
        %v1970 = vld [vmem:[#allocation2 + $0x48] sm:$0xff]
        %s1971 = scalar_lea.vmem [#allocation6], 1024
        %v1972 = vld [vmem:[%s1971] sm:$0xff]
        %v1973 = vld [vmem:[%s1971 + $0x8] sm:$0xff]
        %v1974 = vld [vmem:[%s1971 + $0x10] sm:$0xff]
        %v1975 = vld [vmem:[%s1971 + $0x18] sm:$0xff]
        %v1976 = vld [vmem:[%s1971 + $0x20] sm:$0xff]
        %v1977 = vld [vmem:[%s1971 + $0x28] sm:$0xff]
        %v1978 = vld [vmem:[%s1971 + $0x30] sm:$0xff]
        %v1979 = vld [vmem:[%s1971 + $0x38] sm:$0xff]
        %v1980 = vld [vmem:[%s1971 + $0x40] sm:$0xff]
        %v1981 = vld [vmem:[%s1971 + $0x48] sm:$0xff]
        %v1982 = vld [vmem:[%s1971 + $0x50] sm:$0xff]
        %v1983 = vld [vmem:[%s1971 + $0x58] sm:$0xff]
        %v1984 = vld [vmem:[%s1971 + $0x60] sm:$0xff]
        %v1985 = vld [vmem:[%s1971 + $0x68] sm:$0xff]
        %v1986 = vld [vmem:[%s1971 + $0x70] sm:$0xff]
        %v1987 = vld [vmem:[%s1971 + $0x78] sm:$0xff]
        %v1989 = vsel %vm289, %v1963, 0
        %v1992 = vsel %vm289, %v1964, 0
        %v1995 = vsel %vm289, %v1965, 0
        %v1998 = vsel %vm289, %v1966, 0
        %v2001 = vsel %vm289, %v1967, 0
        %v2004 = vsel %vm289, %v1968, 0
        %v2007 = vsel %vm289, %v1969, 0
        %v2010 = vsel %vm289, %v1970, 0
        %2012 = vmatprep.subr.mxu0 0.0
        %2013 = vmatpush1.msra.mxu0 0.0
        %2014 = vmatprep.subr.mxu0 0.0
        %2015 = vmatpush1.msra.mxu0 0.0
        %2016 = vmatprep.subr.mxu0 0.0
        %2017 = vmatpush1.msra.mxu0 0.0
        %2018 = vmatprep.subr.mxu0 0.0
        %2019 = vmatpush1.msra.mxu0 0.0
        %2020 = vmatprep.subr.mxu0 0.0
        %2021 = vmatpush1.msra.mxu0 0.0
        %2022 = vmatprep.subr.mxu0 0.0
        %2023 = vmatpush1.msra.mxu0 0.0
        %2024 = vmatprep.subr.mxu0 0.0
        %2025 = vmatpush1.msra.mxu0 0.0
        %2026 = vmatprep.subr.mxu0 0.0
        %2027 = vmatpush1.msra.mxu0 0.0
        %2028 = vmatprep.subr.mxu0 %v1987
        %2029 = vmatpush1.msra.mxu0 %v1986
        %2030 = vmatprep.subr.mxu0 %v1985
        %2031 = vmatpush1.msra.mxu0 %v1984
        %2032 = vmatprep.subr.mxu0 %v1983
        %2033 = vmatpush1.msra.mxu0 %v1982
        %2034 = vmatprep.subr.mxu0 %v1981
        %2035 = vmatpush1.msra.mxu0 %v1980
        %2036 = vmatprep.subr.mxu0 %v1979
        %2037 = vmatpush1.msra.mxu0 %v1978
        %2038 = vmatprep.subr.mxu0 %v1977
        %2039 = vmatpush1.msra.mxu0 %v1976
        %2040 = vmatprep.subr.mxu0 %v1975
        %2041 = vmatpush1.msra.mxu0 %v1974
        %2042 = vmatprep.subr.mxu0 %v1973
        %2043 = vmatpush1.msra.mxu0 %v1972
        %2044 = vmatprep.subr.mxu0 0.0
        %2045 = vmatpush2.msra.mxu0 0.0
        %2046 = vmatprep.subr.mxu0 0.0
        %2047 = vmatpush2.msra.mxu0 0.0
        %2048 = vmatprep.subr.mxu0 0.0
        %2049 = vmatpush2.msra.mxu0 0.0
        %2050 = vmatprep.subr.mxu0 0.0
        %2051 = vmatpush2.msra.mxu0 0.0
        %2052 = vmatprep.subr.mxu0 0.0
        %2053 = vmatpush2.msra.mxu0 0.0
        %2054 = vmatprep.subr.mxu0 0.0
        %2055 = vmatpush2.msra.mxu0 0.0
        %2056 = vmatprep.subr.mxu0 0.0
        %2057 = vmatpush2.msra.mxu0 0.0
        %2058 = vmatprep.subr.mxu0 0.0
        %2059 = vmatpush2.msra.mxu0 0.0
        %2060 = vmatprep.subr.mxu0 0.0
        %2061 = vmatpush2.msra.mxu0 0.0
        %2062 = vmatprep.subr.mxu0 0.0
        %2063 = vmatpush2.msra.mxu0 0.0
        %2064 = vmatprep.subr.mxu0 0.0
        %2065 = vmatpush2.msra.mxu0 0.0
        %2066 = vmatprep.subr.mxu0 0.0
        %2067 = vmatpush2.msra.mxu0 0.0
        %2068 = vmatprep.subr.mxu0 0.0
        %2069 = vmatpush2.msra.mxu0 0.0
        %2070 = vmatprep.subr.mxu0 0.0
        %2071 = vmatpush2.msra.mxu0 0.0
        %2072 = vmatprep.subr.mxu0 0.0
        %2073 = vmatpush2.msra.mxu0 0.0
        %2074 = vmatprep.subr.mxu0 0.0
        %2075 = vmatpush2.msra.mxu0 0.0
        %2076 = vmatprep.mubr.f32.mxu0 0.0
        %2077 = vmatmul.mubr.f32.gmra.mxu0 %v1989
        %v2078 = vpop.f32.mrf.mxu0
        %v2079 = vadd.f32 0.0, %v2078
        %v2080 = vpop.f32.mrf.mxu0
        %v2081 = vadd.f32 0.0, %v2080
        %2082 = vmatprep.mubr.f32.mxu0 0.0
        %2083 = vmatmul.mubr.f32.gmra.mxu0 %v1992
        %v2084 = vpop.f32.mrf.mxu0
        %v2085 = vadd.f32 0.0, %v2084
        %v2086 = vpop.f32.mrf.mxu0
        %v2087 = vadd.f32 0.0, %v2086
        %2088 = vmatprep.mubr.f32.mxu0 0.0
        %2089 = vmatmul.mubr.f32.gmra.mxu0 %v1995
        %v2090 = vpop.f32.mrf.mxu0
        %v2091 = vadd.f32 0.0, %v2090
        %v2092 = vpop.f32.mrf.mxu0
        %v2093 = vadd.f32 0.0, %v2092
        %2094 = vmatprep.mubr.f32.mxu0 0.0
        %2095 = vmatmul.mubr.f32.gmra.mxu0 %v1998
        %v2096 = vpop.f32.mrf.mxu0
        %v2097 = vadd.f32 0.0, %v2096
        %v2098 = vpop.f32.mrf.mxu0
        %v2099 = vadd.f32 0.0, %v2098
        %2100 = vmatprep.mubr.f32.mxu0 0.0
        %2101 = vmatmul.mubr.f32.gmra.mxu0 %v2001
        %v2102 = vpop.f32.mrf.mxu0
        %v2103 = vadd.f32 0.0, %v2102
        %v2104 = vpop.f32.mrf.mxu0
        %v2105 = vadd.f32 0.0, %v2104
        %2106 = vmatprep.mubr.f32.mxu0 0.0
        %2107 = vmatmul.mubr.f32.gmra.mxu0 %v2004
        %v2108 = vpop.f32.mrf.mxu0
        %v2109 = vadd.f32 0.0, %v2108
        %v2110 = vpop.f32.mrf.mxu0
        %v2111 = vadd.f32 0.0, %v2110
        %2112 = vmatprep.mubr.f32.mxu0 0.0
        %2113 = vmatmul.mubr.f32.gmra.mxu0 %v2007
        %v2114 = vpop.f32.mrf.mxu0
        %v2115 = vadd.f32 0.0, %v2114
        %v2116 = vpop.f32.mrf.mxu0
        %v2117 = vadd.f32 0.0, %v2116
        %2118 = vmatprep.mubr.f32.mxu0 0.0
        %2119 = vmatmul.mubr.f32.gmra.mxu0 %v2010
        %v2120 = vpop.f32.mrf.mxu0
        %v2121 = vadd.f32 0.0, %v2120
        %v2122 = vpop.f32.mrf.mxu0
        %v2123 = vadd.f32 0.0, %v2122
        %2124 = vdwg.mxu0
        %v2125 = vadd.f32 %v1917, %v2079
        %v2126 = vadd.f32 %v1919, %v2081
        %v2127 = vadd.f32 %v1923, %v2085
        %v2128 = vadd.f32 %v1925, %v2087
        %v2129 = vadd.f32 %v1929, %v2091
        %v2130 = vadd.f32 %v1931, %v2093
        %v2131 = vadd.f32 %v1935, %v2097
        %v2132 = vadd.f32 %v1937, %v2099
        %v2133 = vadd.f32 %v1941, %v2103
        %v2134 = vadd.f32 %v1943, %v2105
        %v2135 = vadd.f32 %v1947, %v2109
        %v2136 = vadd.f32 %v1949, %v2111
        %v2137 = vadd.f32 %v1953, %v2115
        %v2138 = vadd.f32 %v1955, %v2117
        %v2139 = vadd.f32 %v1959, %v2121
        %v2140 = vadd.f32 %v1961, %v2123
        %s2141 = scalar_lea.vmem %s2, 4
        %v2142 = vld [vmem:[%s2141] sm:$0x3]
        %v2144 = vlaneseq
        %v2145 = vshrl.u32 %v2144, 7
        %v2146 = vsub.s32 0, %v2145
        %v2147 = vrot.slane %v2142, %v2146
        %v2148 = vlaneseq
        %v2149 = vshrl.u32 %v2148, 7
        %v2150 = vsub.s32 1, %v2149
        %v2151 = vrot.slane %v2142, %v2150
        %v2154 = vadd.f32 %v2125, %v2147
        %v2155 = vadd.f32 %v2126, %v2151
        %v2156 = vadd.f32 %v2127, %v2147
        %v2157 = vadd.f32 %v2128, %v2151
        %v2158 = vadd.f32 %v2129, %v2147
        %v2159 = vadd.f32 %v2130, %v2151
        %v2160 = vadd.f32 %v2131, %v2147
        %v2161 = vadd.f32 %v2132, %v2151
        %v2162 = vadd.f32 %v2133, %v2147
        %v2163 = vadd.f32 %v2134, %v2151
        %v2164 = vadd.f32 %v2135, %v2147
        %v2165 = vadd.f32 %v2136, %v2151
        %v2166 = vadd.f32 %v2137, %v2147
        %v2167 = vadd.f32 %v2138, %v2151
        %v2168 = vadd.f32 %v2139, %v2147
        %v2169 = vadd.f32 %v2140, %v2151
        %v2170 = vtanh.pop %v2154
        %v2171 = vtanh.pop %v2156
        %v2172 = vtanh.pop %v2158
        %v2173 = vtanh.pop %v2160
        %v2174 = vtanh.pop %v2162
        %v2175 = vtanh.pop %v2164
        %v2176 = vtanh.pop %v2166
        %v2177 = vtanh.pop %v2168
        %v2178 = vxor.u32 %v2154, 2147483648
        %v2179 = vxor.u32 %v2156, 2147483648
        %v2180 = vxor.u32 %v2158, 2147483648
        %v2181 = vxor.u32 %v2160, 2147483648
        %v2182 = vxor.u32 %v2162, 2147483648
        %v2183 = vxor.u32 %v2164, 2147483648
        %v2184 = vxor.u32 %v2166, 2147483648
        %v2185 = vxor.u32 %v2168, 2147483648
        %v2186 = vmul.f32 %v2178, 1.442695
        %v2187 = vpow.pop %v2186
        %v2188 = vmul.f32 %v2179, 1.442695
        %v2189 = vpow.pop %v2188
        %v2190 = vmul.f32 %v2180, 1.442695
        %v2191 = vpow.pop %v2190
        %v2192 = vmul.f32 %v2181, 1.442695
        %v2193 = vpow.pop %v2192
        %v2194 = vmul.f32 %v2182, 1.442695
        %v2195 = vpow.pop %v2194
        %v2196 = vmul.f32 %v2183, 1.442695
        %v2197 = vpow.pop %v2196
        %v2198 = vmul.f32 %v2184, 1.442695
        %v2199 = vpow.pop %v2198
        %v2200 = vmul.f32 %v2185, 1.442695
        %v2201 = vpow.pop %v2200
        %v2202 = vadd.f32 %v2187, 1.0
        %v2203 = vadd.f32 %v2189, 1.0
        %v2204 = vadd.f32 %v2191, 1.0
        %v2205 = vadd.f32 %v2193, 1.0
        %v2206 = vadd.f32 %v2195, 1.0
        %v2207 = vadd.f32 %v2197, 1.0
        %v2208 = vadd.f32 %v2199, 1.0
        %v2209 = vadd.f32 %v2201, 1.0
        %v2210 = vrcp.pop %v2202
        %v2211 = vmul.f32 1.0, %v2210
        %v2212 = vrcp.pop %v2203
        %v2213 = vmul.f32 1.0, %v2212
        %v2214 = vrcp.pop %v2204
        %v2215 = vmul.f32 1.0, %v2214
        %v2216 = vrcp.pop %v2205
        %v2217 = vmul.f32 1.0, %v2216
        %v2218 = vrcp.pop %v2206
        %v2219 = vmul.f32 1.0, %v2218
        %v2220 = vrcp.pop %v2207
        %v2221 = vmul.f32 1.0, %v2220
        %v2222 = vrcp.pop %v2208
        %v2223 = vmul.f32 1.0, %v2222
        %v2224 = vrcp.pop %v2209
        %v2225 = vmul.f32 1.0, %v2224
        %2234 = vrot.lane.b32.xlu0 %v2211, 64
        %v2235 = vpop.permute.xlu0 %2234
        %2236 = vrot.lane.b32.xlu0 %v2213, 64
        %v2237 = vpop.permute.xlu0 %2236
        %2238 = vrot.lane.b32.xlu0 %v2215, 64
        %v2239 = vpop.permute.xlu0 %2238
        %2240 = vrot.lane.b32.xlu0 %v2217, 64
        %v2241 = vpop.permute.xlu0 %2240
        %2242 = vrot.lane.b32.xlu0 %v2219, 64
        %v2243 = vpop.permute.xlu0 %2242
        %2244 = vrot.lane.b32.xlu0 %v2221, 64
        %v2245 = vpop.permute.xlu0 %2244
        %2246 = vrot.lane.b32.xlu0 %v2223, 64
        %v2247 = vpop.permute.xlu0 %2246
        %2248 = vrot.lane.b32.xlu0 %v2225, 64
        %v2249 = vpop.permute.xlu0 %2248
        %v2258 = vmul.f32 %v2170, %v2235
        %v2259 = vmul.f32 %v2171, %v2237
        %v2260 = vmul.f32 %v2172, %v2239
        %v2261 = vmul.f32 %v2173, %v2241
        %v2262 = vmul.f32 %v2174, %v2243
        %v2263 = vmul.f32 %v2175, %v2245
        %v2264 = vmul.f32 %v2176, %v2247
        %v2265 = vmul.f32 %v2177, %v2249
        %v2266 = vadd.f32 %v2258, %v2155
        %v2267 = vadd.f32 %v2259, %v2157
        %v2268 = vadd.f32 %v2260, %v2159
        %v2269 = vadd.f32 %v2261, %v2161
        %v2270 = vadd.f32 %v2262, %v2163
        %v2271 = vadd.f32 %v2263, %v2165
        %v2272 = vadd.f32 %v2264, %v2167
        %v2273 = vadd.f32 %v2265, %v2169
        %s2274 = scalar_lea.vmem %s3, 2
        %v2275 = vld [vmem:[%s2274] sm:$0x1]
        %v2277 = vlaneseq
        %v2278 = vshrl.u32 %v2277, 7
        %v2279 = vsub.s32 0, %v2278
        %v2280 = vrot.slane %v2275, %v2279
        %v2282 = vmul.f32 %v2258, %v2280
        %v2283 = vmul.f32 %v2259, %v2280
        %v2284 = vmul.f32 %v2260, %v2280
        %v2285 = vmul.f32 %v2261, %v2280
        %v2286 = vmul.f32 %v2262, %v2280
        %v2287 = vmul.f32 %v2263, %v2280
        %v2288 = vmul.f32 %v2264, %v2280
        %v2289 = vmul.f32 %v2265, %v2280
        %v2290 = vadd.f32 %v1623, %v2282
        %v2291 = vadd.f32 %v1624, %v2283
        %v2292 = vadd.f32 %v1625, %v2284
        %v2293 = vadd.f32 %v1626, %v2285
        %v2294 = vadd.f32 %v1627, %v2286
        %v2295 = vadd.f32 %v1628, %v2287
        %v2296 = vadd.f32 %v1629, %v2288
        %v2297 = vadd.f32 %v1630, %v2289
        %2298 = vst.msk [vmem:[#allocation2 + $0x10] sm:$0xff] %vm289, %v2266
        %2299 = vst.msk [vmem:[#allocation2 + $0x18] sm:$0xff] %vm289, %v2267
        %2300 = vst.msk [vmem:[#allocation2 + $0x20] sm:$0xff] %vm289, %v2268
        %2301 = vst.msk [vmem:[#allocation2 + $0x28] sm:$0xff] %vm289, %v2269
        %2302 = vst.msk [vmem:[#allocation2 + $0x30] sm:$0xff] %vm289, %v2270
        %2303 = vst.msk [vmem:[#allocation2 + $0x38] sm:$0xff] %vm289, %v2271
        %2304 = vst.msk [vmem:[#allocation2 + $0x40] sm:$0xff] %vm289, %v2272
        %2305 = vst.msk [vmem:[#allocation2 + $0x48] sm:$0xff] %vm289, %v2273
        %v2306 = vld [vmem:[#allocation2] sm:$0xff]
        %v2307 = vld [vmem:[#allocation2 + $0x8] sm:$0xff]
        %v2308 = vld [vmem:[#allocation2 + $0x10] sm:$0xff]
        %v2309 = vld [vmem:[#allocation2 + $0x18] sm:$0xff]
        %v2310 = vld [vmem:[#allocation2 + $0x20] sm:$0xff]
        %v2311 = vld [vmem:[#allocation2 + $0x28] sm:$0xff]
        %v2312 = vld [vmem:[#allocation2 + $0x30] sm:$0xff]
        %v2313 = vld [vmem:[#allocation2 + $0x38] sm:$0xff]
        %s2314 = scalar_lea.vmem [#allocation6], 1152
        %v2315 = vld [vmem:[%s2314] sm:$0xff]
        %v2316 = vld [vmem:[%s2314 + $0x8] sm:$0xff]
        %v2317 = vld [vmem:[%s2314 + $0x10] sm:$0xff]
        %v2318 = vld [vmem:[%s2314 + $0x18] sm:$0xff]
        %v2319 = vld [vmem:[%s2314 + $0x20] sm:$0xff]
        %v2320 = vld [vmem:[%s2314 + $0x28] sm:$0xff]
        %v2321 = vld [vmem:[%s2314 + $0x30] sm:$0xff]
        %v2322 = vld [vmem:[%s2314 + $0x38] sm:$0xff]
        %v2323 = vld [vmem:[%s2314 + $0x40] sm:$0xff]
        %v2324 = vld [vmem:[%s2314 + $0x48] sm:$0xff]
        %v2325 = vld [vmem:[%s2314 + $0x50] sm:$0xff]
        %v2326 = vld [vmem:[%s2314 + $0x58] sm:$0xff]
        %v2327 = vld [vmem:[%s2314 + $0x60] sm:$0xff]
        %v2328 = vld [vmem:[%s2314 + $0x68] sm:$0xff]
        %v2329 = vld [vmem:[%s2314 + $0x70] sm:$0xff]
        %v2330 = vld [vmem:[%s2314 + $0x78] sm:$0xff]
        %v2331 = vld [vmem:[#allocation2 + $0x40] sm:$0xff]
        %s2332 = scalar_lea.vmem [#allocation6], 1280
        %v2333 = vld [vmem:[%s2332] sm:$0xff]
        %v2334 = vld [vmem:[%s2332 + $0x8] sm:$0xff]
        %v2335 = vld [vmem:[%s2332 + $0x10] sm:$0xff]
        %v2336 = vld [vmem:[%s2332 + $0x18] sm:$0xff]
        %v2337 = vld [vmem:[%s2332 + $0x20] sm:$0xff]
        %v2338 = vld [vmem:[%s2332 + $0x28] sm:$0xff]
        %v2339 = vld [vmem:[%s2332 + $0x30] sm:$0xff]
        %v2340 = vld [vmem:[%s2332 + $0x38] sm:$0xff]
        %v2341 = vld [vmem:[%s2332 + $0x40] sm:$0xff]
        %v2342 = vld [vmem:[%s2332 + $0x48] sm:$0xff]
        %v2343 = vld [vmem:[%s2332 + $0x50] sm:$0xff]
        %v2344 = vld [vmem:[%s2332 + $0x58] sm:$0xff]
        %v2345 = vld [vmem:[%s2332 + $0x60] sm:$0xff]
        %v2346 = vld [vmem:[%s2332 + $0x68] sm:$0xff]
        %v2347 = vld [vmem:[%s2332 + $0x70] sm:$0xff]
        %v2348 = vld [vmem:[%s2332 + $0x78] sm:$0xff]
        %v2350 = vsel %vm289, %v2307, 0
        %v2353 = vsel %vm289, %v2308, 0
        %v2356 = vsel %vm289, %v2309, 0
        %v2359 = vsel %vm289, %v2310, 0
        %v2362 = vsel %vm289, %v2311, 0
        %v2365 = vsel %vm289, %v2312, 0
        %v2368 = vsel %vm289, %v2313, 0
        %v2371 = vsel %vm289, %v2331, 0
        %2373 = vmatprep.subr.mxu0 0.0
        %2374 = vmatpush1.msra.mxu0 0.0
        %2375 = vmatprep.subr.mxu0 0.0
        %2376 = vmatpush1.msra.mxu0 0.0
        %2377 = vmatprep.subr.mxu0 0.0
        %2378 = vmatpush1.msra.mxu0 0.0
        %2379 = vmatprep.subr.mxu0 0.0
        %2380 = vmatpush1.msra.mxu0 0.0
        %2381 = vmatprep.subr.mxu0 0.0
        %2382 = vmatpush1.msra.mxu0 0.0
        %2383 = vmatprep.subr.mxu0 0.0
        %2384 = vmatpush1.msra.mxu0 0.0
        %2385 = vmatprep.subr.mxu0 0.0
        %2386 = vmatpush1.msra.mxu0 0.0
        %2387 = vmatprep.subr.mxu0 0.0
        %2388 = vmatpush1.msra.mxu0 0.0
        %2389 = vmatprep.subr.mxu0 %v2348
        %2390 = vmatpush1.msra.mxu0 %v2347
        %2391 = vmatprep.subr.mxu0 %v2346
        %2392 = vmatpush1.msra.mxu0 %v2345
        %2393 = vmatprep.subr.mxu0 %v2344
        %2394 = vmatpush1.msra.mxu0 %v2343
        %2395 = vmatprep.subr.mxu0 %v2342
        %2396 = vmatpush1.msra.mxu0 %v2341
        %2397 = vmatprep.subr.mxu0 %v2340
        %2398 = vmatpush1.msra.mxu0 %v2339
        %2399 = vmatprep.subr.mxu0 %v2338
        %2400 = vmatpush1.msra.mxu0 %v2337
        %2401 = vmatprep.subr.mxu0 %v2336
        %2402 = vmatpush1.msra.mxu0 %v2335
        %2403 = vmatprep.subr.mxu0 %v2334
        %2404 = vmatpush1.msra.mxu0 %v2333
        %2405 = vmatprep.subr.mxu0 0.0
        %2406 = vmatpush2.msra.mxu0 0.0
        %2407 = vmatprep.subr.mxu0 0.0
        %2408 = vmatpush2.msra.mxu0 0.0
        %2409 = vmatprep.subr.mxu0 0.0
        %2410 = vmatpush2.msra.mxu0 0.0
        %2411 = vmatprep.subr.mxu0 0.0
        %2412 = vmatpush2.msra.mxu0 0.0
        %2413 = vmatprep.subr.mxu0 0.0
        %2414 = vmatpush2.msra.mxu0 0.0
        %2415 = vmatprep.subr.mxu0 0.0
        %2416 = vmatpush2.msra.mxu0 0.0
        %2417 = vmatprep.subr.mxu0 0.0
        %2418 = vmatpush2.msra.mxu0 0.0
        %2419 = vmatprep.subr.mxu0 0.0
        %2420 = vmatpush2.msra.mxu0 0.0
        %2421 = vmatprep.subr.mxu0 0.0
        %2422 = vmatpush2.msra.mxu0 0.0
        %2423 = vmatprep.subr.mxu0 0.0
        %2424 = vmatpush2.msra.mxu0 0.0
        %2425 = vmatprep.subr.mxu0 0.0
        %2426 = vmatpush2.msra.mxu0 0.0
        %2427 = vmatprep.subr.mxu0 0.0
        %2428 = vmatpush2.msra.mxu0 0.0
        %2429 = vmatprep.subr.mxu0 0.0
        %2430 = vmatpush2.msra.mxu0 0.0
        %2431 = vmatprep.subr.mxu0 0.0
        %2432 = vmatpush2.msra.mxu0 0.0
        %2433 = vmatprep.subr.mxu0 0.0
        %2434 = vmatpush2.msra.mxu0 0.0
        %2435 = vmatprep.subr.mxu0 0.0
        %2436 = vmatpush2.msra.mxu0 0.0
        %2437 = vmatprep.mubr.f32.mxu0 0.0
        %2438 = vmatmul.mubr.f32.gmra.mxu0 %v2350
        %v2439 = vpop.f32.mrf.mxu0
        %v2440 = vadd.f32 0.0, %v2439
        %v2441 = vpop.f32.mrf.mxu0
        %2442 = vmatprep.mubr.f32.mxu0 0.0
        %2443 = vmatmul.mubr.f32.gmra.mxu0 %v2353
        %v2444 = vpop.f32.mrf.mxu0
        %v2445 = vadd.f32 0.0, %v2444
        %v2446 = vpop.f32.mrf.mxu0
        %2447 = vmatprep.mubr.f32.mxu0 0.0
        %2448 = vmatmul.mubr.f32.gmra.mxu0 %v2356
        %v2449 = vpop.f32.mrf.mxu0
        %v2450 = vadd.f32 0.0, %v2449
        %v2451 = vpop.f32.mrf.mxu0
        %2452 = vmatprep.mubr.f32.mxu0 0.0
        %2453 = vmatmul.mubr.f32.gmra.mxu0 %v2359
        %v2454 = vpop.f32.mrf.mxu0
        %v2455 = vadd.f32 0.0, %v2454
        %v2456 = vpop.f32.mrf.mxu0
        %2457 = vmatprep.mubr.f32.mxu0 0.0
        %2458 = vmatmul.mubr.f32.gmra.mxu0 %v2362
        %v2459 = vpop.f32.mrf.mxu0
        %v2460 = vadd.f32 0.0, %v2459
        %v2461 = vpop.f32.mrf.mxu0
        %2462 = vmatprep.mubr.f32.mxu0 0.0
        %2463 = vmatmul.mubr.f32.gmra.mxu0 %v2365
        %v2464 = vpop.f32.mrf.mxu0
        %v2465 = vadd.f32 0.0, %v2464
        %v2466 = vpop.f32.mrf.mxu0
        %2467 = vmatprep.mubr.f32.mxu0 0.0
        %2468 = vmatmul.mubr.f32.gmra.mxu0 %v2368
        %v2469 = vpop.f32.mrf.mxu0
        %v2470 = vadd.f32 0.0, %v2469
        %v2471 = vpop.f32.mrf.mxu0
        %2472 = vmatprep.mubr.f32.mxu0 0.0
        %2473 = vmatmul.mubr.f32.gmra.mxu0 %v2371
        %v2474 = vpop.f32.mrf.mxu0
        %v2475 = vadd.f32 0.0, %v2474
        %v2476 = vpop.f32.mrf.mxu0
        %2477 = vdwg.mxu0
        %v2479 = vsel %vm289, %v2306, 0
        %2481 = vmatprep.subr.mxu0 0.0
        %2482 = vmatpush1.msra.mxu0 0.0
        %2483 = vmatprep.subr.mxu0 0.0
        %2484 = vmatpush1.msra.mxu0 0.0
        %2485 = vmatprep.subr.mxu0 0.0
        %2486 = vmatpush1.msra.mxu0 0.0
        %2487 = vmatprep.subr.mxu0 0.0
        %2488 = vmatpush1.msra.mxu0 0.0
        %2489 = vmatprep.subr.mxu0 0.0
        %2490 = vmatpush1.msra.mxu0 0.0
        %2491 = vmatprep.subr.mxu0 0.0
        %2492 = vmatpush1.msra.mxu0 0.0
        %2493 = vmatprep.subr.mxu0 0.0
        %2494 = vmatpush1.msra.mxu0 0.0
        %2495 = vmatprep.subr.mxu0 0.0
        %2496 = vmatpush1.msra.mxu0 0.0
        %2497 = vmatprep.subr.mxu0 %v2330
        %2498 = vmatpush1.msra.mxu0 %v2329
        %2499 = vmatprep.subr.mxu0 %v2328
        %2500 = vmatpush1.msra.mxu0 %v2327
        %2501 = vmatprep.subr.mxu0 %v2326
        %2502 = vmatpush1.msra.mxu0 %v2325
        %2503 = vmatprep.subr.mxu0 %v2324
        %2504 = vmatpush1.msra.mxu0 %v2323
        %2505 = vmatprep.subr.mxu0 %v2322
        %2506 = vmatpush1.msra.mxu0 %v2321
        %2507 = vmatprep.subr.mxu0 %v2320
        %2508 = vmatpush1.msra.mxu0 %v2319
        %2509 = vmatprep.subr.mxu0 %v2318
        %2510 = vmatpush1.msra.mxu0 %v2317
        %2511 = vmatprep.subr.mxu0 %v2316
        %2512 = vmatpush1.msra.mxu0 %v2315
        %2513 = vmatprep.subr.mxu0 0.0
        %2514 = vmatpush2.msra.mxu0 0.0
        %2515 = vmatprep.subr.mxu0 0.0
        %2516 = vmatpush2.msra.mxu0 0.0
        %2517 = vmatprep.subr.mxu0 0.0
        %2518 = vmatpush2.msra.mxu0 0.0
        %2519 = vmatprep.subr.mxu0 0.0
        %2520 = vmatpush2.msra.mxu0 0.0
        %2521 = vmatprep.subr.mxu0 0.0
        %2522 = vmatpush2.msra.mxu0 0.0
        %2523 = vmatprep.subr.mxu0 0.0
        %2524 = vmatpush2.msra.mxu0 0.0
        %2525 = vmatprep.subr.mxu0 0.0
        %2526 = vmatpush2.msra.mxu0 0.0
        %2527 = vmatprep.subr.mxu0 0.0
        %2528 = vmatpush2.msra.mxu0 0.0
        %2529 = vmatprep.subr.mxu0 0.0
        %2530 = vmatpush2.msra.mxu0 0.0
        %2531 = vmatprep.subr.mxu0 0.0
        %2532 = vmatpush2.msra.mxu0 0.0
        %2533 = vmatprep.subr.mxu0 0.0
        %2534 = vmatpush2.msra.mxu0 0.0
        %2535 = vmatprep.subr.mxu0 0.0
        %2536 = vmatpush2.msra.mxu0 0.0
        %2537 = vmatprep.subr.mxu0 0.0
        %2538 = vmatpush2.msra.mxu0 0.0
        %2539 = vmatprep.subr.mxu0 0.0
        %2540 = vmatpush2.msra.mxu0 0.0
        %2541 = vmatprep.subr.mxu0 0.0
        %2542 = vmatpush2.msra.mxu0 0.0
        %2543 = vmatprep.subr.mxu0 0.0
        %2544 = vmatpush2.msra.mxu0 0.0
        %2545 = vmatprep.mubr.f32.mxu0 0.0
        %2546 = vmatmul.mubr.f32.gmra.mxu0 %v2479
        %v2547 = vpop.f32.mrf.mxu0
        %v2548 = vadd.f32 %v2440, %v2547
        %v2549 = vpop.f32.mrf.mxu0
        %2550 = vmatprep.mubr.f32.mxu0 0.0
        %2551 = vmatmul.mubr.f32.gmra.mxu0 %v2350
        %v2552 = vpop.f32.mrf.mxu0
        %v2553 = vadd.f32 %v2445, %v2552
        %v2554 = vpop.f32.mrf.mxu0
        %2555 = vmatprep.mubr.f32.mxu0 0.0
        %2556 = vmatmul.mubr.f32.gmra.mxu0 %v2353
        %v2557 = vpop.f32.mrf.mxu0
        %v2558 = vadd.f32 %v2450, %v2557
        %v2559 = vpop.f32.mrf.mxu0
        %2560 = vmatprep.mubr.f32.mxu0 0.0
        %2561 = vmatmul.mubr.f32.gmra.mxu0 %v2356
        %v2562 = vpop.f32.mrf.mxu0
        %v2563 = vadd.f32 %v2455, %v2562
        %v2564 = vpop.f32.mrf.mxu0
        %2565 = vmatprep.mubr.f32.mxu0 0.0
        %2566 = vmatmul.mubr.f32.gmra.mxu0 %v2359
        %v2567 = vpop.f32.mrf.mxu0
        %v2568 = vadd.f32 %v2460, %v2567
        %v2569 = vpop.f32.mrf.mxu0
        %2570 = vmatprep.mubr.f32.mxu0 0.0
        %2571 = vmatmul.mubr.f32.gmra.mxu0 %v2362
        %v2572 = vpop.f32.mrf.mxu0
        %v2573 = vadd.f32 %v2465, %v2572
        %v2574 = vpop.f32.mrf.mxu0
        %2575 = vmatprep.mubr.f32.mxu0 0.0
        %2576 = vmatmul.mubr.f32.gmra.mxu0 %v2365
        %v2577 = vpop.f32.mrf.mxu0
        %v2578 = vadd.f32 %v2470, %v2577
        %v2579 = vpop.f32.mrf.mxu0
        %2580 = vmatprep.mubr.f32.mxu0 0.0
        %2581 = vmatmul.mubr.f32.gmra.mxu0 %v2368
        %v2582 = vpop.f32.mrf.mxu0
        %v2583 = vadd.f32 %v2475, %v2582
        %v2584 = vpop.f32.mrf.mxu0
        %2585 = vdwg.mxu0
        %v2586 = vld [vmem:[#allocation2 + $0x10] sm:$0xff]
        %v2587 = vld [vmem:[#allocation2 + $0x18] sm:$0xff]
        %v2588 = vld [vmem:[#allocation2 + $0x20] sm:$0xff]
        %v2589 = vld [vmem:[#allocation2 + $0x28] sm:$0xff]
        %v2590 = vld [vmem:[#allocation2 + $0x30] sm:$0xff]
        %v2591 = vld [vmem:[#allocation2 + $0x38] sm:$0xff]
        %v2592 = vld [vmem:[#allocation2 + $0x40] sm:$0xff]
        %v2593 = vld [vmem:[#allocation2 + $0x48] sm:$0xff]
        %s2594 = scalar_lea.vmem [#allocation6], 1408
        %v2595 = vld [vmem:[%s2594] sm:$0xff]
        %v2596 = vld [vmem:[%s2594 + $0x8] sm:$0xff]
        %v2597 = vld [vmem:[%s2594 + $0x10] sm:$0xff]
        %v2598 = vld [vmem:[%s2594 + $0x18] sm:$0xff]
        %v2599 = vld [vmem:[%s2594 + $0x20] sm:$0xff]
        %v2600 = vld [vmem:[%s2594 + $0x28] sm:$0xff]
        %v2601 = vld [vmem:[%s2594 + $0x30] sm:$0xff]
        %v2602 = vld [vmem:[%s2594 + $0x38] sm:$0xff]
        %v2603 = vld [vmem:[%s2594 + $0x40] sm:$0xff]
        %v2604 = vld [vmem:[%s2594 + $0x48] sm:$0xff]
        %v2605 = vld [vmem:[%s2594 + $0x50] sm:$0xff]
        %v2606 = vld [vmem:[%s2594 + $0x58] sm:$0xff]
        %v2607 = vld [vmem:[%s2594 + $0x60] sm:$0xff]
        %v2608 = vld [vmem:[%s2594 + $0x68] sm:$0xff]
        %v2609 = vld [vmem:[%s2594 + $0x70] sm:$0xff]
        %v2610 = vld [vmem:[%s2594 + $0x78] sm:$0xff]
        %v2612 = vsel %vm289, %v2586, 0
        %v2615 = vsel %vm289, %v2587, 0
        %v2618 = vsel %vm289, %v2588, 0
        %v2621 = vsel %vm289, %v2589, 0
        %v2624 = vsel %vm289, %v2590, 0
        %v2627 = vsel %vm289, %v2591, 0
        %v2630 = vsel %vm289, %v2592, 0
        %v2633 = vsel %vm289, %v2593, 0
        %2635 = vmatprep.subr.mxu0 0.0
        %2636 = vmatpush1.msra.mxu0 0.0
        %2637 = vmatprep.subr.mxu0 0.0
        %2638 = vmatpush1.msra.mxu0 0.0
        %2639 = vmatprep.subr.mxu0 0.0
        %2640 = vmatpush1.msra.mxu0 0.0
        %2641 = vmatprep.subr.mxu0 0.0
        %2642 = vmatpush1.msra.mxu0 0.0
        %2643 = vmatprep.subr.mxu0 0.0
        %2644 = vmatpush1.msra.mxu0 0.0
        %2645 = vmatprep.subr.mxu0 0.0
        %2646 = vmatpush1.msra.mxu0 0.0
        %2647 = vmatprep.subr.mxu0 0.0
        %2648 = vmatpush1.msra.mxu0 0.0
        %2649 = vmatprep.subr.mxu0 0.0
        %2650 = vmatpush1.msra.mxu0 0.0
        %2651 = vmatprep.subr.mxu0 %v2610
        %2652 = vmatpush1.msra.mxu0 %v2609
        %2653 = vmatprep.subr.mxu0 %v2608
        %2654 = vmatpush1.msra.mxu0 %v2607
        %2655 = vmatprep.subr.mxu0 %v2606
        %2656 = vmatpush1.msra.mxu0 %v2605
        %2657 = vmatprep.subr.mxu0 %v2604
        %2658 = vmatpush1.msra.mxu0 %v2603
        %2659 = vmatprep.subr.mxu0 %v2602
        %2660 = vmatpush1.msra.mxu0 %v2601
        %2661 = vmatprep.subr.mxu0 %v2600
        %2662 = vmatpush1.msra.mxu0 %v2599
        %2663 = vmatprep.subr.mxu0 %v2598
        %2664 = vmatpush1.msra.mxu0 %v2597
        %2665 = vmatprep.subr.mxu0 %v2596
        %2666 = vmatpush1.msra.mxu0 %v2595
        %2667 = vmatprep.subr.mxu0 0.0
        %2668 = vmatpush2.msra.mxu0 0.0
        %2669 = vmatprep.subr.mxu0 0.0
        %2670 = vmatpush2.msra.mxu0 0.0
        %2671 = vmatprep.subr.mxu0 0.0
        %2672 = vmatpush2.msra.mxu0 0.0
        %2673 = vmatprep.subr.mxu0 0.0
        %2674 = vmatpush2.msra.mxu0 0.0
        %2675 = vmatprep.subr.mxu0 0.0
        %2676 = vmatpush2.msra.mxu0 0.0
        %2677 = vmatprep.subr.mxu0 0.0
        %2678 = vmatpush2.msra.mxu0 0.0
        %2679 = vmatprep.subr.mxu0 0.0
        %2680 = vmatpush2.msra.mxu0 0.0
        %2681 = vmatprep.subr.mxu0 0.0
        %2682 = vmatpush2.msra.mxu0 0.0
        %2683 = vmatprep.subr.mxu0 0.0
        %2684 = vmatpush2.msra.mxu0 0.0
        %2685 = vmatprep.subr.mxu0 0.0
        %2686 = vmatpush2.msra.mxu0 0.0
        %2687 = vmatprep.subr.mxu0 0.0
        %2688 = vmatpush2.msra.mxu0 0.0
        %2689 = vmatprep.subr.mxu0 0.0
        %2690 = vmatpush2.msra.mxu0 0.0
        %2691 = vmatprep.subr.mxu0 0.0
        %2692 = vmatpush2.msra.mxu0 0.0
        %2693 = vmatprep.subr.mxu0 0.0
        %2694 = vmatpush2.msra.mxu0 0.0
        %2695 = vmatprep.subr.mxu0 0.0
        %2696 = vmatpush2.msra.mxu0 0.0
        %2697 = vmatprep.subr.mxu0 0.0
        %2698 = vmatpush2.msra.mxu0 0.0
        %2699 = vmatprep.mubr.f32.mxu0 0.0
        %2700 = vmatmul.mubr.f32.gmra.mxu0 %v2612
        %v2701 = vpop.f32.mrf.mxu0
        %v2702 = vadd.f32 0.0, %v2701
        %v2703 = vpop.f32.mrf.mxu0
        %2704 = vmatprep.mubr.f32.mxu0 0.0
        %2705 = vmatmul.mubr.f32.gmra.mxu0 %v2615
        %v2706 = vpop.f32.mrf.mxu0
        %v2707 = vadd.f32 0.0, %v2706
        %v2708 = vpop.f32.mrf.mxu0
        %2709 = vmatprep.mubr.f32.mxu0 0.0
        %2710 = vmatmul.mubr.f32.gmra.mxu0 %v2618
        %v2711 = vpop.f32.mrf.mxu0
        %v2712 = vadd.f32 0.0, %v2711
        %v2713 = vpop.f32.mrf.mxu0
        %2714 = vmatprep.mubr.f32.mxu0 0.0
        %2715 = vmatmul.mubr.f32.gmra.mxu0 %v2621
        %v2716 = vpop.f32.mrf.mxu0
        %v2717 = vadd.f32 0.0, %v2716
        %v2718 = vpop.f32.mrf.mxu0
        %2719 = vmatprep.mubr.f32.mxu0 0.0
        %2720 = vmatmul.mubr.f32.gmra.mxu0 %v2624
        %v2721 = vpop.f32.mrf.mxu0
        %v2722 = vadd.f32 0.0, %v2721
        %v2723 = vpop.f32.mrf.mxu0
        %2724 = vmatprep.mubr.f32.mxu0 0.0
        %2725 = vmatmul.mubr.f32.gmra.mxu0 %v2627
        %v2726 = vpop.f32.mrf.mxu0
        %v2727 = vadd.f32 0.0, %v2726
        %v2728 = vpop.f32.mrf.mxu0
        %2729 = vmatprep.mubr.f32.mxu0 0.0
        %2730 = vmatmul.mubr.f32.gmra.mxu0 %v2630
        %v2731 = vpop.f32.mrf.mxu0
        %v2732 = vadd.f32 0.0, %v2731
        %v2733 = vpop.f32.mrf.mxu0
        %2734 = vmatprep.mubr.f32.mxu0 0.0
        %2735 = vmatmul.mubr.f32.gmra.mxu0 %v2633
        %v2736 = vpop.f32.mrf.mxu0
        %v2737 = vadd.f32 0.0, %v2736
        %v2738 = vpop.f32.mrf.mxu0
        %2739 = vdwg.mxu0
        %v2740 = vadd.f32 %v2548, %v2702
        %v2741 = vadd.f32 %v2553, %v2707
        %v2742 = vadd.f32 %v2558, %v2712
        %v2743 = vadd.f32 %v2563, %v2717
        %v2744 = vadd.f32 %v2568, %v2722
        %v2745 = vadd.f32 %v2573, %v2727
        %v2746 = vadd.f32 %v2578, %v2732
        %v2747 = vadd.f32 %v2583, %v2737
        %s2748 = scalar_lea.vmem %s2, 6
        %v2749 = vld [vmem:[%s2748] sm:$0x3]
        %v2751 = vlaneseq
        %v2752 = vshrl.u32 %v2751, 7
        %v2753 = vsub.s32 0, %v2752
        %v2754 = vrot.slane %v2749, %v2753
        %v2756 = vadd.f32 %v2740, %v2754
        %v2757 = vadd.f32 %v2741, %v2754
        %v2758 = vadd.f32 %v2742, %v2754
        %v2759 = vadd.f32 %v2743, %v2754
        %v2760 = vadd.f32 %v2744, %v2754
        %v2761 = vadd.f32 %v2745, %v2754
        %v2762 = vadd.f32 %v2746, %v2754
        %v2763 = vadd.f32 %v2747, %v2754
        %v2764 = vtanh.pop %v2756
        %v2765 = vtanh.pop %v2757
        %v2766 = vtanh.pop %v2758
        %v2767 = vtanh.pop %v2759
        %v2768 = vtanh.pop %v2760
        %v2769 = vtanh.pop %v2761
        %v2770 = vtanh.pop %v2762
        %v2771 = vtanh.pop %v2763
        %v2772 = vxor.u32 %v2756, 2147483648
        %v2773 = vxor.u32 %v2757, 2147483648
        %v2774 = vxor.u32 %v2758, 2147483648
        %v2775 = vxor.u32 %v2759, 2147483648
        %v2776 = vxor.u32 %v2760, 2147483648
        %v2777 = vxor.u32 %v2761, 2147483648
        %v2778 = vxor.u32 %v2762, 2147483648
        %v2779 = vxor.u32 %v2763, 2147483648
        %v2780 = vmul.f32 %v2772, 1.442695
        %v2781 = vpow.pop %v2780
        %v2782 = vmul.f32 %v2773, 1.442695
        %v2783 = vpow.pop %v2782
        %v2784 = vmul.f32 %v2774, 1.442695
        %v2785 = vpow.pop %v2784
        %v2786 = vmul.f32 %v2775, 1.442695
        %v2787 = vpow.pop %v2786
        %v2788 = vmul.f32 %v2776, 1.442695
        %v2789 = vpow.pop %v2788
        %v2790 = vmul.f32 %v2777, 1.442695
        %v2791 = vpow.pop %v2790
        %v2792 = vmul.f32 %v2778, 1.442695
        %v2793 = vpow.pop %v2792
        %v2794 = vmul.f32 %v2779, 1.442695
        %v2795 = vpow.pop %v2794
        %v2796 = vadd.f32 %v2781, 1.0
        %v2797 = vadd.f32 %v2783, 1.0
        %v2798 = vadd.f32 %v2785, 1.0
        %v2799 = vadd.f32 %v2787, 1.0
        %v2800 = vadd.f32 %v2789, 1.0
        %v2801 = vadd.f32 %v2791, 1.0
        %v2802 = vadd.f32 %v2793, 1.0
        %v2803 = vadd.f32 %v2795, 1.0
        %v2804 = vrcp.pop %v2796
        %v2805 = vmul.f32 1.0, %v2804
        %v2806 = vrcp.pop %v2797
        %v2807 = vmul.f32 1.0, %v2806
        %v2808 = vrcp.pop %v2798
        %v2809 = vmul.f32 1.0, %v2808
        %v2810 = vrcp.pop %v2799
        %v2811 = vmul.f32 1.0, %v2810
        %v2812 = vrcp.pop %v2800
        %v2813 = vmul.f32 1.0, %v2812
        %v2814 = vrcp.pop %v2801
        %v2815 = vmul.f32 1.0, %v2814
        %v2816 = vrcp.pop %v2802
        %v2817 = vmul.f32 1.0, %v2816
        %v2818 = vrcp.pop %v2803
        %v2819 = vmul.f32 1.0, %v2818
        %2828 = vrot.lane.b32.xlu0 %v2805, 64
        %v2829 = vpop.permute.xlu0 %2828
        %2830 = vrot.lane.b32.xlu0 %v2807, 64
        %v2831 = vpop.permute.xlu0 %2830
        %2832 = vrot.lane.b32.xlu0 %v2809, 64
        %v2833 = vpop.permute.xlu0 %2832
        %2834 = vrot.lane.b32.xlu0 %v2811, 64
        %v2835 = vpop.permute.xlu0 %2834
        %2836 = vrot.lane.b32.xlu0 %v2813, 64
        %v2837 = vpop.permute.xlu0 %2836
        %2838 = vrot.lane.b32.xlu0 %v2815, 64
        %v2839 = vpop.permute.xlu0 %2838
        %2840 = vrot.lane.b32.xlu0 %v2817, 64
        %v2841 = vpop.permute.xlu0 %2840
        %2842 = vrot.lane.b32.xlu0 %v2819, 64
        %v2843 = vpop.permute.xlu0 %2842
        %v2852 = vmul.f32 %v2764, %v2829
        %v2853 = vmul.f32 %v2765, %v2831
        %v2854 = vmul.f32 %v2766, %v2833
        %v2855 = vmul.f32 %v2767, %v2835
        %v2856 = vmul.f32 %v2768, %v2837
        %v2857 = vmul.f32 %v2769, %v2839
        %v2858 = vmul.f32 %v2770, %v2841
        %v2859 = vmul.f32 %v2771, %v2843
        %s2860 = scalar_lea.vmem %s3, 3
        %v2861 = vld [vmem:[%s2860] sm:$0x1]
        %v2863 = vlaneseq
        %v2864 = vshrl.u32 %v2863, 7
        %v2865 = vsub.s32 0, %v2864
        %v2866 = vrot.slane %v2861, %v2865
        %v2868 = vmul.f32 %v2852, %v2866
        %v2869 = vmul.f32 %v2853, %v2866
        %v2870 = vmul.f32 %v2854, %v2866
        %v2871 = vmul.f32 %v2855, %v2866
        %v2872 = vmul.f32 %v2856, %v2866
        %v2873 = vmul.f32 %v2857, %v2866
        %v2874 = vmul.f32 %v2858, %v2866
        %v2875 = vmul.f32 %v2859, %v2866
        %v2876 = vadd.f32 %v2290, %v2868
        %v2877 = vadd.f32 %v2291, %v2869
        %v2878 = vadd.f32 %v2292, %v2870
        %v2879 = vadd.f32 %v2293, %v2871
        %v2880 = vadd.f32 %v2294, %v2872
        %v2881 = vadd.f32 %v2295, %v2873
        %v2882 = vadd.f32 %v2296, %v2874
        %v2883 = vadd.f32 %v2297, %v2875
        %v2884 = vld [vmem:[%s4] sm:$0xff]
        %v2885 = vld [vmem:[%s4 + $0x8] sm:$0xff]
        %v2886 = vld [vmem:[%s4 + $0x10] sm:$0xff]
        %v2887 = vld [vmem:[%s4 + $0x18] sm:$0xff]
        %v2888 = vld [vmem:[%s4 + $0x20] sm:$0xff]
        %v2889 = vld [vmem:[%s4 + $0x28] sm:$0xff]
        %v2890 = vld [vmem:[%s4 + $0x30] sm:$0xff]
        %v2891 = vld [vmem:[%s4 + $0x38] sm:$0xff]
        %v2893 = vsel %vm289, %v2876, 0
        %v2896 = vsel %vm289, %v2877, 0
        %v2899 = vsel %vm289, %v2878, 0
        %v2902 = vsel %vm289, %v2879, 0
        %v2905 = vsel %vm289, %v2880, 0
        %v2908 = vsel %vm289, %v2881, 0
        %v2911 = vsel %vm289, %v2882, 0
        %v2914 = vsel %vm289, %v2883, 0
        %2916 = vmatprep.subr.mxu0 0.0
        %2917 = vmatpush1.msra.mxu0 0.0
        %2918 = vmatprep.subr.mxu0 0.0
        %2919 = vmatpush1.msra.mxu0 0.0
        %2920 = vmatprep.subr.mxu0 0.0
        %2921 = vmatpush1.msra.mxu0 0.0
        %2922 = vmatprep.subr.mxu0 0.0
        %2923 = vmatpush1.msra.mxu0 0.0
        %2924 = vmatprep.subr.mxu0 0.0
        %2925 = vmatpush1.msra.mxu0 0.0
        %2926 = vmatprep.subr.mxu0 0.0
        %2927 = vmatpush1.msra.mxu0 0.0
        %2928 = vmatprep.subr.mxu0 0.0
        %2929 = vmatpush1.msra.mxu0 0.0
        %2930 = vmatprep.subr.mxu0 0.0
        %2931 = vmatpush1.msra.mxu0 0.0
        %2932 = vmatprep.subr.mxu0 0.0
        %2933 = vmatpush1.msra.mxu0 %v2891
        %2934 = vmatprep.subr.mxu0 0.0
        %2935 = vmatpush1.msra.mxu0 %v2890
        %2936 = vmatprep.subr.mxu0 0.0
        %2937 = vmatpush1.msra.mxu0 %v2889
        %2938 = vmatprep.subr.mxu0 0.0
        %2939 = vmatpush1.msra.mxu0 %v2888
        %2940 = vmatprep.subr.mxu0 0.0
        %2941 = vmatpush1.msra.mxu0 %v2887
        %2942 = vmatprep.subr.mxu0 0.0
        %2943 = vmatpush1.msra.mxu0 %v2886
        %2944 = vmatprep.subr.mxu0 0.0
        %2945 = vmatpush1.msra.mxu0 %v2885
        %2946 = vmatprep.subr.mxu0 0.0
        %2947 = vmatpush1.msra.mxu0 %v2884
        %2948 = vmatprep.subr.mxu0 0.0
        %2949 = vmatpush2.msra.mxu0 0.0
        %2950 = vmatprep.subr.mxu0 0.0
        %2951 = vmatpush2.msra.mxu0 0.0
        %2952 = vmatprep.subr.mxu0 0.0
        %2953 = vmatpush2.msra.mxu0 0.0
        %2954 = vmatprep.subr.mxu0 0.0
        %2955 = vmatpush2.msra.mxu0 0.0
        %2956 = vmatprep.subr.mxu0 0.0
        %2957 = vmatpush2.msra.mxu0 0.0
        %2958 = vmatprep.subr.mxu0 0.0
        %2959 = vmatpush2.msra.mxu0 0.0
        %2960 = vmatprep.subr.mxu0 0.0
        %2961 = vmatpush2.msra.mxu0 0.0
        %2962 = vmatprep.subr.mxu0 0.0
        %2963 = vmatpush2.msra.mxu0 0.0
        %2964 = vmatprep.subr.mxu0 0.0
        %2965 = vmatpush2.msra.mxu0 0.0
        %2966 = vmatprep.subr.mxu0 0.0
        %2967 = vmatpush2.msra.mxu0 0.0
        %2968 = vmatprep.subr.mxu0 0.0
        %2969 = vmatpush2.msra.mxu0 0.0
        %2970 = vmatprep.subr.mxu0 0.0
        %2971 = vmatpush2.msra.mxu0 0.0
        %2972 = vmatprep.subr.mxu0 0.0
        %2973 = vmatpush2.msra.mxu0 0.0
        %2974 = vmatprep.subr.mxu0 0.0
        %2975 = vmatpush2.msra.mxu0 0.0
        %2976 = vmatprep.subr.mxu0 0.0
        %2977 = vmatpush2.msra.mxu0 0.0
        %2978 = vmatprep.subr.mxu0 0.0
        %2979 = vmatpush2.msra.mxu0 0.0
        %2980 = vmatprep.mubr.f32.mxu0 0.0
        %2981 = vmatmul.mubr.f32.gmra.mxu0 %v2893
        %v2982 = vpop.f32.mrf.mxu0
        %v2983 = vadd.f32 0.0, %v2982
        %v2984 = vpop.f32.mrf.mxu0
        %2985 = vmatprep.mubr.f32.mxu0 0.0
        %2986 = vmatmul.mubr.f32.gmra.mxu0 %v2896
        %v2987 = vpop.f32.mrf.mxu0
        %v2988 = vadd.f32 0.0, %v2987
        %v2989 = vpop.f32.mrf.mxu0
        %2990 = vmatprep.mubr.f32.mxu0 0.0
        %2991 = vmatmul.mubr.f32.gmra.mxu0 %v2899
        %v2992 = vpop.f32.mrf.mxu0
        %v2993 = vadd.f32 0.0, %v2992
        %v2994 = vpop.f32.mrf.mxu0
        %2995 = vmatprep.mubr.f32.mxu0 0.0
        %2996 = vmatmul.mubr.f32.gmra.mxu0 %v2902
        %v2997 = vpop.f32.mrf.mxu0
        %v2998 = vadd.f32 0.0, %v2997
        %v2999 = vpop.f32.mrf.mxu0
        %3000 = vmatprep.mubr.f32.mxu0 0.0
        %3001 = vmatmul.mubr.f32.gmra.mxu0 %v2905
        %v3002 = vpop.f32.mrf.mxu0
        %v3003 = vadd.f32 0.0, %v3002
        %v3004 = vpop.f32.mrf.mxu0
        %3005 = vmatprep.mubr.f32.mxu0 0.0
        %3006 = vmatmul.mubr.f32.gmra.mxu0 %v2908
        %v3007 = vpop.f32.mrf.mxu0
        %v3008 = vadd.f32 0.0, %v3007
        %v3009 = vpop.f32.mrf.mxu0
        %3010 = vmatprep.mubr.f32.mxu0 0.0
        %3011 = vmatmul.mubr.f32.gmra.mxu0 %v2911
        %v3012 = vpop.f32.mrf.mxu0
        %v3013 = vadd.f32 0.0, %v3012
        %v3014 = vpop.f32.mrf.mxu0
        %3015 = vmatprep.mubr.f32.mxu0 0.0
        %3016 = vmatmul.mubr.f32.gmra.mxu0 %v2914
        %v3017 = vpop.f32.mrf.mxu0
        %v3018 = vadd.f32 0.0, %v3017
        %v3019 = vpop.f32.mrf.mxu0
        %3020 = vdwg.mxu0
        %v3021 = vld [vmem:[#allocation3] sm:$0x1]
        %v3023 = vlaneseq
        %v3024 = vshrl.u32 %v3023, 7
        %v3025 = vsub.s32 0, %v3024
        %v3026 = vrot.slane %v3021, %v3025
        %3027 = vset.pattern.permute.xlu0 0
        %3028 = vperm.xlu0 %3027, %v3026
        %v3029 = vpop.permute.xlu0 %3028
        %v3031 = vadd.f32 %v2983, %v3029
        %v3032 = vadd.f32 %v2988, %v3029
        %v3033 = vadd.f32 %v2993, %v3029
        %v3034 = vadd.f32 %v2998, %v3029
        %v3035 = vadd.f32 %v3003, %v3029
        %v3036 = vadd.f32 %v3008, %v3029
        %v3037 = vadd.f32 %v3013, %v3029
        %v3038 = vadd.f32 %v3018, %v3029
        %vm3039 = vcmask 31744
        %3040 = vst.msk [vmem:[%s288] sm:$0xff] %vm3039, %v3031
        %3041 = vst.msk [vmem:[%s288 + $0x8] sm:$0xff] %vm3039, %v3032
        %3042 = vst.msk [vmem:[%s288 + $0x10] sm:$0xff] %vm3039, %v3033
        %3043 = vst.msk [vmem:[%s288 + $0x18] sm:$0xff] %vm3039, %v3034
        %3044 = vst.msk [vmem:[%s288 + $0x20] sm:$0xff] %vm3039, %v3035
        %3045 = vst.msk [vmem:[%s288 + $0x28] sm:$0xff] %vm3039, %v3036
        %3046 = vst.msk [vmem:[%s288 + $0x30] sm:$0xff] %vm3039, %v3037
        %3047 = vst.msk [vmem:[%s288 + $0x38] sm:$0xff] %vm3039, %v3038
        %p3048 = scmp.lt.s32.totalorder %s23, 1
        %s3049 = scalar_select %p3048, %s23, 1
        %s3050 = smul.addr %s3049, 8
        %s3051 = smul.addr %s3050, 8
        %s3052 = scalar_lea.vmem %s6, %s3051
        // Predicated region
        $region53: #{tpu_custom_call.1} parent=43 // pred_check
          %p3053 = pneg %p172
        $region54: #{tpu_custom_call.1} parent=43 // pred_check_branch
          %3055 = sbr.rel (%p3053) target = $region56
        $region55: #{tpu_custom_call.1} parent=43 // pred_region
          _
        $region56: #{tpu_custom_call.1} parent=43 // pred_fallthru
          _
      $region44: #{tpu_custom_call.1} parent=5 // pred_fallthru
        _
      %p3056 = scmp.le.s32.totalorder 2, %s18
      // Predicated region
      $region57: #{tpu_custom_call.1} parent=5 // pred_check
        %p3057 = pneg %p3056
      $region58: #{tpu_custom_call.1} parent=5 // pred_check_branch
        %3059 = sbr.rel (%p3057) target = $region60
      $region59: #{tpu_custom_call.1} parent=5 // pred_region
        %s3060 = ssub.s32 %s18, 2
        // Predicated region
        $region61: #{tpu_custom_call.1} parent=59 // pred_check
          %p3061 = pneg %p178
        $region62: #{tpu_custom_call.1} parent=59 // pred_check_branch
          %3063 = sbr.rel (%p3061) target = $region64
        $region63: #{tpu_custom_call.1} parent=59 // pred_region
          %p3064 = scmp.lt.s32.totalorder %s24, 1
          %s3065 = scalar_select %p3064, %s24, 1
          %s3066 = smul.addr %s3065, 8
          %s3067 = smul.addr %s3066, 8
          %s3068 = scalar_lea.vmem %s6, %s3067
        $region64: #{tpu_custom_call.1} parent=59 // pred_fallthru
          _
      $region60: #{tpu_custom_call.1} parent=5 // pred_fallthru
        _
    $region6: #{tpu_custom_call.1} parent=1 // loop_footer
      %s22 = sadd.s32 1, %s18
    $region7: #{tpu_custom_call.1} parent=1 // loop_footer_branch
      %17 = sbr.rel target = $region3
    $region8: #{tpu_custom_call.1} parent=1 // loop_exit
      _
    %3069 = vsyncpa [#allocation5], 1
    %s3070 = scalar_lea.sflag [#allocation5], 1
    %3071 = vsyncpa %s3070, 1
    %3072 = vsyncpa [#allocation7], 1

</llo_original>
